<compile_context>
chip_gen: v7x
topology: tpu7x:2x2x1
jax: 0.10.0
libtpu: 0.0.40
codegen_flags: <defaults>
</compile_context>

<pallas_src>
import jax
import jax.numpy as jnp
from jax.experimental import pallas as pl
from jax.experimental.pallas import tpu as pltpu

# Model / problem sizes (module defaults; small batch & seq for the demo).
B, S = 2, 8
D_MODEL = 128
D_INNER = 512
N_HEAD = 2
D_K = 64
D_V = 64
N_LAYERS = 3
EPS = 1e-6

QKV_W = 3 * N_HEAD * D_K          # 384 fused q|k|v output width
N_SMALL = 5 * N_LAYERS + 2        # per-layer [ln1_g, ln1_b, b2, ln2_g, ln2_b] + final [g, b]


def _layer_norm(x, gamma, beta, eps=EPS):
    # One-pass LN: var = E[x^2] - mean^2 (halves the cross-lane reductions).
    mean = jnp.mean(x, axis=-1, keepdims=True)
    msq = jnp.mean(x * x, axis=-1, keepdims=True)
    var = msq - mean * mean
    return (x - mean) * jax.lax.rsqrt(var + eps) * gamma + beta


def encoder_kernel(x_ref, wqkv_ref, wfc_ref, w1_ref, w2_ref, small_ref, b1_ref,
                   out_ref):
    """One grid step = one batch element pushed through all N_LAYERS layers.

    Weights are fully VMEM-resident (constant index maps).  MXU operands are
    bf16 with f32 accumulation; softmax / LayerNorm / residuals are f32.
    Dropout == identity (eval semantics)."""
    enc = x_ref[...].reshape(S, D_MODEL).astype(jnp.float32)
    scale = 1.0 / (D_K ** 0.5)

    for l in range(N_LAYERS):                       # static, fully unrolled
        # ---- Multi-head self attention (fused QKV projection) ------------
        residual = enc
        qkv = jnp.dot(enc.astype(jnp.bfloat16), wqkv_ref[l],
                      preferred_element_type=jnp.float32)        # (S, 384)
        q = qkv[:, 0:N_HEAD * D_K] * scale
        k = qkv[:, N_HEAD * D_K:2 * N_HEAD * D_K]
        v = qkv[:, 2 * N_HEAD * D_K:]

        ctx_heads = []
        for h in range(N_HEAD):                     # static head loop (H=2)
            qh = q[:, h * D_K:(h + 1) * D_K]        # (S, d_k)
            kh = k[:, h * D_K:(h + 1) * D_K]
            vh = v[:, h * D_V:(h + 1) * D_V]
            s = jnp.einsum('qd,kd->qk', qh, kh,
                           preferred_element_type=jnp.float32)   # (S, S)
            s = s - jnp.max(s, axis=-1, keepdims=True)
            p = jnp.exp(s)
            p = p * pl.reciprocal(jnp.sum(p, axis=-1, keepdims=True),
                                  approx=True)
            ctx_heads.append(jnp.dot(p, vh,
                                     preferred_element_type=jnp.float32))
        ctx = jnp.concatenate(ctx_heads, axis=-1)                # (S, H*d_v)

        attn = jnp.dot(ctx.astype(jnp.bfloat16), wfc_ref[l],
                       preferred_element_type=jnp.float32)       # (S, D)
        enc = _layer_norm(attn + residual,
                          small_ref[5 * l + 0:5 * l + 1],
                          small_ref[5 * l + 1:5 * l + 2])

        # ---- Position-wise feed forward ----------------------------------
        residual2 = enc
        hid = jnp.dot(enc.astype(jnp.bfloat16), w1_ref[l],
                      preferred_element_type=jnp.float32) + b1_ref[l:l + 1]
        hid = jnp.maximum(hid, 0.0)
        ffn = jnp.dot(hid.astype(jnp.bfloat16), w2_ref[l],
                      preferred_element_type=jnp.float32) \
              + small_ref[5 * l + 2:5 * l + 3]
        enc = _layer_norm(ffn + residual2,
                          small_ref[5 * l + 3:5 * l + 4],
                          small_ref[5 * l + 4:5 * l + 5])

    # Final encoder LayerNorm fused into the single output store.
    final = _layer_norm(enc,
                        small_ref[N_SMALL - 2:N_SMALL - 1],
                        small_ref[N_SMALL - 1:N_SMALL])
    out_ref[...] = final.reshape(1, S, D_MODEL)


def pack_params(params):
    """Fuse QKV weights, cast dense weights to bf16, consolidate small vectors."""
    (wq, wk, wv, wfc, ln1_g, ln1_b, w1, b1, w2, b2,
     ln2_g, ln2_b, lnf_g, lnf_b) = params
    wqkv = jnp.concatenate([wq, wk, wv], axis=-1).astype(jnp.bfloat16)  # (L,128,384)
    small = jnp.concatenate(
        [jnp.stack([ln1_g, ln1_b, b2, ln2_g, ln2_b],
                   axis=1).reshape(5 * N_LAYERS, D_MODEL),
         lnf_g[None, :], lnf_b[None, :]],
        axis=0).astype(jnp.float32)                                      # (17,128)
    return (wqkv, wfc.astype(jnp.bfloat16), w1.astype(jnp.bfloat16),
            w2.astype(jnp.bfloat16), small, b1.astype(jnp.float32))


def encoder_forward(x, params):
    wqkv, wfc, w1, w2, small, b1 = pack_params(params)

    def full(shape):
        # Fully-resident block: same block for every grid step -> loaded once.
        return pl.BlockSpec(shape, lambda b: (0,) * len(shape))

    in_specs = [
        pl.BlockSpec((1, S, D_MODEL), lambda b: (b, 0, 0)),   # x (per batch elem)
        full((N_LAYERS, D_MODEL, QKV_W)),                     # fused qkv weights (bf16)
        full((N_LAYERS, N_HEAD * D_V, D_MODEL)),              # fc weights (bf16)
        full((N_LAYERS, D_MODEL, D_INNER)),                   # ffn w1 (bf16)
        full((N_LAYERS, D_INNER, D_MODEL)),                   # ffn w2 (bf16)
        full((N_SMALL, D_MODEL)),                             # LN gammas/betas + b2 (f32)
        full((N_LAYERS, D_INNER)),                            # ffn b1 (f32)
    ]
    out_spec = pl.BlockSpec((1, S, D_MODEL), lambda b: (b, 0, 0))

    # Total resident weights ~1.2 MB bf16 -> fits the scoped-VMEM default on
    # v5e/v6e/v7x; revisit vmem_limit_bytes / D_INNER tiling only if scaled up.
    return pl.pallas_call(
        encoder_kernel,
        out_shape=jax.ShapeDtypeStruct((B, S, D_MODEL), jnp.float32),
        grid=(B,),
        in_specs=in_specs,
        out_specs=out_spec,
        compiler_params=pltpu.CompilerParams(
            dimension_semantics=("parallel",)),   # batch-parallel (2 TCs on v7x)
    )(x, wqkv, wfc, w1, w2, small, b1)


def reference(x, params):
    """Pure-JAX reference mirroring the PyTorch forward pass (eval mode).

    Matmul operands are rounded to bf16 (matching the kernel's bf16 weight
    storage / MXU operand precision); everything else is f32."""
    (wq, wk, wv, wfc, ln1_g, ln1_b, w1, b1, w2, b2,
     ln2_g, ln2_b, lnf_g, lnf_b) = params

    def rb(t):   # round-to-bf16, compute in f32
        return t.astype(jnp.bfloat16).astype(jnp.float32)

    def ln(t, g, bb):
        m = jnp.mean(t, -1, keepdims=True)
        v_ = jnp.mean((t - m) ** 2, -1, keepdims=True)
        return (t - m) / jnp.sqrt(v_ + EPS) * g + bb

    enc = x
    for l in range(N_LAYERS):
        res = enc
        q = rb(enc) @ rb(wq[l])
        k = rb(enc) @ rb(wk[l])
        v = rb(enc) @ rb(wv[l])
        qh = q.reshape(B, S, N_HEAD, D_K).transpose(0, 2, 1, 3)
        kh = k.reshape(B, S, N_HEAD, D_K).transpose(0, 2, 1, 3)
        vh = v.reshape(B, S, N_HEAD, D_V).transpose(0, 2, 1, 3)
        sc = jnp.einsum('bhqd,bhkd->bhqk', qh / (D_K ** 0.5), kh)
        p = jax.nn.softmax(sc, axis=-1)
        ctx = jnp.einsum('bhqk,bhkd->bhqd', p, vh)
        ctx = ctx.transpose(0, 2, 1, 3).reshape(B, S, N_HEAD * D_V)
        enc = ln(rb(ctx) @ rb(wfc[l]) + res, ln1_g[l], ln1_b[l])
        res2 = enc
        hid = jax.nn.relu(rb(enc) @ rb(w1[l]) + b1[l])
        enc = ln(rb(hid) @ rb(w2[l]) + b2[l] + res2, ln2_g[l], ln2_b[l])
    return ln(enc, lnf_g, lnf_b)


if __name__ == "__main__":
    key = jax.random.PRNGKey(0)
    ks = jax.random.split(key, 10)

    def init(k, shape, scale=0.05):
        return scale * jax.random.normal(k, shape, dtype=jnp.float32)

    wq = init(ks[0], (N_LAYERS, D_MODEL, N_HEAD * D_K))
    wk = init(ks[1], (N_LAYERS, D_MODEL, N_HEAD * D_K))
    wv = init(ks[2], (N_LAYERS, D_MODEL, N_HEAD * D_V))
    wfc = init(ks[3], (N_LAYERS, N_HEAD * D_V, D_MODEL))
    ln1_g = jnp.ones((N_LAYERS, D_MODEL), jnp.float32)
    ln1_b = jnp.zeros((N_LAYERS, D_MODEL), jnp.float32)
    w1 = init(ks[4], (N_LAYERS, D_MODEL, D_INNER))
    b1 = init(ks[5], (N_LAYERS, D_INNER))
    w2 = init(ks[6], (N_LAYERS, D_INNER, D_MODEL))
    b2 = init(ks[7], (N_LAYERS, D_MODEL))
    ln2_g = jnp.ones((N_LAYERS, D_MODEL), jnp.float32)
    ln2_b = jnp.zeros((N_LAYERS, D_MODEL), jnp.float32)
    lnf_g = jnp.ones((D_MODEL,), jnp.float32)
    lnf_b = jnp.zeros((D_MODEL,), jnp.float32)

    params = (wq, wk, wv, wfc, ln1_g, ln1_b, w1, b1, w2, b2,
              ln2_g, ln2_b, lnf_g, lnf_b)

    x = jax.random.normal(ks[8], (B, S, D_MODEL), dtype=jnp.float32)

    out = jax.block_until_ready(jax.jit(encoder_forward)(x, params))
    ref = jax.block_until_ready(reference(x, params))

    assert out.shape == (B, S, D_MODEL)
    assert bool(jnp.all(jnp.isfinite(out)))
    max_diff = float(jnp.max(jnp.abs(out - ref)))
    assert max_diff < 2e-2, f"max abs diff {max_diff}"
    print("KERNEL_OK")
</pallas_src>

<mosaic_0001>
module attributes {stable_mosaic.version = 11 : i64} {
  func.func @encoder_kernel(%arg0: i32, %arg1: memref<1x8x128xf32, #tpu.memory_space<vmem>>, %arg2: memref<3x128x384xbf16, #tpu.memory_space<vmem>>, %arg3: memref<3x128x128xbf16, #tpu.memory_space<vmem>>, %arg4: memref<3x128x512xbf16, #tpu.memory_space<vmem>>, %arg5: memref<3x512x128xbf16, #tpu.memory_space<vmem>>, %arg6: memref<17x128xf32, #tpu.memory_space<vmem>>, %arg7: memref<3x512xf32, #tpu.memory_space<vmem>>, %arg8: memref<1x8x128xf32, #tpu.memory_space<vmem>>) attributes {dimension_semantics = [#tpu.dimension_semantics<parallel>], iteration_bounds = array<i64: 2>, scalar_prefetch = 0 : i64, scratch_operands = 0 : i64, tpu.core_type = #tpu.core_type<tc>, window_params = [{transform_indices = @transform_0, window_bounds = array<i64: 1, 8, 128>}, {pipeline_mode = #tpu.pipeline_mode<synchronous>, transform_indices = @transform_1, window_bounds = array<i64: 3, 128, 384>}, {pipeline_mode = #tpu.pipeline_mode<synchronous>, transform_indices = @transform_2, window_bounds = array<i64: 3, 128, 128>}, {pipeline_mode = #tpu.pipeline_mode<synchronous>, transform_indices = @transform_3, window_bounds = array<i64: 3, 128, 512>}, {pipeline_mode = #tpu.pipeline_mode<synchronous>, transform_indices = @transform_4, window_bounds = array<i64: 3, 512, 128>}, {pipeline_mode = #tpu.pipeline_mode<synchronous>, transform_indices = @transform_5, window_bounds = array<i64: 17, 128>}, {pipeline_mode = #tpu.pipeline_mode<synchronous>, transform_indices = @transform_6, window_bounds = array<i64: 3, 512>}, {transform_indices = @transform_7, window_bounds = array<i64: 1, 8, 128>}]} {
    %c0 = arith.constant 0 : index
    %c0_0 = arith.constant 0 : index
    %c0_1 = arith.constant 0 : index
    %0 = vector.load %arg1[%c0, %c0_0, %c0_1] : memref<1x8x128xf32, #tpu.memory_space<vmem>>, vector<1x8x128xf32>
    %1 = vector.shape_cast %0 : vector<1x8x128xf32> to vector<8x128xf32>
    %2 = arith.truncf %1 : vector<8x128xf32> to vector<8x128xbf16>
    %c0_2 = arith.constant 0 : index
    %c0_3 = arith.constant 0 : index
    %c0_4 = arith.constant 0 : index
    %3 = vector.load %arg2[%c0_2, %c0_3, %c0_4] : memref<3x128x384xbf16, #tpu.memory_space<vmem>>, vector<1x128x384xbf16>
    %4 = vector.shape_cast %3 : vector<1x128x384xbf16> to vector<128x384xbf16>
    %cst = arith.constant dense<0.000000e+00> : vector<8x384xf32>
    %5 = tpu.matmul %2, %4, %cst {dimension_numbers = #tpu.dot_dimension_numbers<[1], [0], [0], [1], [0, 0, 1, 1], [], []>} : vector<8x128xbf16>, vector<128x384xbf16>, vector<8x384xf32> -> vector<8x384xf32>
    %6 = vector.extract_strided_slice %5 {offsets = [0, 0], sizes = [8, 128], strides = [1, 1]} : vector<8x384xf32> to vector<8x128xf32>
    %cst_5 = arith.constant 1.250000e-01 : f32
    %7 = vector.broadcast %cst_5 : f32 to vector<8x128xf32>
    %8 = arith.mulf %6, %7 : vector<8x128xf32>
    %9 = vector.extract_strided_slice %5 {offsets = [0, 128], sizes = [8, 128], strides = [1, 1]} : vector<8x384xf32> to vector<8x128xf32>
    %10 = vector.extract_strided_slice %5 {offsets = [0, 256], sizes = [8, 128], strides = [1, 1]} : vector<8x384xf32> to vector<8x128xf32>
    %11 = vector.extract_strided_slice %8 {offsets = [0, 0], sizes = [8, 64], strides = [1, 1]} : vector<8x128xf32> to vector<8x64xf32>
    %12 = vector.extract_strided_slice %9 {offsets = [0, 0], sizes = [8, 64], strides = [1, 1]} : vector<8x128xf32> to vector<8x64xf32>
    %13 = vector.extract_strided_slice %10 {offsets = [0, 0], sizes = [8, 64], strides = [1, 1]} : vector<8x128xf32> to vector<8x64xf32>
    "tpu.trace_start"() <{level = 10 : i32, message = "qd,kd->qk"}> : () -> ()
    %cst_6 = arith.constant dense<0.000000e+00> : vector<8x8xf32>
    %14 = tpu.matmul %11, %12, %cst_6 {dimension_numbers = #tpu.dot_dimension_numbers<[1], [1], [0], [0], [0, 0, 1, 0], [], []>} : vector<8x64xf32>, vector<8x64xf32>, vector<8x8xf32> -> vector<8x8xf32>
    "tpu.trace_stop"() : () -> ()
    %cst_7 = arith.constant dense<0xFF800000> : vector<8xf32>
    %15 = vector.multi_reduction <maximumf>, %14, %cst_7 [1] : vector<8x8xf32> to vector<8xf32>
    %16 = vector.shape_cast %15 : vector<8xf32> to vector<8x1xf32>
    %17 = vector.broadcast %16 : vector<8x1xf32> to vector<8x8xf32>
    %18 = arith.subf %14, %17 : vector<8x8xf32>
    %19 = math.exp %18 : vector<8x8xf32>
    %cst_8 = arith.constant dense<0.000000e+00> : vector<8xf32>
    %20 = vector.multi_reduction <add>, %19, %cst_8 [1] : vector<8x8xf32> to vector<8xf32>
    %21 = vector.shape_cast %20 : vector<8xf32> to vector<8x1xf32>
    %22 = tpu.reciprocal %21 {approx = true} : vector<8x1xf32> -> vector<8x1xf32>
    %23 = vector.broadcast %22 : vector<8x1xf32> to vector<8x8xf32>
    %24 = arith.mulf %19, %23 : vector<8x8xf32>
    %cst_9 = arith.constant dense<0.000000e+00> : vector<8x64xf32>
    %25 = tpu.matmul %24, %13, %cst_9 {dimension_numbers = #tpu.dot_dimension_numbers<[1], [0], [0], [1], [0, 0, 1, 1], [], []>} : vector<8x8xf32>, vector<8x64xf32>, vector<8x64xf32> -> vector<8x64xf32>
    %26 = vector.extract_strided_slice %8 {offsets = [0, 64], sizes = [8, 64], strides = [1, 1]} : vector<8x128xf32> to vector<8x64xf32>
    %27 = vector.extract_strided_slice %9 {offsets = [0, 64], sizes = [8, 64], strides = [1, 1]} : vector<8x128xf32> to vector<8x64xf32>
    %28 = vector.extract_strided_slice %10 {offsets = [0, 64], sizes = [8, 64], strides = [1, 1]} : vector<8x128xf32> to vector<8x64xf32>
    "tpu.trace_start"() <{level = 10 : i32, message = "qd,kd->qk"}> : () -> ()
    %cst_10 = arith.constant dense<0.000000e+00> : vector<8x8xf32>
    %29 = tpu.matmul %26, %27, %cst_10 {dimension_numbers = #tpu.dot_dimension_numbers<[1], [1], [0], [0], [0, 0, 1, 0], [], []>} : vector<8x64xf32>, vector<8x64xf32>, vector<8x8xf32> -> vector<8x8xf32>
    "tpu.trace_stop"() : () -> ()
    %cst_11 = arith.constant dense<0xFF800000> : vector<8xf32>
    %30 = vector.multi_reduction <maximumf>, %29, %cst_11 [1] : vector<8x8xf32> to vector<8xf32>
    %31 = vector.shape_cast %30 : vector<8xf32> to vector<8x1xf32>
    %32 = vector.broadcast %31 : vector<8x1xf32> to vector<8x8xf32>
    %33 = arith.subf %29, %32 : vector<8x8xf32>
    %34 = math.exp %33 : vector<8x8xf32>
    %cst_12 = arith.constant dense<0.000000e+00> : vector<8xf32>
    %35 = vector.multi_reduction <add>, %34, %cst_12 [1] : vector<8x8xf32> to vector<8xf32>
    %36 = vector.shape_cast %35 : vector<8xf32> to vector<8x1xf32>
    %37 = tpu.reciprocal %36 {approx = true} : vector<8x1xf32> -> vector<8x1xf32>
    %38 = vector.broadcast %37 : vector<8x1xf32> to vector<8x8xf32>
    %39 = arith.mulf %34, %38 : vector<8x8xf32>
    %cst_13 = arith.constant dense<0.000000e+00> : vector<8x64xf32>
    %40 = tpu.matmul %39, %28, %cst_13 {dimension_numbers = #tpu.dot_dimension_numbers<[1], [0], [0], [1], [0, 0, 1, 1], [], []>} : vector<8x8xf32>, vector<8x64xf32>, vector<8x64xf32> -> vector<8x64xf32>
    %41 = tpu.concatenate %25, %40 in 1 : vector<8x64xf32>, vector<8x64xf32> -> vector<8x128xf32>
    %42 = arith.truncf %41 : vector<8x128xf32> to vector<8x128xbf16>
    %c0_14 = arith.constant 0 : index
    %c0_15 = arith.constant 0 : index
    %c0_16 = arith.constant 0 : index
    %43 = vector.load %arg3[%c0_14, %c0_15, %c0_16] : memref<3x128x128xbf16, #tpu.memory_space<vmem>>, vector<1x128x128xbf16>
    %44 = vector.shape_cast %43 : vector<1x128x128xbf16> to vector<128x128xbf16>
    %cst_17 = arith.constant dense<0.000000e+00> : vector<8x128xf32>
    %45 = tpu.matmul %42, %44, %cst_17 {dimension_numbers = #tpu.dot_dimension_numbers<[1], [0], [0], [1], [0, 0, 1, 1], [], []>} : vector<8x128xbf16>, vector<128x128xbf16>, vector<8x128xf32> -> vector<8x128xf32>
    %46 = arith.addf %45, %1 : vector<8x128xf32>
    %c0_18 = arith.constant 0 : index
    %c0_19 = arith.constant 0 : index
    %47 = vector.load %arg6[%c0_18, %c0_19] : memref<17x128xf32, #tpu.memory_space<vmem>>, vector<1x128xf32>
    %c1 = arith.constant 1 : index
    %c0_20 = arith.constant 0 : index
    %48 = vector.load %arg6[%c1, %c0_20] : memref<17x128xf32, #tpu.memory_space<vmem>>, vector<1x128xf32>
    %cst_21 = arith.constant dense<0.000000e+00> : vector<8xf32>
    %49 = vector.multi_reduction <add>, %46, %cst_21 [1] : vector<8x128xf32> to vector<8xf32>
    %50 = vector.shape_cast %49 : vector<8xf32> to vector<8x1xf32>
    %cst_22 = arith.constant 1.280000e+02 : f32
    %51 = vector.broadcast %cst_22 : f32 to vector<8x1xf32>
    %52 = arith.divf %50, %51 : vector<8x1xf32>
    %53 = arith.mulf %46, %46 : vector<8x128xf32>
    %cst_23 = arith.constant dense<0.000000e+00> : vector<8xf32>
    %54 = vector.multi_reduction <add>, %53, %cst_23 [1] : vector<8x128xf32> to vector<8xf32>
    %55 = vector.shape_cast %54 : vector<8xf32> to vector<8x1xf32>
    %cst_24 = arith.constant 1.280000e+02 : f32
    %56 = vector.broadcast %cst_24 : f32 to vector<8x1xf32>
    %57 = arith.divf %55, %56 : vector<8x1xf32>
    %58 = arith.mulf %52, %52 : vector<8x1xf32>
    %59 = arith.subf %57, %58 : vector<8x1xf32>
    %60 = vector.broadcast %52 : vector<8x1xf32> to vector<8x128xf32>
    %61 = arith.subf %46, %60 : vector<8x128xf32>
    %cst_25 = arith.constant 9.99999997E-7 : f32
    %62 = vector.broadcast %cst_25 : f32 to vector<8x1xf32>
    %63 = arith.addf %59, %62 : vector<8x1xf32>
    %64 = math.rsqrt %63 : vector<8x1xf32>
    %65 = vector.broadcast %64 : vector<8x1xf32> to vector<8x128xf32>
    %66 = arith.mulf %61, %65 : vector<8x128xf32>
    %67 = vector.broadcast %47 : vector<1x128xf32> to vector<8x128xf32>
    %68 = arith.mulf %66, %67 : vector<8x128xf32>
    %69 = vector.broadcast %48 : vector<1x128xf32> to vector<8x128xf32>
    %70 = arith.addf %68, %69 : vector<8x128xf32>
    %71 = arith.truncf %70 : vector<8x128xf32> to vector<8x128xbf16>
    %c0_26 = arith.constant 0 : index
    %c0_27 = arith.constant 0 : index
    %c0_28 = arith.constant 0 : index
    %72 = vector.load %arg4[%c0_26, %c0_27, %c0_28] : memref<3x128x512xbf16, #tpu.memory_space<vmem>>, vector<1x128x512xbf16>
    %73 = vector.shape_cast %72 : vector<1x128x512xbf16> to vector<128x512xbf16>
    %cst_29 = arith.constant dense<0.000000e+00> : vector<8x512xf32>
    %74 = tpu.matmul %71, %73, %cst_29 {dimension_numbers = #tpu.dot_dimension_numbers<[1], [0], [0], [1], [0, 0, 1, 1], [], []>} : vector<8x128xbf16>, vector<128x512xbf16>, vector<8x512xf32> -> vector<8x512xf32>
    %c0_30 = arith.constant 0 : index
    %c0_31 = arith.constant 0 : index
    %75 = vector.load %arg7[%c0_30, %c0_31] : memref<3x512xf32, #tpu.memory_space<vmem>>, vector<1x512xf32>
    %76 = vector.broadcast %75 : vector<1x512xf32> to vector<8x512xf32>
    %77 = arith.addf %74, %76 : vector<8x512xf32>
    %cst_32 = arith.constant 0.000000e+00 : f32
    %78 = vector.broadcast %cst_32 : f32 to vector<8x512xf32>
    %79 = arith.maximumf %77, %78 : vector<8x512xf32>
    %80 = arith.truncf %79 : vector<8x512xf32> to vector<8x512xbf16>
    %c0_33 = arith.constant 0 : index
    %c0_34 = arith.constant 0 : index
    %c0_35 = arith.constant 0 : index
    %81 = vector.load %arg5[%c0_33, %c0_34, %c0_35] : memref<3x512x128xbf16, #tpu.memory_space<vmem>>, vector<1x512x128xbf16>
    %82 = vector.shape_cast %81 : vector<1x512x128xbf16> to vector<512x128xbf16>
    %cst_36 = arith.constant dense<0.000000e+00> : vector<8x128xf32>
    %83 = tpu.matmul %80, %82, %cst_36 {dimension_numbers = #tpu.dot_dimension_numbers<[1], [0], [0], [1], [0, 0, 1, 1], [], []>} : vector<8x512xbf16>, vector<512x128xbf16>, vector<8x128xf32> -> vector<8x128xf32>
    %c2 = arith.constant 2 : index
    %c0_37 = arith.constant 0 : index
    %84 = vector.load %arg6[%c2, %c0_37] : memref<17x128xf32, #tpu.memory_space<vmem>>, vector<1x128xf32>
    %85 = vector.broadcast %84 : vector<1x128xf32> to vector<8x128xf32>
    %86 = arith.addf %83, %85 : vector<8x128xf32>
    %87 = arith.addf %86, %70 : vector<8x128xf32>
    %c3 = arith.constant 3 : index
    %c0_38 = arith.constant 0 : index
    %88 = vector.load %arg6[%c3, %c0_38] : memref<17x128xf32, #tpu.memory_space<vmem>>, vector<1x128xf32>
    %c4 = arith.constant 4 : index
    %c0_39 = arith.constant 0 : index
    %89 = vector.load %arg6[%c4, %c0_39] : memref<17x128xf32, #tpu.memory_space<vmem>>, vector<1x128xf32>
    %cst_40 = arith.constant dense<0.000000e+00> : vector<8xf32>
    %90 = vector.multi_reduction <add>, %87, %cst_40 [1] : vector<8x128xf32> to vector<8xf32>
    %91 = vector.shape_cast %90 : vector<8xf32> to vector<8x1xf32>
    %cst_41 = arith.constant 1.280000e+02 : f32
    %92 = vector.broadcast %cst_41 : f32 to vector<8x1xf32>
    %93 = arith.divf %91, %92 : vector<8x1xf32>
    %94 = arith.mulf %87, %87 : vector<8x128xf32>
    %cst_42 = arith.constant dense<0.000000e+00> : vector<8xf32>
    %95 = vector.multi_reduction <add>, %94, %cst_42 [1] : vector<8x128xf32> to vector<8xf32>
    %96 = vector.shape_cast %95 : vector<8xf32> to vector<8x1xf32>
    %cst_43 = arith.constant 1.280000e+02 : f32
    %97 = vector.broadcast %cst_43 : f32 to vector<8x1xf32>
    %98 = arith.divf %96, %97 : vector<8x1xf32>
    %99 = arith.mulf %93, %93 : vector<8x1xf32>
    %100 = arith.subf %98, %99 : vector<8x1xf32>
    %101 = vector.broadcast %93 : vector<8x1xf32> to vector<8x128xf32>
    %102 = arith.subf %87, %101 : vector<8x128xf32>
    %cst_44 = arith.constant 9.99999997E-7 : f32
    %103 = vector.broadcast %cst_44 : f32 to vector<8x1xf32>
    %104 = arith.addf %100, %103 : vector<8x1xf32>
    %105 = math.rsqrt %104 : vector<8x1xf32>
    %106 = vector.broadcast %105 : vector<8x1xf32> to vector<8x128xf32>
    %107 = arith.mulf %102, %106 : vector<8x128xf32>
    %108 = vector.broadcast %88 : vector<1x128xf32> to vector<8x128xf32>
    %109 = arith.mulf %107, %108 : vector<8x128xf32>
    %110 = vector.broadcast %89 : vector<1x128xf32> to vector<8x128xf32>
    %111 = arith.addf %109, %110 : vector<8x128xf32>
    %112 = arith.truncf %111 : vector<8x128xf32> to vector<8x128xbf16>
    %c1_45 = arith.constant 1 : index
    %c0_46 = arith.constant 0 : index
    %c0_47 = arith.constant 0 : index
    %113 = vector.load %arg2[%c1_45, %c0_46, %c0_47] : memref<3x128x384xbf16, #tpu.memory_space<vmem>>, vector<1x128x384xbf16>
    %114 = vector.shape_cast %113 : vector<1x128x384xbf16> to vector<128x384xbf16>
    %cst_48 = arith.constant dense<0.000000e+00> : vector<8x384xf32>
    %115 = tpu.matmul %112, %114, %cst_48 {dimension_numbers = #tpu.dot_dimension_numbers<[1], [0], [0], [1], [0, 0, 1, 1], [], []>} : vector<8x128xbf16>, vector<128x384xbf16>, vector<8x384xf32> -> vector<8x384xf32>
    %116 = vector.extract_strided_slice %115 {offsets = [0, 0], sizes = [8, 128], strides = [1, 1]} : vector<8x384xf32> to vector<8x128xf32>
    %cst_49 = arith.constant 1.250000e-01 : f32
    %117 = vector.broadcast %cst_49 : f32 to vector<8x128xf32>
    %118 = arith.mulf %116, %117 : vector<8x128xf32>
    %119 = vector.extract_strided_slice %115 {offsets = [0, 128], sizes = [8, 128], strides = [1, 1]} : vector<8x384xf32> to vector<8x128xf32>
    %120 = vector.extract_strided_slice %115 {offsets = [0, 256], sizes = [8, 128], strides = [1, 1]} : vector<8x384xf32> to vector<8x128xf32>
    %121 = vector.extract_strided_slice %118 {offsets = [0, 0], sizes = [8, 64], strides = [1, 1]} : vector<8x128xf32> to vector<8x64xf32>
    %122 = vector.extract_strided_slice %119 {offsets = [0, 0], sizes = [8, 64], strides = [1, 1]} : vector<8x128xf32> to vector<8x64xf32>
    %123 = vector.extract_strided_slice %120 {offsets = [0, 0], sizes = [8, 64], strides = [1, 1]} : vector<8x128xf32> to vector<8x64xf32>
    "tpu.trace_start"() <{level = 10 : i32, message = "qd,kd->qk"}> : () -> ()
    %cst_50 = arith.constant dense<0.000000e+00> : vector<8x8xf32>
    %124 = tpu.matmul %121, %122, %cst_50 {dimension_numbers = #tpu.dot_dimension_numbers<[1], [1], [0], [0], [0, 0, 1, 0], [], []>} : vector<8x64xf32>, vector<8x64xf32>, vector<8x8xf32> -> vector<8x8xf32>
    "tpu.trace_stop"() : () -> ()
    %cst_51 = arith.constant dense<0xFF800000> : vector<8xf32>
    %125 = vector.multi_reduction <maximumf>, %124, %cst_51 [1] : vector<8x8xf32> to vector<8xf32>
    %126 = vector.shape_cast %125 : vector<8xf32> to vector<8x1xf32>
    %127 = vector.broadcast %126 : vector<8x1xf32> to vector<8x8xf32>
    %128 = arith.subf %124, %127 : vector<8x8xf32>
    %129 = math.exp %128 : vector<8x8xf32>
    %cst_52 = arith.constant dense<0.000000e+00> : vector<8xf32>
    %130 = vector.multi_reduction <add>, %129, %cst_52 [1] : vector<8x8xf32> to vector<8xf32>
    %131 = vector.shape_cast %130 : vector<8xf32> to vector<8x1xf32>
    %132 = tpu.reciprocal %131 {approx = true} : vector<8x1xf32> -> vector<8x1xf32>
    %133 = vector.broadcast %132 : vector<8x1xf32> to vector<8x8xf32>
    %134 = arith.mulf %129, %133 : vector<8x8xf32>
    %cst_53 = arith.constant dense<0.000000e+00> : vector<8x64xf32>
    %135 = tpu.matmul %134, %123, %cst_53 {dimension_numbers = #tpu.dot_dimension_numbers<[1], [0], [0], [1], [0, 0, 1, 1], [], []>} : vector<8x8xf32>, vector<8x64xf32>, vector<8x64xf32> -> vector<8x64xf32>
    %136 = vector.extract_strided_slice %118 {offsets = [0, 64], sizes = [8, 64], strides = [1, 1]} : vector<8x128xf32> to vector<8x64xf32>
    %137 = vector.extract_strided_slice %119 {offsets = [0, 64], sizes = [8, 64], strides = [1, 1]} : vector<8x128xf32> to vector<8x64xf32>
    %138 = vector.extract_strided_slice %120 {offsets = [0, 64], sizes = [8, 64], strides = [1, 1]} : vector<8x128xf32> to vector<8x64xf32>
    "tpu.trace_start"() <{level = 10 : i32, message = "qd,kd->qk"}> : () -> ()
    %cst_54 = arith.constant dense<0.000000e+00> : vector<8x8xf32>
    %139 = tpu.matmul %136, %137, %cst_54 {dimension_numbers = #tpu.dot_dimension_numbers<[1], [1], [0], [0], [0, 0, 1, 0], [], []>} : vector<8x64xf32>, vector<8x64xf32>, vector<8x8xf32> -> vector<8x8xf32>
    "tpu.trace_stop"() : () -> ()
    %cst_55 = arith.constant dense<0xFF800000> : vector<8xf32>
    %140 = vector.multi_reduction <maximumf>, %139, %cst_55 [1] : vector<8x8xf32> to vector<8xf32>
    %141 = vector.shape_cast %140 : vector<8xf32> to vector<8x1xf32>
    %142 = vector.broadcast %141 : vector<8x1xf32> to vector<8x8xf32>
    %143 = arith.subf %139, %142 : vector<8x8xf32>
    %144 = math.exp %143 : vector<8x8xf32>
    %cst_56 = arith.constant dense<0.000000e+00> : vector<8xf32>
    %145 = vector.multi_reduction <add>, %144, %cst_56 [1] : vector<8x8xf32> to vector<8xf32>
    %146 = vector.shape_cast %145 : vector<8xf32> to vector<8x1xf32>
    %147 = tpu.reciprocal %146 {approx = true} : vector<8x1xf32> -> vector<8x1xf32>
    %148 = vector.broadcast %147 : vector<8x1xf32> to vector<8x8xf32>
    %149 = arith.mulf %144, %148 : vector<8x8xf32>
    %cst_57 = arith.constant dense<0.000000e+00> : vector<8x64xf32>
    %150 = tpu.matmul %149, %138, %cst_57 {dimension_numbers = #tpu.dot_dimension_numbers<[1], [0], [0], [1], [0, 0, 1, 1], [], []>} : vector<8x8xf32>, vector<8x64xf32>, vector<8x64xf32> -> vector<8x64xf32>
    %151 = tpu.concatenate %135, %150 in 1 : vector<8x64xf32>, vector<8x64xf32> -> vector<8x128xf32>
    %152 = arith.truncf %151 : vector<8x128xf32> to vector<8x128xbf16>
    %c1_58 = arith.constant 1 : index
    %c0_59 = arith.constant 0 : index
    %c0_60 = arith.constant 0 : index
    %153 = vector.load %arg3[%c1_58, %c0_59, %c0_60] : memref<3x128x128xbf16, #tpu.memory_space<vmem>>, vector<1x128x128xbf16>
    %154 = vector.shape_cast %153 : vector<1x128x128xbf16> to vector<128x128xbf16>
    %cst_61 = arith.constant dense<0.000000e+00> : vector<8x128xf32>
    %155 = tpu.matmul %152, %154, %cst_61 {dimension_numbers = #tpu.dot_dimension_numbers<[1], [0], [0], [1], [0, 0, 1, 1], [], []>} : vector<8x128xbf16>, vector<128x128xbf16>, vector<8x128xf32> -> vector<8x128xf32>
    %156 = arith.addf %155, %111 : vector<8x128xf32>
    %c5 = arith.constant 5 : index
    %c0_62 = arith.constant 0 : index
    %157 = vector.load %arg6[%c5, %c0_62] : memref<17x128xf32, #tpu.memory_space<vmem>>, vector<1x128xf32>
    %c6 = arith.constant 6 : index
    %c0_63 = arith.constant 0 : index
    %158 = vector.load %arg6[%c6, %c0_63] : memref<17x128xf32, #tpu.memory_space<vmem>>, vector<1x128xf32>
    %cst_64 = arith.constant dense<0.000000e+00> : vector<8xf32>
    %159 = vector.multi_reduction <add>, %156, %cst_64 [1] : vector<8x128xf32> to vector<8xf32>
    %160 = vector.shape_cast %159 : vector<8xf32> to vector<8x1xf32>
    %cst_65 = arith.constant 1.280000e+02 : f32
    %161 = vector.broadcast %cst_65 : f32 to vector<8x1xf32>
    %162 = arith.divf %160, %161 : vector<8x1xf32>
    %163 = arith.mulf %156, %156 : vector<8x128xf32>
    %cst_66 = arith.constant dense<0.000000e+00> : vector<8xf32>
    %164 = vector.multi_reduction <add>, %163, %cst_66 [1] : vector<8x128xf32> to vector<8xf32>
    %165 = vector.shape_cast %164 : vector<8xf32> to vector<8x1xf32>
    %cst_67 = arith.constant 1.280000e+02 : f32
    %166 = vector.broadcast %cst_67 : f32 to vector<8x1xf32>
    %167 = arith.divf %165, %166 : vector<8x1xf32>
    %168 = arith.mulf %162, %162 : vector<8x1xf32>
    %169 = arith.subf %167, %168 : vector<8x1xf32>
    %170 = vector.broadcast %162 : vector<8x1xf32> to vector<8x128xf32>
    %171 = arith.subf %156, %170 : vector<8x128xf32>
    %cst_68 = arith.constant 9.99999997E-7 : f32
    %172 = vector.broadcast %cst_68 : f32 to vector<8x1xf32>
    %173 = arith.addf %169, %172 : vector<8x1xf32>
    %174 = math.rsqrt %173 : vector<8x1xf32>
    %175 = vector.broadcast %174 : vector<8x1xf32> to vector<8x128xf32>
    %176 = arith.mulf %171, %175 : vector<8x128xf32>
    %177 = vector.broadcast %157 : vector<1x128xf32> to vector<8x128xf32>
    %178 = arith.mulf %176, %177 : vector<8x128xf32>
    %179 = vector.broadcast %158 : vector<1x128xf32> to vector<8x128xf32>
    %180 = arith.addf %178, %179 : vector<8x128xf32>
    %181 = arith.truncf %180 : vector<8x128xf32> to vector<8x128xbf16>
    %c1_69 = arith.constant 1 : index
    %c0_70 = arith.constant 0 : index
    %c0_71 = arith.constant 0 : index
    %182 = vector.load %arg4[%c1_69, %c0_70, %c0_71] : memref<3x128x512xbf16, #tpu.memory_space<vmem>>, vector<1x128x512xbf16>
    %183 = vector.shape_cast %182 : vector<1x128x512xbf16> to vector<128x512xbf16>
    %cst_72 = arith.constant dense<0.000000e+00> : vector<8x512xf32>
    %184 = tpu.matmul %181, %183, %cst_72 {dimension_numbers = #tpu.dot_dimension_numbers<[1], [0], [0], [1], [0, 0, 1, 1], [], []>} : vector<8x128xbf16>, vector<128x512xbf16>, vector<8x512xf32> -> vector<8x512xf32>
    %c1_73 = arith.constant 1 : index
    %c0_74 = arith.constant 0 : index
    %185 = vector.load %arg7[%c1_73, %c0_74] : memref<3x512xf32, #tpu.memory_space<vmem>>, vector<1x512xf32>
    %186 = vector.broadcast %185 : vector<1x512xf32> to vector<8x512xf32>
    %187 = arith.addf %184, %186 : vector<8x512xf32>
    %cst_75 = arith.constant 0.000000e+00 : f32
    %188 = vector.broadcast %cst_75 : f32 to vector<8x512xf32>
    %189 = arith.maximumf %187, %188 : vector<8x512xf32>
    %190 = arith.truncf %189 : vector<8x512xf32> to vector<8x512xbf16>
    %c1_76 = arith.constant 1 : index
    %c0_77 = arith.constant 0 : index
    %c0_78 = arith.constant 0 : index
    %191 = vector.load %arg5[%c1_76, %c0_77, %c0_78] : memref<3x512x128xbf16, #tpu.memory_space<vmem>>, vector<1x512x128xbf16>
    %192 = vector.shape_cast %191 : vector<1x512x128xbf16> to vector<512x128xbf16>
    %cst_79 = arith.constant dense<0.000000e+00> : vector<8x128xf32>
    %193 = tpu.matmul %190, %192, %cst_79 {dimension_numbers = #tpu.dot_dimension_numbers<[1], [0], [0], [1], [0, 0, 1, 1], [], []>} : vector<8x512xbf16>, vector<512x128xbf16>, vector<8x128xf32> -> vector<8x128xf32>
    %c7 = arith.constant 7 : index
    %c0_80 = arith.constant 0 : index
    %194 = vector.load %arg6[%c7, %c0_80] : memref<17x128xf32, #tpu.memory_space<vmem>>, vector<1x128xf32>
    %195 = vector.broadcast %194 : vector<1x128xf32> to vector<8x128xf32>
    %196 = arith.addf %193, %195 : vector<8x128xf32>
    %197 = arith.addf %196, %180 : vector<8x128xf32>
    %c8 = arith.constant 8 : index
    %c0_81 = arith.constant 0 : index
    %198 = vector.load %arg6[%c8, %c0_81] : memref<17x128xf32, #tpu.memory_space<vmem>>, vector<1x128xf32>
    %c9 = arith.constant 9 : index
    %c0_82 = arith.constant 0 : index
    %199 = vector.load %arg6[%c9, %c0_82] : memref<17x128xf32, #tpu.memory_space<vmem>>, vector<1x128xf32>
    %cst_83 = arith.constant dense<0.000000e+00> : vector<8xf32>
    %200 = vector.multi_reduction <add>, %197, %cst_83 [1] : vector<8x128xf32> to vector<8xf32>
    %201 = vector.shape_cast %200 : vector<8xf32> to vector<8x1xf32>
    %cst_84 = arith.constant 1.280000e+02 : f32
    %202 = vector.broadcast %cst_84 : f32 to vector<8x1xf32>
    %203 = arith.divf %201, %202 : vector<8x1xf32>
    %204 = arith.mulf %197, %197 : vector<8x128xf32>
    %cst_85 = arith.constant dense<0.000000e+00> : vector<8xf32>
    %205 = vector.multi_reduction <add>, %204, %cst_85 [1] : vector<8x128xf32> to vector<8xf32>
    %206 = vector.shape_cast %205 : vector<8xf32> to vector<8x1xf32>
    %cst_86 = arith.constant 1.280000e+02 : f32
    %207 = vector.broadcast %cst_86 : f32 to vector<8x1xf32>
    %208 = arith.divf %206, %207 : vector<8x1xf32>
    %209 = arith.mulf %203, %203 : vector<8x1xf32>
    %210 = arith.subf %208, %209 : vector<8x1xf32>
    %211 = vector.broadcast %203 : vector<8x1xf32> to vector<8x128xf32>
    %212 = arith.subf %197, %211 : vector<8x128xf32>
    %cst_87 = arith.constant 9.99999997E-7 : f32
    %213 = vector.broadcast %cst_87 : f32 to vector<8x1xf32>
    %214 = arith.addf %210, %213 : vector<8x1xf32>
    %215 = math.rsqrt %214 : vector<8x1xf32>
    %216 = vector.broadcast %215 : vector<8x1xf32> to vector<8x128xf32>
    %217 = arith.mulf %212, %216 : vector<8x128xf32>
    %218 = vector.broadcast %198 : vector<1x128xf32> to vector<8x128xf32>
    %219 = arith.mulf %217, %218 : vector<8x128xf32>
    %220 = vector.broadcast %199 : vector<1x128xf32> to vector<8x128xf32>
    %221 = arith.addf %219, %220 : vector<8x128xf32>
    %222 = arith.truncf %221 : vector<8x128xf32> to vector<8x128xbf16>
    %c2_88 = arith.constant 2 : index
    %c0_89 = arith.constant 0 : index
    %c0_90 = arith.constant 0 : index
    %223 = vector.load %arg2[%c2_88, %c0_89, %c0_90] : memref<3x128x384xbf16, #tpu.memory_space<vmem>>, vector<1x128x384xbf16>
    %224 = vector.shape_cast %223 : vector<1x128x384xbf16> to vector<128x384xbf16>
    %cst_91 = arith.constant dense<0.000000e+00> : vector<8x384xf32>
    %225 = tpu.matmul %222, %224, %cst_91 {dimension_numbers = #tpu.dot_dimension_numbers<[1], [0], [0], [1], [0, 0, 1, 1], [], []>} : vector<8x128xbf16>, vector<128x384xbf16>, vector<8x384xf32> -> vector<8x384xf32>
    %226 = vector.extract_strided_slice %225 {offsets = [0, 0], sizes = [8, 128], strides = [1, 1]} : vector<8x384xf32> to vector<8x128xf32>
    %cst_92 = arith.constant 1.250000e-01 : f32
    %227 = vector.broadcast %cst_92 : f32 to vector<8x128xf32>
    %228 = arith.mulf %226, %227 : vector<8x128xf32>
    %229 = vector.extract_strided_slice %225 {offsets = [0, 128], sizes = [8, 128], strides = [1, 1]} : vector<8x384xf32> to vector<8x128xf32>
    %230 = vector.extract_strided_slice %225 {offsets = [0, 256], sizes = [8, 128], strides = [1, 1]} : vector<8x384xf32> to vector<8x128xf32>
    %231 = vector.extract_strided_slice %228 {offsets = [0, 0], sizes = [8, 64], strides = [1, 1]} : vector<8x128xf32> to vector<8x64xf32>
    %232 = vector.extract_strided_slice %229 {offsets = [0, 0], sizes = [8, 64], strides = [1, 1]} : vector<8x128xf32> to vector<8x64xf32>
    %233 = vector.extract_strided_slice %230 {offsets = [0, 0], sizes = [8, 64], strides = [1, 1]} : vector<8x128xf32> to vector<8x64xf32>
    "tpu.trace_start"() <{level = 10 : i32, message = "qd,kd->qk"}> : () -> ()
    %cst_93 = arith.constant dense<0.000000e+00> : vector<8x8xf32>
    %234 = tpu.matmul %231, %232, %cst_93 {dimension_numbers = #tpu.dot_dimension_numbers<[1], [1], [0], [0], [0, 0, 1, 0], [], []>} : vector<8x64xf32>, vector<8x64xf32>, vector<8x8xf32> -> vector<8x8xf32>
    "tpu.trace_stop"() : () -> ()
    %cst_94 = arith.constant dense<0xFF800000> : vector<8xf32>
    %235 = vector.multi_reduction <maximumf>, %234, %cst_94 [1] : vector<8x8xf32> to vector<8xf32>
    %236 = vector.shape_cast %235 : vector<8xf32> to vector<8x1xf32>
    %237 = vector.broadcast %236 : vector<8x1xf32> to vector<8x8xf32>
    %238 = arith.subf %234, %237 : vector<8x8xf32>
    %239 = math.exp %238 : vector<8x8xf32>
    %cst_95 = arith.constant dense<0.000000e+00> : vector<8xf32>
    %240 = vector.multi_reduction <add>, %239, %cst_95 [1] : vector<8x8xf32> to vector<8xf32>
    %241 = vector.shape_cast %240 : vector<8xf32> to vector<8x1xf32>
    %242 = tpu.reciprocal %241 {approx = true} : vector<8x1xf32> -> vector<8x1xf32>
    %243 = vector.broadcast %242 : vector<8x1xf32> to vector<8x8xf32>
    %244 = arith.mulf %239, %243 : vector<8x8xf32>
    %cst_96 = arith.constant dense<0.000000e+00> : vector<8x64xf32>
    %245 = tpu.matmul %244, %233, %cst_96 {dimension_numbers = #tpu.dot_dimension_numbers<[1], [0], [0], [1], [0, 0, 1, 1], [], []>} : vector<8x8xf32>, vector<8x64xf32>, vector<8x64xf32> -> vector<8x64xf32>
    %246 = vector.extract_strided_slice %228 {offsets = [0, 64], sizes = [8, 64], strides = [1, 1]} : vector<8x128xf32> to vector<8x64xf32>
    %247 = vector.extract_strided_slice %229 {offsets = [0, 64], sizes = [8, 64], strides = [1, 1]} : vector<8x128xf32> to vector<8x64xf32>
    %248 = vector.extract_strided_slice %230 {offsets = [0, 64], sizes = [8, 64], strides = [1, 1]} : vector<8x128xf32> to vector<8x64xf32>
    "tpu.trace_start"() <{level = 10 : i32, message = "qd,kd->qk"}> : () -> ()
    %cst_97 = arith.constant dense<0.000000e+00> : vector<8x8xf32>
    %249 = tpu.matmul %246, %247, %cst_97 {dimension_numbers = #tpu.dot_dimension_numbers<[1], [1], [0], [0], [0, 0, 1, 0], [], []>} : vector<8x64xf32>, vector<8x64xf32>, vector<8x8xf32> -> vector<8x8xf32>
    "tpu.trace_stop"() : () -> ()
    %cst_98 = arith.constant dense<0xFF800000> : vector<8xf32>
    %250 = vector.multi_reduction <maximumf>, %249, %cst_98 [1] : vector<8x8xf32> to vector<8xf32>
    %251 = vector.shape_cast %250 : vector<8xf32> to vector<8x1xf32>
    %252 = vector.broadcast %251 : vector<8x1xf32> to vector<8x8xf32>
    %253 = arith.subf %249, %252 : vector<8x8xf32>
    %254 = math.exp %253 : vector<8x8xf32>
    %cst_99 = arith.constant dense<0.000000e+00> : vector<8xf32>
    %255 = vector.multi_reduction <add>, %254, %cst_99 [1] : vector<8x8xf32> to vector<8xf32>
    %256 = vector.shape_cast %255 : vector<8xf32> to vector<8x1xf32>
    %257 = tpu.reciprocal %256 {approx = true} : vector<8x1xf32> -> vector<8x1xf32>
    %258 = vector.broadcast %257 : vector<8x1xf32> to vector<8x8xf32>
    %259 = arith.mulf %254, %258 : vector<8x8xf32>
    %cst_100 = arith.constant dense<0.000000e+00> : vector<8x64xf32>
    %260 = tpu.matmul %259, %248, %cst_100 {dimension_numbers = #tpu.dot_dimension_numbers<[1], [0], [0], [1], [0, 0, 1, 1], [], []>} : vector<8x8xf32>, vector<8x64xf32>, vector<8x64xf32> -> vector<8x64xf32>
    %261 = tpu.concatenate %245, %260 in 1 : vector<8x64xf32>, vector<8x64xf32> -> vector<8x128xf32>
    %262 = arith.truncf %261 : vector<8x128xf32> to vector<8x128xbf16>
    %c2_101 = arith.constant 2 : index
    %c0_102 = arith.constant 0 : index
    %c0_103 = arith.constant 0 : index
    %263 = vector.load %arg3[%c2_101, %c0_102, %c0_103] : memref<3x128x128xbf16, #tpu.memory_space<vmem>>, vector<1x128x128xbf16>
    %264 = vector.shape_cast %263 : vector<1x128x128xbf16> to vector<128x128xbf16>
    %cst_104 = arith.constant dense<0.000000e+00> : vector<8x128xf32>
    %265 = tpu.matmul %262, %264, %cst_104 {dimension_numbers = #tpu.dot_dimension_numbers<[1], [0], [0], [1], [0, 0, 1, 1], [], []>} : vector<8x128xbf16>, vector<128x128xbf16>, vector<8x128xf32> -> vector<8x128xf32>
    %266 = arith.addf %265, %221 : vector<8x128xf32>
    %c10 = arith.constant 10 : index
    %c0_105 = arith.constant 0 : index
    %267 = vector.load %arg6[%c10, %c0_105] : memref<17x128xf32, #tpu.memory_space<vmem>>, vector<1x128xf32>
    %c11 = arith.constant 11 : index
    %c0_106 = arith.constant 0 : index
    %268 = vector.load %arg6[%c11, %c0_106] : memref<17x128xf32, #tpu.memory_space<vmem>>, vector<1x128xf32>
    %cst_107 = arith.constant dense<0.000000e+00> : vector<8xf32>
    %269 = vector.multi_reduction <add>, %266, %cst_107 [1] : vector<8x128xf32> to vector<8xf32>
    %270 = vector.shape_cast %269 : vector<8xf32> to vector<8x1xf32>
    %cst_108 = arith.constant 1.280000e+02 : f32
    %271 = vector.broadcast %cst_108 : f32 to vector<8x1xf32>
    %272 = arith.divf %270, %271 : vector<8x1xf32>
    %273 = arith.mulf %266, %266 : vector<8x128xf32>
    %cst_109 = arith.constant dense<0.000000e+00> : vector<8xf32>
    %274 = vector.multi_reduction <add>, %273, %cst_109 [1] : vector<8x128xf32> to vector<8xf32>
    %275 = vector.shape_cast %274 : vector<8xf32> to vector<8x1xf32>
    %cst_110 = arith.constant 1.280000e+02 : f32
    %276 = vector.broadcast %cst_110 : f32 to vector<8x1xf32>
    %277 = arith.divf %275, %276 : vector<8x1xf32>
    %278 = arith.mulf %272, %272 : vector<8x1xf32>
    %279 = arith.subf %277, %278 : vector<8x1xf32>
    %280 = vector.broadcast %272 : vector<8x1xf32> to vector<8x128xf32>
    %281 = arith.subf %266, %280 : vector<8x128xf32>
    %cst_111 = arith.constant 9.99999997E-7 : f32
    %282 = vector.broadcast %cst_111 : f32 to vector<8x1xf32>
    %283 = arith.addf %279, %282 : vector<8x1xf32>
    %284 = math.rsqrt %283 : vector<8x1xf32>
    %285 = vector.broadcast %284 : vector<8x1xf32> to vector<8x128xf32>
    %286 = arith.mulf %281, %285 : vector<8x128xf32>
    %287 = vector.broadcast %267 : vector<1x128xf32> to vector<8x128xf32>
    %288 = arith.mulf %286, %287 : vector<8x128xf32>
    %289 = vector.broadcast %268 : vector<1x128xf32> to vector<8x128xf32>
    %290 = arith.addf %288, %289 : vector<8x128xf32>
    %291 = arith.truncf %290 : vector<8x128xf32> to vector<8x128xbf16>
    %c2_112 = arith.constant 2 : index
    %c0_113 = arith.constant 0 : index
    %c0_114 = arith.constant 0 : index
    %292 = vector.load %arg4[%c2_112, %c0_113, %c0_114] : memref<3x128x512xbf16, #tpu.memory_space<vmem>>, vector<1x128x512xbf16>
    %293 = vector.shape_cast %292 : vector<1x128x512xbf16> to vector<128x512xbf16>
    %cst_115 = arith.constant dense<0.000000e+00> : vector<8x512xf32>
    %294 = tpu.matmul %291, %293, %cst_115 {dimension_numbers = #tpu.dot_dimension_numbers<[1], [0], [0], [1], [0, 0, 1, 1], [], []>} : vector<8x128xbf16>, vector<128x512xbf16>, vector<8x512xf32> -> vector<8x512xf32>
    %c2_116 = arith.constant 2 : index
    %c0_117 = arith.constant 0 : index
    %295 = vector.load %arg7[%c2_116, %c0_117] : memref<3x512xf32, #tpu.memory_space<vmem>>, vector<1x512xf32>
    %296 = vector.broadcast %295 : vector<1x512xf32> to vector<8x512xf32>
    %297 = arith.addf %294, %296 : vector<8x512xf32>
    %cst_118 = arith.constant 0.000000e+00 : f32
    %298 = vector.broadcast %cst_118 : f32 to vector<8x512xf32>
    %299 = arith.maximumf %297, %298 : vector<8x512xf32>
    %300 = arith.truncf %299 : vector<8x512xf32> to vector<8x512xbf16>
    %c2_119 = arith.constant 2 : index
    %c0_120 = arith.constant 0 : index
    %c0_121 = arith.constant 0 : index
    %301 = vector.load %arg5[%c2_119, %c0_120, %c0_121] : memref<3x512x128xbf16, #tpu.memory_space<vmem>>, vector<1x512x128xbf16>
    %302 = vector.shape_cast %301 : vector<1x512x128xbf16> to vector<512x128xbf16>
    %cst_122 = arith.constant dense<0.000000e+00> : vector<8x128xf32>
    %303 = tpu.matmul %300, %302, %cst_122 {dimension_numbers = #tpu.dot_dimension_numbers<[1], [0], [0], [1], [0, 0, 1, 1], [], []>} : vector<8x512xbf16>, vector<512x128xbf16>, vector<8x128xf32> -> vector<8x128xf32>
    %c12 = arith.constant 12 : index
    %c0_123 = arith.constant 0 : index
    %304 = vector.load %arg6[%c12, %c0_123] : memref<17x128xf32, #tpu.memory_space<vmem>>, vector<1x128xf32>
    %305 = vector.broadcast %304 : vector<1x128xf32> to vector<8x128xf32>
    %306 = arith.addf %303, %305 : vector<8x128xf32>
    %307 = arith.addf %306, %290 : vector<8x128xf32>
    %c13 = arith.constant 13 : index
    %c0_124 = arith.constant 0 : index
    %308 = vector.load %arg6[%c13, %c0_124] : memref<17x128xf32, #tpu.memory_space<vmem>>, vector<1x128xf32>
    %c14 = arith.constant 14 : index
    %c0_125 = arith.constant 0 : index
    %309 = vector.load %arg6[%c14, %c0_125] : memref<17x128xf32, #tpu.memory_space<vmem>>, vector<1x128xf32>
    %cst_126 = arith.constant dense<0.000000e+00> : vector<8xf32>
    %310 = vector.multi_reduction <add>, %307, %cst_126 [1] : vector<8x128xf32> to vector<8xf32>
    %311 = vector.shape_cast %310 : vector<8xf32> to vector<8x1xf32>
    %cst_127 = arith.constant 1.280000e+02 : f32
    %312 = vector.broadcast %cst_127 : f32 to vector<8x1xf32>
    %313 = arith.divf %311, %312 : vector<8x1xf32>
    %314 = arith.mulf %307, %307 : vector<8x128xf32>
    %cst_128 = arith.constant dense<0.000000e+00> : vector<8xf32>
    %315 = vector.multi_reduction <add>, %314, %cst_128 [1] : vector<8x128xf32> to vector<8xf32>
    %316 = vector.shape_cast %315 : vector<8xf32> to vector<8x1xf32>
    %cst_129 = arith.constant 1.280000e+02 : f32
    %317 = vector.broadcast %cst_129 : f32 to vector<8x1xf32>
    %318 = arith.divf %316, %317 : vector<8x1xf32>
    %319 = arith.mulf %313, %313 : vector<8x1xf32>
    %320 = arith.subf %318, %319 : vector<8x1xf32>
    %321 = vector.broadcast %313 : vector<8x1xf32> to vector<8x128xf32>
    %322 = arith.subf %307, %321 : vector<8x128xf32>
    %cst_130 = arith.constant 9.99999997E-7 : f32
    %323 = vector.broadcast %cst_130 : f32 to vector<8x1xf32>
    %324 = arith.addf %320, %323 : vector<8x1xf32>
    %325 = math.rsqrt %324 : vector<8x1xf32>
    %326 = vector.broadcast %325 : vector<8x1xf32> to vector<8x128xf32>
    %327 = arith.mulf %322, %326 : vector<8x128xf32>
    %328 = vector.broadcast %308 : vector<1x128xf32> to vector<8x128xf32>
    %329 = arith.mulf %327, %328 : vector<8x128xf32>
    %330 = vector.broadcast %309 : vector<1x128xf32> to vector<8x128xf32>
    %331 = arith.addf %329, %330 : vector<8x128xf32>
    %c15 = arith.constant 15 : index
    %c0_131 = arith.constant 0 : index
    %332 = vector.load %arg6[%c15, %c0_131] : memref<17x128xf32, #tpu.memory_space<vmem>>, vector<1x128xf32>
    %c16 = arith.constant 16 : index
    %c0_132 = arith.constant 0 : index
    %333 = vector.load %arg6[%c16, %c0_132] : memref<17x128xf32, #tpu.memory_space<vmem>>, vector<1x128xf32>
    %cst_133 = arith.constant dense<0.000000e+00> : vector<8xf32>
    %334 = vector.multi_reduction <add>, %331, %cst_133 [1] : vector<8x128xf32> to vector<8xf32>
    %335 = vector.shape_cast %334 : vector<8xf32> to vector<8x1xf32>
    %cst_134 = arith.constant 1.280000e+02 : f32
    %336 = vector.broadcast %cst_134 : f32 to vector<8x1xf32>
    %337 = arith.divf %335, %336 : vector<8x1xf32>
    %338 = arith.mulf %331, %331 : vector<8x128xf32>
    %cst_135 = arith.constant dense<0.000000e+00> : vector<8xf32>
    %339 = vector.multi_reduction <add>, %338, %cst_135 [1] : vector<8x128xf32> to vector<8xf32>
    %340 = vector.shape_cast %339 : vector<8xf32> to vector<8x1xf32>
    %cst_136 = arith.constant 1.280000e+02 : f32
    %341 = vector.broadcast %cst_136 : f32 to vector<8x1xf32>
    %342 = arith.divf %340, %341 : vector<8x1xf32>
    %343 = arith.mulf %337, %337 : vector<8x1xf32>
    %344 = arith.subf %342, %343 : vector<8x1xf32>
    %345 = vector.broadcast %337 : vector<8x1xf32> to vector<8x128xf32>
    %346 = arith.subf %331, %345 : vector<8x128xf32>
    %cst_137 = arith.constant 9.99999997E-7 : f32
    %347 = vector.broadcast %cst_137 : f32 to vector<8x1xf32>
    %348 = arith.addf %344, %347 : vector<8x1xf32>
    %349 = math.rsqrt %348 : vector<8x1xf32>
    %350 = vector.broadcast %349 : vector<8x1xf32> to vector<8x128xf32>
    %351 = arith.mulf %346, %350 : vector<8x128xf32>
    %352 = vector.broadcast %332 : vector<1x128xf32> to vector<8x128xf32>
    %353 = arith.mulf %351, %352 : vector<8x128xf32>
    %354 = vector.broadcast %333 : vector<1x128xf32> to vector<8x128xf32>
    %355 = arith.addf %353, %354 : vector<8x128xf32>
    %356 = vector.shape_cast %355 : vector<8x128xf32> to vector<1x8x128xf32>
    %c0_138 = arith.constant 0 : index
    %c0_139 = arith.constant 0 : index
    %c0_140 = arith.constant 0 : index
    %357 = vector.load %arg8[%c0_138, %c0_139, %c0_140] : memref<1x8x128xf32, #tpu.memory_space<vmem>>, vector<1x8x128xf32>
    tpu.vector_store %arg8[%c0_138, %c0_139, %c0_140], %356 {strides = array<i32>} : memref<1x8x128xf32, #tpu.memory_space<vmem>>, vector<1x8x128xf32>,
    return
  }
  func.func @transform_0(%arg0: i32) -> (i32, i32, i32) {
    %c0_i32 = arith.constant 0 : i32
    %c0_i32_0 = arith.constant 0 : i32
    %c0_i32_1 = arith.constant 0 : i32
    return %arg0, %c0_i32, %c0_i32_0 : i32, i32, i32
  }
  func.func @transform_1(%arg0: i32) -> (i32, i32, i32) {
    %c0_i32 = arith.constant 0 : i32
    %c0_i32_0 = arith.constant 0 : i32
    %c0_i32_1 = arith.constant 0 : i32
    %c0_i32_2 = arith.constant 0 : i32
    return %c0_i32, %c0_i32_0, %c0_i32_1 : i32, i32, i32
  }
  func.func @transform_2(%arg0: i32) -> (i32, i32, i32) {
    %c0_i32 = arith.constant 0 : i32
    %c0_i32_0 = arith.constant 0 : i32
    %c0_i32_1 = arith.constant 0 : i32
    %c0_i32_2 = arith.constant 0 : i32
    return %c0_i32, %c0_i32_0, %c0_i32_1 : i32, i32, i32
  }
  func.func @transform_3(%arg0: i32) -> (i32, i32, i32) {
    %c0_i32 = arith.constant 0 : i32
    %c0_i32_0 = arith.constant 0 : i32
    %c0_i32_1 = arith.constant 0 : i32
    %c0_i32_2 = arith.constant 0 : i32
    return %c0_i32, %c0_i32_0, %c0_i32_1 : i32, i32, i32
  }
  func.func @transform_4(%arg0: i32) -> (i32, i32, i32) {
    %c0_i32 = arith.constant 0 : i32
    %c0_i32_0 = arith.constant 0 : i32
    %c0_i32_1 = arith.constant 0 : i32
    %c0_i32_2 = arith.constant 0 : i32
    return %c0_i32, %c0_i32_0, %c0_i32_1 : i32, i32, i32
  }
  func.func @transform_5(%arg0: i32) -> (i32, i32) {
    %c0_i32 = arith.constant 0 : i32
    %c0_i32_0 = arith.constant 0 : i32
    %c0_i32_1 = arith.constant 0 : i32
    return %c0_i32, %c0_i32_0 : i32, i32
  }
  func.func @transform_6(%arg0: i32) -> (i32, i32) {
    %c0_i32 = arith.constant 0 : i32
    %c0_i32_0 = arith.constant 0 : i32
    %c0_i32_1 = arith.constant 0 : i32
    return %c0_i32, %c0_i32_0 : i32, i32
  }
  func.func @transform_7(%arg0: i32) -> (i32, i32, i32) {
    %c0_i32 = arith.constant 0 : i32
    %c0_i32_0 = arith.constant 0 : i32
    %c0_i32_1 = arith.constant 0 : i32
    return %arg0, %c0_i32, %c0_i32_0 : i32, i32, i32
  }
}

</mosaic_0001>

<llo_original>
// kernel: encoder_forward.1
$region0: #{encoder_forward.1}
  #allocation0 [shape = 'u32[]', space=smem, size = 0x4, offset = 0x4, fixed_abs, tag = 'smem constant byte address 0x4 - core index']
  #allocation1 [shape = 'u32[144,128]{1,0:T(1,128)}', space=vmem, size = 0x12000, scoped, tag = 'internal scratch']
  %s0 = inlined_call_operand.vmem [shape: f32[2,8,128], index: 0, kind: input, shape index: {}]
  %s1 = inlined_call_operand.vmem [shape: bf16[3,128,384], index: 1, kind: input, shape index: {}]
  %s2 = inlined_call_operand.vmem [shape: bf16[3,128,128], index: 2, kind: input, shape index: {}]
  %s3 = inlined_call_operand.vmem [shape: bf16[3,128,512], index: 3, kind: input, shape index: {}]
  %s4 = inlined_call_operand.vmem [shape: bf16[3,512,128], index: 4, kind: input, shape index: {}]
  %s5 = inlined_call_operand.vmem [shape: f32[17,128], index: 5, kind: input, shape index: {}]
  %s6 = inlined_call_operand.vmem [shape: f32[3,512], index: 6, kind: input, shape index: {}]
  %s7 = inlined_call_operand.hbm [shape: f32[2,8,128], index: 7, kind: output, shape index: {}]
  %s8 = sld [smem:[#allocation0]]
  $region61: #{encoder_forward.1} parent=0
    _
  %s10 = ssub.s32 1, %s8
  %s11 = scalar_select 0, %s10, %s8
  $region1: #{encoder_forward.1} parent=0
    #allocation2 [shape = 'u8[8192]{0}', space=vmem, size = 0x2000, scoped, tag = 'output window, operand 0']
    #allocation3 [shape = 's32[2]{0}', space=sflag, size = 0x8, scoped, tag = 'scoped memory for encoder_forward.1']
    %12 = vsyncpa [#allocation3], 0
    %s13 = scalar_lea.sflag [#allocation3], 1
    %14 = vsyncpa %s13, 0
    loop: start=0, step=1, limit=4
    $region2: #{encoder_forward.1} parent=1 // loop_pre_header
      _
    $region3: #{encoder_forward.1} parent=1 // loop_header
      %s16 = sphi 0, %s20
      %p17 = scmp.ge.s32.totalorder %s16, 4
      %s26 = sphi 0, %s28
      %s29 = sphi 0, %s26
      %s30 = sphi 0, %s29
      %s46 = sphi 0, %s30
      %s50 = sphi 0, %s50
      %s52 = sphi 0, %s50
      %s53 = sphi 0, %s52
      %s67 = sphi 0, %s53
      %s71 = sphi 0, %s71
      %s73 = sphi 0, %s71
      %s74 = sphi 0, %s73
      %s88 = sphi 0, %s74
      %s92 = sphi 0, %s92
      %s94 = sphi 0, %s92
      %s95 = sphi 0, %s94
      %s109 = sphi 0, %s95
      %s113 = sphi 0, %s113
      %s115 = sphi 0, %s113
      %s116 = sphi 0, %s115
      %s130 = sphi 0, %s116
      %s134 = sphi 0, %s134
      %s136 = sphi 0, %s134
      %s137 = sphi 0, %s136
      %s151 = sphi 0, %s137
      %s155 = sphi 0, %s155
      %s157 = sphi 0, %s155
      %s158 = sphi 0, %s157
      %s172 = sphi 0, %s158
      %s178 = sphi 0, %s180
      %s181 = sphi 0, %s178
      %s182 = sphi 0, %s181
      %s198 = sphi 0, %s182
    $region4: #{encoder_forward.1} parent=1 // loop_header_branch
      %19 = sbr.rel (%p17) target = $region8
    $region5: #{encoder_forward.1} parent=1 // loop_body
      %s21 = ssub.s32 %s16, 1
      %s22 = ssub.s32 %s16, 2
      %s23 = sadd.s32 %s16, 1
      %s24 = ssub.s32 %s16, %s23
      %p25 = scmp.eq.s32.totalorder %s24, 0
      %s27 = sadd.s32 %s26, 1
      %s28 = scalar_select %p25, %s26, %s27
      %p31 = pneg %p25
      %p32 = scmp.eq.s32.totalorder %s16, 1
      %p33 = por %p31, %p32
      %p34 = scmp.ne.s32.totalorder %s26, %s29
      %p35 = scmp.eq.s32.totalorder %s16, 0
      %p36 = por %p34, %p35
      %p37 = scmp.ne.s32.totalorder %s26, %s29
      %p38 = scmp.eq.s32.totalorder %s21, 1
      %p39 = por %p37, %p38
      %p40 = scmp.ne.s32.totalorder %s29, %s30
      %p41 = scmp.eq.s32.totalorder %s21, 0
      %p42 = por %p40, %p41
      %p43 = scmp.ne.s32.totalorder %s29, %s30
      %p44 = scmp.eq.s32.totalorder %s22, 1
      %p45 = por %p43, %p44
      %p47 = scmp.ne.s32.totalorder %s30, %s46
      %p48 = scmp.eq.s32.totalorder %s22, 0
      %p49 = por %p47, %p48
      %s51 = sadd.s32 %s50, 1
      %p54 = scmp.eq.s32.totalorder %s16, 1
      %p55 = scmp.ne.s32.totalorder %s50, %s52
      %p56 = scmp.eq.s32.totalorder %s16, 0
      %p57 = por %p55, %p56
      %p58 = scmp.ne.s32.totalorder %s50, %s52
      %p59 = scmp.eq.s32.totalorder %s21, 1
      %p60 = por %p58, %p59
      %p61 = scmp.ne.s32.totalorder %s52, %s53
      %p62 = scmp.eq.s32.totalorder %s21, 0
      %p63 = por %p61, %p62
      %p64 = scmp.ne.s32.totalorder %s52, %s53
      %p65 = scmp.eq.s32.totalorder %s22, 1
      %p66 = por %p64, %p65
      %p68 = scmp.ne.s32.totalorder %s53, %s67
      %p69 = scmp.eq.s32.totalorder %s22, 0
      %p70 = por %p68, %p69
      %s72 = sadd.s32 %s71, 1
      %p75 = scmp.eq.s32.totalorder %s16, 1
      %p76 = scmp.ne.s32.totalorder %s71, %s73
      %p77 = scmp.eq.s32.totalorder %s16, 0
      %p78 = por %p76, %p77
      %p79 = scmp.ne.s32.totalorder %s71, %s73
      %p80 = scmp.eq.s32.totalorder %s21, 1
      %p81 = por %p79, %p80
      %p82 = scmp.ne.s32.totalorder %s73, %s74
      %p83 = scmp.eq.s32.totalorder %s21, 0
      %p84 = por %p82, %p83
      %p85 = scmp.ne.s32.totalorder %s73, %s74
      %p86 = scmp.eq.s32.totalorder %s22, 1
      %p87 = por %p85, %p86
      %p89 = scmp.ne.s32.totalorder %s74, %s88
      %p90 = scmp.eq.s32.totalorder %s22, 0
      %p91 = por %p89, %p90
      %s93 = sadd.s32 %s92, 1
      %p96 = scmp.eq.s32.totalorder %s16, 1
      %p97 = scmp.ne.s32.totalorder %s92, %s94
      %p98 = scmp.eq.s32.totalorder %s16, 0
      %p99 = por %p97, %p98
      %p100 = scmp.ne.s32.totalorder %s92, %s94
      %p101 = scmp.eq.s32.totalorder %s21, 1
      %p102 = por %p100, %p101
      %p103 = scmp.ne.s32.totalorder %s94, %s95
      %p104 = scmp.eq.s32.totalorder %s21, 0
      %p105 = por %p103, %p104
      %p106 = scmp.ne.s32.totalorder %s94, %s95
      %p107 = scmp.eq.s32.totalorder %s22, 1
      %p108 = por %p106, %p107
      %p110 = scmp.ne.s32.totalorder %s95, %s109
      %p111 = scmp.eq.s32.totalorder %s22, 0
      %p112 = por %p110, %p111
      %s114 = sadd.s32 %s113, 1
      %p117 = scmp.eq.s32.totalorder %s16, 1
      %p118 = scmp.ne.s32.totalorder %s113, %s115
      %p119 = scmp.eq.s32.totalorder %s16, 0
      %p120 = por %p118, %p119
      %p121 = scmp.ne.s32.totalorder %s113, %s115
      %p122 = scmp.eq.s32.totalorder %s21, 1
      %p123 = por %p121, %p122
      %p124 = scmp.ne.s32.totalorder %s115, %s116
      %p125 = scmp.eq.s32.totalorder %s21, 0
      %p126 = por %p124, %p125
      %p127 = scmp.ne.s32.totalorder %s115, %s116
      %p128 = scmp.eq.s32.totalorder %s22, 1
      %p129 = por %p127, %p128
      %p131 = scmp.ne.s32.totalorder %s116, %s130
      %p132 = scmp.eq.s32.totalorder %s22, 0
      %p133 = por %p131, %p132
      %s135 = sadd.s32 %s134, 1
      %p138 = scmp.eq.s32.totalorder %s16, 1
      %p139 = scmp.ne.s32.totalorder %s134, %s136
      %p140 = scmp.eq.s32.totalorder %s16, 0
      %p141 = por %p139, %p140
      %p142 = scmp.ne.s32.totalorder %s134, %s136
      %p143 = scmp.eq.s32.totalorder %s21, 1
      %p144 = por %p142, %p143
      %p145 = scmp.ne.s32.totalorder %s136, %s137
      %p146 = scmp.eq.s32.totalorder %s21, 0
      %p147 = por %p145, %p146
      %p148 = scmp.ne.s32.totalorder %s136, %s137
      %p149 = scmp.eq.s32.totalorder %s22, 1
      %p150 = por %p148, %p149
      %p152 = scmp.ne.s32.totalorder %s137, %s151
      %p153 = scmp.eq.s32.totalorder %s22, 0
      %p154 = por %p152, %p153
      %s156 = sadd.s32 %s155, 1
      %p159 = scmp.eq.s32.totalorder %s16, 1
      %p160 = scmp.ne.s32.totalorder %s155, %s157
      %p161 = scmp.eq.s32.totalorder %s16, 0
      %p162 = por %p160, %p161
      %p163 = scmp.ne.s32.totalorder %s155, %s157
      %p164 = scmp.eq.s32.totalorder %s21, 1
      %p165 = por %p163, %p164
      %p166 = scmp.ne.s32.totalorder %s157, %s158
      %p167 = scmp.eq.s32.totalorder %s21, 0
      %p168 = por %p166, %p167
      %p169 = scmp.ne.s32.totalorder %s157, %s158
      %p170 = scmp.eq.s32.totalorder %s22, 1
      %p171 = por %p169, %p170
      %p173 = scmp.ne.s32.totalorder %s158, %s172
      %p174 = scmp.eq.s32.totalorder %s22, 0
      %p175 = por %p173, %p174
      %s176 = ssub.s32 %s16, %s23
      %p177 = scmp.eq.s32.totalorder %s176, 0
      %s179 = sadd.s32 %s178, 1
      %s180 = scalar_select %p177, %s178, %s179
      %p183 = pneg %p177
      %p184 = scmp.eq.s32.totalorder %s16, 1
      %p185 = por %p183, %p184
      %p186 = scmp.ne.s32.totalorder %s178, %s181
      %p187 = scmp.eq.s32.totalorder %s16, 0
      %p188 = por %p186, %p187
      %p189 = scmp.ne.s32.totalorder %s178, %s181
      %p190 = scmp.eq.s32.totalorder %s21, 1
      %p191 = por %p189, %p190
      %p192 = scmp.ne.s32.totalorder %s181, %s182
      %p193 = scmp.eq.s32.totalorder %s21, 0
      %p194 = por %p192, %p193
      %p195 = scmp.ne.s32.totalorder %s181, %s182
      %p196 = scmp.eq.s32.totalorder %s22, 1
      %p197 = por %p195, %p196
      %p199 = scmp.ne.s32.totalorder %s182, %s198
      %p200 = scmp.eq.s32.totalorder %s22, 0
      %p201 = por %p199, %p200
      %p202 = scmp.le.s32.totalorder 1, %s16
      %p203 = scmp.lt.s32.totalorder %s16, 3
      %p204 = pnand %p202, %p203
      %p205 = pneg %p204
      // Predicated region
      $region9: #{encoder_forward.1} parent=5 // pred_check
        _
      $region10: #{encoder_forward.1} parent=5 // pred_check_branch
        %207 = sbr.rel (%p204) target = $region12
      $region11: #{encoder_forward.1} parent=5 // pred_region
        %s208 = ssub.s32 %s16, 1
        // Predicated region
        $region13: #{encoder_forward.1} parent=11 // pred_check
          %p209 = pneg %p63
        $region14: #{encoder_forward.1} parent=11 // pred_check_branch
          %211 = sbr.rel (%p209) target = $region16
        $region15: #{encoder_forward.1} parent=11 // pred_region
          _
        $region16: #{encoder_forward.1} parent=11 // pred_fallthru
          _
        // Predicated region
        $region17: #{encoder_forward.1} parent=11 // pred_check
          %p212 = pneg %p84
        $region18: #{encoder_forward.1} parent=11 // pred_check_branch
          %214 = sbr.rel (%p212) target = $region20
        $region19: #{encoder_forward.1} parent=11 // pred_region
          _
        $region20: #{encoder_forward.1} parent=11 // pred_fallthru
          _
        // Predicated region
        $region21: #{encoder_forward.1} parent=11 // pred_check
          %p215 = pneg %p105
        $region22: #{encoder_forward.1} parent=11 // pred_check_branch
          %217 = sbr.rel (%p215) target = $region24
        $region23: #{encoder_forward.1} parent=11 // pred_region
          _
        $region24: #{encoder_forward.1} parent=11 // pred_fallthru
          _
        // Predicated region
        $region25: #{encoder_forward.1} parent=11 // pred_check
          %p218 = pneg %p126
        $region26: #{encoder_forward.1} parent=11 // pred_check_branch
          %220 = sbr.rel (%p218) target = $region28
        $region27: #{encoder_forward.1} parent=11 // pred_region
          _
        $region28: #{encoder_forward.1} parent=11 // pred_fallthru
          _
        // Predicated region
        $region29: #{encoder_forward.1} parent=11 // pred_check
          %p221 = pneg %p147
        $region30: #{encoder_forward.1} parent=11 // pred_check_branch
          %223 = sbr.rel (%p221) target = $region32
        $region31: #{encoder_forward.1} parent=11 // pred_region
          _
        $region32: #{encoder_forward.1} parent=11 // pred_fallthru
          _
        // Predicated region
        $region33: #{encoder_forward.1} parent=11 // pred_check
          %p224 = pneg %p168
        $region34: #{encoder_forward.1} parent=11 // pred_check_branch
          %226 = sbr.rel (%p224) target = $region36
        $region35: #{encoder_forward.1} parent=11 // pred_region
          _
        $region36: #{encoder_forward.1} parent=11 // pred_fallthru
          _
      $region12: #{encoder_forward.1} parent=5 // pred_fallthru
        _
      %p227 = scmp.lt.s32.totalorder %s16, 2
      // Predicated region
      $region37: #{encoder_forward.1} parent=5 // pred_check
        %p228 = pneg %p227
      $region38: #{encoder_forward.1} parent=5 // pred_check_branch
        %230 = sbr.rel (%p228) target = $region40
      $region39: #{encoder_forward.1} parent=5 // pred_region
        // Predicated region
        $region41: #{encoder_forward.1} parent=39 // pred_check
          %p231 = pneg %p36
        $region42: #{encoder_forward.1} parent=39 // pred_check_branch
          %233 = sbr.rel (%p231) target = $region44
        $region43: #{encoder_forward.1} parent=39 // pred_region
          %p234 = scmp.lt.s32.totalorder %s16, 1
          %s235 = scalar_select %p234, %s16, 1
          %s236 = smul.addr %s235, 8
          %s237 = scalar_lea.vmem %s0, %s236
        $region44: #{encoder_forward.1} parent=39 // pred_fallthru
          _
      $region40: #{encoder_forward.1} parent=5 // pred_fallthru
        _
      %p238 = scmp.le.s32.totalorder 1, %s16
      %p239 = scmp.lt.s32.totalorder %s16, 3
      %p240 = pnand %p238, %p239
      %p241 = pneg %p240
      // Predicated region
      $region45: #{encoder_forward.1} parent=5 // pred_check
        _
      $region46: #{encoder_forward.1} parent=5 // pred_check_branch
        %243 = sbr.rel (%p240) target = $region48
      $region47: #{encoder_forward.1} parent=5 // pred_region
        %s244 = ssub.s32 %s16, 1
        %p245 = scmp.lt.s32.totalorder %s21, 1
        %s246 = scalar_select %p245, %s21, 1
        %s247 = smul.addr %s246, 8
        %s248 = scalar_lea.vmem %s0, %s247
        %p249 = pneg %p42
        %p250 = pneg %p39
        %p251 = pneg %p63
        %p252 = pneg %p60
        %p253 = pneg %p84
        %p254 = pneg %p81
        %p255 = pneg %p105
        %p256 = pneg %p102
        %p257 = pneg %p126
        %p258 = pneg %p123
        %p259 = pneg %p147
        %p260 = pneg %p144
        %p261 = pneg %p168
        %p262 = pneg %p165
        %p263 = pneg %p194
        %p264 = pneg %p191
        %s265 = sand.u32 %s181, 1
        %s266 = scalar_lea.sflag [#allocation3], %s265
        %s267 = sand.u32 %s181, 1
        %s268 = smul.addr %s267, 8
        %s269 = scalar_lea.vmem [#allocation2], %s268
        %p270 = scmp.lt.s32.totalorder %s21, 1
        %s271 = scalar_select %p270, %s21, 1
        %s272 = smul.addr %s271, 8
        %s273 = scalar_lea.vmem %s0, %s272
        %v275 = vld [vmem:[%s273] sm:$0xff]
        %v276 = vpack.c.bf16 %v275, %v275
        %v277 = vld [vmem:[%s1] sm:$0xff]
        %v278 = vld [vmem:[%s1 + $0x8] sm:$0xf]
        %v279 = vld [vmem:[%s1 + $0xc] sm:$0xff]
        %v280 = vld [vmem:[%s1 + $0x14] sm:$0xf]
        %v281 = vld [vmem:[%s1 + $0x18] sm:$0xff]
        %v282 = vld [vmem:[%s1 + $0x20] sm:$0xf]
        %v283 = vld [vmem:[%s1 + $0x24] sm:$0xff]
        %v284 = vld [vmem:[%s1 + $0x2c] sm:$0xf]
        %v285 = vld [vmem:[%s1 + $0x30] sm:$0xff]
        %v286 = vld [vmem:[%s1 + $0x38] sm:$0xf]
        %v287 = vld [vmem:[%s1 + $0x3c] sm:$0xff]
        %v288 = vld [vmem:[%s1 + $0x44] sm:$0xf]
        %v289 = vld [vmem:[%s1 + $0x48] sm:$0xff]
        %v290 = vld [vmem:[%s1 + $0x50] sm:$0xf]
        %v291 = vld [vmem:[%s1 + $0x54] sm:$0xff]
        %v292 = vld [vmem:[%s1 + $0x5c] sm:$0xf]
        %v293 = vld [vmem:[%s1 + $0x60] sm:$0xff]
        %v294 = vld [vmem:[%s1 + $0x68] sm:$0xf]
        %v295 = vld [vmem:[%s1 + $0x6c] sm:$0xff]
        %v296 = vld [vmem:[%s1 + $0x74] sm:$0xf]
        %v297 = vld [vmem:[%s1 + $0x78] sm:$0xff]
        %v298 = vld [vmem:[%s1 + $0x80] sm:$0xf]
        %v299 = vld [vmem:[%s1 + $0x84] sm:$0xff]
        %v300 = vld [vmem:[%s1 + $0x8c] sm:$0xf]
        %v301 = vld [vmem:[%s1 + $0x90] sm:$0xff]
        %v302 = vld [vmem:[%s1 + $0x98] sm:$0xf]
        %v303 = vld [vmem:[%s1 + $0x9c] sm:$0xff]
        %v304 = vld [vmem:[%s1 + $0xa4] sm:$0xf]
        %v305 = vld [vmem:[%s1 + $0xa8] sm:$0xff]
        %v306 = vld [vmem:[%s1 + $0xb0] sm:$0xf]
        %v307 = vld [vmem:[%s1 + $0xb4] sm:$0xff]
        %v308 = vld [vmem:[%s1 + $0xbc] sm:$0xf]
        %v341 = vunpack.c.l.b16 %v277
        %v342 = vunpack.c.h.b16 %v277
        %v343 = vunpack.c.l.b16 %v278
        %v344 = vunpack.c.l.b16 %v279
        %v345 = vunpack.c.h.b16 %v279
        %v346 = vunpack.c.l.b16 %v280
        %v347 = vunpack.c.l.b16 %v281
        %v348 = vunpack.c.h.b16 %v281
        %v349 = vunpack.c.l.b16 %v282
        %v350 = vunpack.c.l.b16 %v283
        %v351 = vunpack.c.h.b16 %v283
        %v352 = vunpack.c.l.b16 %v284
        %v353 = vunpack.c.l.b16 %v285
        %v354 = vunpack.c.h.b16 %v285
        %v355 = vunpack.c.l.b16 %v286
        %v356 = vunpack.c.l.b16 %v287
        %v357 = vunpack.c.h.b16 %v287
        %v358 = vunpack.c.l.b16 %v288
        %v359 = vunpack.c.l.b16 %v289
        %v360 = vunpack.c.h.b16 %v289
        %v361 = vunpack.c.l.b16 %v290
        %v362 = vunpack.c.l.b16 %v291
        %v363 = vunpack.c.h.b16 %v291
        %v364 = vunpack.c.l.b16 %v292
        %v365 = vunpack.c.l.b16 %v293
        %v366 = vunpack.c.h.b16 %v293
        %v367 = vunpack.c.l.b16 %v294
        %v368 = vunpack.c.l.b16 %v295
        %v369 = vunpack.c.h.b16 %v295
        %v370 = vunpack.c.l.b16 %v296
        %v371 = vunpack.c.l.b16 %v297
        %v372 = vunpack.c.h.b16 %v297
        %v373 = vunpack.c.l.b16 %v298
        %v374 = vunpack.c.l.b16 %v299
        %v375 = vunpack.c.h.b16 %v299
        %v376 = vunpack.c.l.b16 %v300
        %v377 = vunpack.c.l.b16 %v301
        %v378 = vunpack.c.h.b16 %v301
        %v379 = vunpack.c.l.b16 %v302
        %v380 = vunpack.c.l.b16 %v303
        %v381 = vunpack.c.h.b16 %v303
        %v382 = vunpack.c.l.b16 %v304
        %v383 = vunpack.c.l.b16 %v305
        %v384 = vunpack.c.h.b16 %v305
        %v385 = vunpack.c.l.b16 %v306
        %v386 = vunpack.c.l.b16 %v307
        %v387 = vunpack.c.h.b16 %v307
        %v388 = vunpack.c.l.b16 %v308
        %v389 = vpack.c.b16 %v344, %v341
        %v390 = vpack.c.b16 %v345, %v342
        %v391 = vpack.c.b16 %v346, %v343
        %v392 = vpack.c.b16 %v350, %v347
        %v393 = vpack.c.b16 %v351, %v348
        %v394 = vpack.c.b16 %v352, %v349
        %v395 = vpack.c.b16 %v356, %v353
        %v396 = vpack.c.b16 %v357, %v354
        %v397 = vpack.c.b16 %v358, %v355
        %v398 = vpack.c.b16 %v362, %v359
        %v399 = vpack.c.b16 %v363, %v360
        %v400 = vpack.c.b16 %v364, %v361
        %v401 = vpack.c.b16 %v368, %v365
        %v402 = vpack.c.b16 %v369, %v366
        %v403 = vpack.c.b16 %v370, %v367
        %v404 = vpack.c.b16 %v374, %v371
        %v405 = vpack.c.b16 %v375, %v372
        %v406 = vpack.c.b16 %v376, %v373
        %v407 = vpack.c.b16 %v380, %v377
        %v408 = vpack.c.b16 %v381, %v378
        %v409 = vpack.c.b16 %v382, %v379
        %v410 = vpack.c.b16 %v386, %v383
        %v411 = vpack.c.b16 %v387, %v384
        %v412 = vpack.c.b16 %v388, %v385
        %437 = vmatprep.subr.bf16.mxu0 %v390
        %438 = vmatpush1.bf16.msra.mxu0 %v389
        %439 = vmatprep.subr.bf16.mxu0 %v393
        %440 = vmatpush1.bf16.msra.mxu0 %v392
        %441 = vmatprep.subr.bf16.mxu0 %v396
        %442 = vmatpush1.bf16.msra.mxu0 %v395
        %443 = vmatprep.subr.bf16.mxu0 %v399
        %444 = vmatpush1.bf16.msra.mxu0 %v398
        %445 = vmatprep.subr.bf16.mxu0 %v402
        %446 = vmatpush1.bf16.msra.mxu0 %v401
        %447 = vmatprep.subr.bf16.mxu0 %v405
        %448 = vmatpush1.bf16.msra.mxu0 %v404
        %449 = vmatprep.subr.bf16.mxu0 %v408
        %450 = vmatpush1.bf16.msra.mxu0 %v407
        %451 = vmatprep.subr.bf16.mxu0 %v411
        %452 = vmatpush1.bf16.msra.mxu0 %v410
        %453 = vmatprep.subr.bf16.mxu0 0
        %454 = vmatpush1.bf16.msra.mxu0 0
        %455 = vmatprep.subr.bf16.mxu0 0
        %456 = vmatpush1.bf16.msra.mxu0 0
        %457 = vmatprep.subr.bf16.mxu0 0
        %458 = vmatpush1.bf16.msra.mxu0 0
        %459 = vmatprep.subr.bf16.mxu0 0
        %460 = vmatpush1.bf16.msra.mxu0 0
        %461 = vmatprep.subr.bf16.mxu0 0
        %462 = vmatpush1.bf16.msra.mxu0 0
        %463 = vmatprep.subr.bf16.mxu0 0
        %464 = vmatpush1.bf16.msra.mxu0 0
        %465 = vmatprep.subr.bf16.mxu0 0
        %466 = vmatpush1.bf16.msra.mxu0 0
        %467 = vmatprep.subr.bf16.mxu0 0
        %468 = vmatpush1.bf16.msra.mxu0 0
        %469 = vmatprep.mubr.bf16.mxu0 0
        %470 = vmatmul.mubr.bf16.gmra.mrb[0].mxu0 %v276
        %v471 = vpop.f32.mrb[0].mxu0
        %v472 = vadd.f32 0.0, %v471
        %v473 = vpop.f32.mrb[0].mxu0
        %v474 = vadd.f32 0.0, %v473
        %v475 = vpop.f32.mrb[0].mxu0
        %v476 = vpop.f32.mrb[0].mxu0
        %477 = vdwg.mxu0
        %478 = vmatprep.subr.bf16.mxu0 0
        %479 = vmatpush1.bf16.msra.mxu0 %v391
        %480 = vmatprep.subr.bf16.mxu0 0
        %481 = vmatpush1.bf16.msra.mxu0 %v394
        %482 = vmatprep.subr.bf16.mxu0 0
        %483 = vmatpush1.bf16.msra.mxu0 %v397
        %484 = vmatprep.subr.bf16.mxu0 0
        %485 = vmatpush1.bf16.msra.mxu0 %v400
        %486 = vmatprep.subr.bf16.mxu0 0
        %487 = vmatpush1.bf16.msra.mxu0 %v403
        %488 = vmatprep.subr.bf16.mxu0 0
        %489 = vmatpush1.bf16.msra.mxu0 %v406
        %490 = vmatprep.subr.bf16.mxu0 0
        %491 = vmatpush1.bf16.msra.mxu0 %v409
        %492 = vmatprep.subr.bf16.mxu0 0
        %493 = vmatpush1.bf16.msra.mxu0 %v412
        %494 = vmatprep.subr.bf16.mxu0 0
        %495 = vmatpush1.bf16.msra.mxu0 0
        %496 = vmatprep.subr.bf16.mxu0 0
        %497 = vmatpush1.bf16.msra.mxu0 0
        %498 = vmatprep.subr.bf16.mxu0 0
        %499 = vmatpush1.bf16.msra.mxu0 0
        %500 = vmatprep.subr.bf16.mxu0 0
        %501 = vmatpush1.bf16.msra.mxu0 0
        %502 = vmatprep.subr.bf16.mxu0 0
        %503 = vmatpush1.bf16.msra.mxu0 0
        %504 = vmatprep.subr.bf16.mxu0 0
        %505 = vmatpush1.bf16.msra.mxu0 0
        %506 = vmatprep.subr.bf16.mxu0 0
        %507 = vmatpush1.bf16.msra.mxu0 0
        %508 = vmatprep.subr.bf16.mxu0 0
        %509 = vmatpush1.bf16.msra.mxu0 0
        %510 = vmatprep.mubr.bf16.mxu0 0
        %511 = vmatmul.mubr.bf16.gmra.mrb[0].mxu0 %v276
        %v512 = vpop.f32.mrb[0].mxu0
        %v513 = vadd.f32 0.0, %v512
        %v514 = vpop.f32.mrb[0].mxu0
        %v515 = vpop.f32.mrb[0].mxu0
        %v516 = vpop.f32.mrb[0].mxu0
        %517 = vdwg.mxu0
        %v518 = vmul.f32 %v472, 0.125
        %vm519 = vcmask 523264
        %v521 = vsel %vm519, %v518, 0
        %v524 = vsel %vm519, %v474, 0
        %526 = vmatprep.subr.mxu0 0.0
        %527 = vmatpush1.xpose.msra.mxu0 %v524
        %528 = vmatprep.subr.mxu0 0.0
        %529 = vmatpush1.xpose.msra.mxu0 0.0
        %530 = vmatprep.subr.mxu0 0.0
        %531 = vmatpush1.xpose.msra.mxu0 0.0
        %532 = vmatprep.subr.mxu0 0.0
        %533 = vmatpush1.xpose.msra.mxu0 0.0
        %534 = vmatprep.subr.mxu0 0.0
        %535 = vmatpush1.xpose.msra.mxu0 0.0
        %536 = vmatprep.subr.mxu0 0.0
        %537 = vmatpush1.xpose.msra.mxu0 0.0
        %538 = vmatprep.subr.mxu0 0.0
        %539 = vmatpush1.xpose.msra.mxu0 0.0
        %540 = vmatprep.subr.mxu0 0.0
        %541 = vmatpush1.xpose.msra.mxu0 0.0
        %542 = vmatprep.subr.mxu0 0.0
        %543 = vmatpush1.xpose.msra.mxu0 0.0
        %544 = vmatprep.subr.mxu0 0.0
        %545 = vmatpush1.xpose.msra.mxu0 0.0
        %546 = vmatprep.subr.mxu0 0.0
        %547 = vmatpush1.xpose.msra.mxu0 0.0
        %548 = vmatprep.subr.mxu0 0.0
        %549 = vmatpush1.xpose.msra.mxu0 0.0
        %550 = vmatprep.subr.mxu0 0.0
        %551 = vmatpush1.xpose.msra.mxu0 0.0
        %552 = vmatprep.subr.mxu0 0.0
        %553 = vmatpush1.xpose.msra.mxu0 0.0
        %554 = vmatprep.subr.mxu0 0.0
        %555 = vmatpush1.xpose.msra.mxu0 0.0
        %556 = vmatprep.subr.mxu0 0.0
        %557 = vmatpush1.xpose.msra.mxu0 0.0
        %558 = vmatprep.subr.mxu0 0.0
        %559 = vmatpush1.xpose.msra.mxu0 0.0
        %560 = vmatprep.subr.mxu0 0.0
        %561 = vmatpush1.xpose.msra.mxu0 0.0
        %562 = vmatprep.subr.mxu0 0.0
        %563 = vmatpush1.xpose.msra.mxu0 0.0
        %564 = vmatprep.subr.mxu0 0.0
        %565 = vmatpush1.xpose.msra.mxu0 0.0
        %566 = vmatprep.subr.mxu0 0.0
        %567 = vmatpush1.xpose.msra.mxu0 0.0
        %568 = vmatprep.subr.mxu0 0.0
        %569 = vmatpush1.xpose.msra.mxu0 0.0
        %570 = vmatprep.subr.mxu0 0.0
        %571 = vmatpush1.xpose.msra.mxu0 0.0
        %572 = vmatprep.subr.mxu0 0.0
        %573 = vmatpush1.xpose.msra.mxu0 0.0
        %574 = vmatprep.subr.mxu0 0.0
        %575 = vmatpush1.xpose.msra.mxu0 0.0
        %576 = vmatprep.subr.mxu0 0.0
        %577 = vmatpush1.xpose.msra.mxu0 0.0
        %578 = vmatprep.subr.mxu0 0.0
        %579 = vmatpush1.xpose.msra.mxu0 0.0
        %580 = vmatprep.subr.mxu0 0.0
        %581 = vmatpush1.xpose.msra.mxu0 0.0
        %582 = vmatprep.subr.mxu0 0.0
        %583 = vmatpush1.xpose.msra.mxu0 0.0
        %584 = vmatprep.subr.mxu0 0.0
        %585 = vmatpush1.xpose.msra.mxu0 0.0
        %586 = vmatprep.subr.mxu0 0.0
        %587 = vmatpush1.xpose.msra.mxu0 0.0
        %588 = vmatprep.subr.mxu0 0.0
        %589 = vmatpush1.xpose.msra.mxu0 0.0
        %590 = vmatprep.mubr.f32.mxu0 0.0
        %591 = vmatmul.mubr.f32.gmra.mrb[0].mxu0 %v521
        %v592 = vpop.f32.mrb[0].mxu0
        %v593 = vadd.f32 0.0, %v592
        %v594 = vpop.f32.mrb[0].mxu0
        %595 = vdwg.mxu0
        %vm596 = vcmask 64512
        %v597 = vsel %vm596, %v593, -inf
        %598 = vmax.xlane.f32.xlu0 %v597
        %v599 = vpop.xlane.xlu0 %598
        %v600 = vsub.f32 %v593, %v599
        %v601 = vmul.f32 %v600, 1.442695
        %v602 = vpow.pop %v601
        %v603 = vsel %vm596, %v602, 0.0
        %604 = vadd.xlane.f32.xlu0 %v603
        %v605 = vpop.xlane.xlu0 %604
        %v606 = vrcp.pop %v605
        %v607 = vmul.f32 %v602, %v606
        %v609 = vsel %vm596, %v607, 0
        %611 = vmatprep.subr.mxu0 0.0
        %612 = vmatpush1.msra.mxu0 %v513
        %613 = vmatprep.subr.mxu0 0.0
        %614 = vmatpush1.msra.mxu0 0.0
        %615 = vmatprep.subr.mxu0 0.0
        %616 = vmatpush1.msra.mxu0 0.0
        %617 = vmatprep.subr.mxu0 0.0
        %618 = vmatpush1.msra.mxu0 0.0
        %619 = vmatprep.subr.mxu0 0.0
        %620 = vmatpush1.msra.mxu0 0.0
        %621 = vmatprep.subr.mxu0 0.0
        %622 = vmatpush1.msra.mxu0 0.0
        %623 = vmatprep.subr.mxu0 0.0
        %624 = vmatpush1.msra.mxu0 0.0
        %625 = vmatprep.subr.mxu0 0.0
        %626 = vmatpush1.msra.mxu0 0.0
        %627 = vmatprep.subr.mxu0 0.0
        %628 = vmatpush1.msra.mxu0 0.0
        %629 = vmatprep.subr.mxu0 0.0
        %630 = vmatpush1.msra.mxu0 0.0
        %631 = vmatprep.subr.mxu0 0.0
        %632 = vmatpush1.msra.mxu0 0.0
        %633 = vmatprep.subr.mxu0 0.0
        %634 = vmatpush1.msra.mxu0 0.0
        %635 = vmatprep.subr.mxu0 0.0
        %636 = vmatpush1.msra.mxu0 0.0
        %637 = vmatprep.subr.mxu0 0.0
        %638 = vmatpush1.msra.mxu0 0.0
        %639 = vmatprep.subr.mxu0 0.0
        %640 = vmatpush1.msra.mxu0 0.0
        %641 = vmatprep.subr.mxu0 0.0
        %642 = vmatpush1.msra.mxu0 0.0
        %643 = vmatprep.subr.mxu0 0.0
        %644 = vmatpush1.msra.mxu0 0.0
        %645 = vmatprep.subr.mxu0 0.0
        %646 = vmatpush1.msra.mxu0 0.0
        %647 = vmatprep.subr.mxu0 0.0
        %648 = vmatpush1.msra.mxu0 0.0
        %649 = vmatprep.subr.mxu0 0.0
        %650 = vmatpush1.msra.mxu0 0.0
        %651 = vmatprep.subr.mxu0 0.0
        %652 = vmatpush1.msra.mxu0 0.0
        %653 = vmatprep.subr.mxu0 0.0
        %654 = vmatpush1.msra.mxu0 0.0
        %655 = vmatprep.subr.mxu0 0.0
        %656 = vmatpush1.msra.mxu0 0.0
        %657 = vmatprep.subr.mxu0 0.0
        %658 = vmatpush1.msra.mxu0 0.0
        %659 = vmatprep.subr.mxu0 0.0
        %660 = vmatpush1.msra.mxu0 0.0
        %661 = vmatprep.subr.mxu0 0.0
        %662 = vmatpush1.msra.mxu0 0.0
        %663 = vmatprep.subr.mxu0 0.0
        %664 = vmatpush1.msra.mxu0 0.0
        %665 = vmatprep.subr.mxu0 0.0
        %666 = vmatpush1.msra.mxu0 0.0
        %667 = vmatprep.subr.mxu0 0.0
        %668 = vmatpush1.msra.mxu0 0.0
        %669 = vmatprep.subr.mxu0 0.0
        %670 = vmatpush1.msra.mxu0 0.0
        %671 = vmatprep.subr.mxu0 0.0
        %672 = vmatpush1.msra.mxu0 0.0
        %673 = vmatprep.subr.mxu0 0.0
        %674 = vmatpush1.msra.mxu0 0.0
        %675 = vmatprep.mubr.f32.mxu0 0.0
        %676 = vmatmul.mubr.f32.gmra.mrb[0].mxu0 %v609
        %v677 = vpop.f32.mrb[0].mxu0
        %v678 = vadd.f32 0.0, %v677
        %v679 = vpop.f32.mrb[0].mxu0
        %680 = vdwg.mxu0
        %681 = vrot.lane.b32.xlu0 %v518, 64
        %v682 = vpop.permute.xlu0 %681
        %683 = vrot.lane.b32.xlu0 %v474, 64
        %v684 = vpop.permute.xlu0 %683
        %v685 = vsel %vm519, %v682, 0
        %v687 = vsel %vm519, %v684, 0
        %689 = vmatprep.subr.mxu0 0.0
        %690 = vmatpush1.xpose.msra.mxu0 %v687
        %691 = vmatprep.subr.mxu0 0.0
        %692 = vmatpush1.xpose.msra.mxu0 0.0
        %693 = vmatprep.subr.mxu0 0.0
        %694 = vmatpush1.xpose.msra.mxu0 0.0
        %695 = vmatprep.subr.mxu0 0.0
        %696 = vmatpush1.xpose.msra.mxu0 0.0
        %697 = vmatprep.subr.mxu0 0.0
        %698 = vmatpush1.xpose.msra.mxu0 0.0
        %699 = vmatprep.subr.mxu0 0.0
        %700 = vmatpush1.xpose.msra.mxu0 0.0
        %701 = vmatprep.subr.mxu0 0.0
        %702 = vmatpush1.xpose.msra.mxu0 0.0
        %703 = vmatprep.subr.mxu0 0.0
        %704 = vmatpush1.xpose.msra.mxu0 0.0
        %705 = vmatprep.subr.mxu0 0.0
        %706 = vmatpush1.xpose.msra.mxu0 0.0
        %707 = vmatprep.subr.mxu0 0.0
        %708 = vmatpush1.xpose.msra.mxu0 0.0
        %709 = vmatprep.subr.mxu0 0.0
        %710 = vmatpush1.xpose.msra.mxu0 0.0
        %711 = vmatprep.subr.mxu0 0.0
        %712 = vmatpush1.xpose.msra.mxu0 0.0
        %713 = vmatprep.subr.mxu0 0.0
        %714 = vmatpush1.xpose.msra.mxu0 0.0
        %715 = vmatprep.subr.mxu0 0.0
        %716 = vmatpush1.xpose.msra.mxu0 0.0
        %717 = vmatprep.subr.mxu0 0.0
        %718 = vmatpush1.xpose.msra.mxu0 0.0
        %719 = vmatprep.subr.mxu0 0.0
        %720 = vmatpush1.xpose.msra.mxu0 0.0
        %721 = vmatprep.subr.mxu0 0.0
        %722 = vmatpush1.xpose.msra.mxu0 0.0
        %723 = vmatprep.subr.mxu0 0.0
        %724 = vmatpush1.xpose.msra.mxu0 0.0
        %725 = vmatprep.subr.mxu0 0.0
        %726 = vmatpush1.xpose.msra.mxu0 0.0
        %727 = vmatprep.subr.mxu0 0.0
        %728 = vmatpush1.xpose.msra.mxu0 0.0
        %729 = vmatprep.subr.mxu0 0.0
        %730 = vmatpush1.xpose.msra.mxu0 0.0
        %731 = vmatprep.subr.mxu0 0.0
        %732 = vmatpush1.xpose.msra.mxu0 0.0
        %733 = vmatprep.subr.mxu0 0.0
        %734 = vmatpush1.xpose.msra.mxu0 0.0
        %735 = vmatprep.subr.mxu0 0.0
        %736 = vmatpush1.xpose.msra.mxu0 0.0
        %737 = vmatprep.subr.mxu0 0.0
        %738 = vmatpush1.xpose.msra.mxu0 0.0
        %739 = vmatprep.subr.mxu0 0.0
        %740 = vmatpush1.xpose.msra.mxu0 0.0
        %741 = vmatprep.subr.mxu0 0.0
        %742 = vmatpush1.xpose.msra.mxu0 0.0
        %743 = vmatprep.subr.mxu0 0.0
        %744 = vmatpush1.xpose.msra.mxu0 0.0
        %745 = vmatprep.subr.mxu0 0.0
        %746 = vmatpush1.xpose.msra.mxu0 0.0
        %747 = vmatprep.subr.mxu0 0.0
        %748 = vmatpush1.xpose.msra.mxu0 0.0
        %749 = vmatprep.subr.mxu0 0.0
        %750 = vmatpush1.xpose.msra.mxu0 0.0
        %751 = vmatprep.subr.mxu0 0.0
        %752 = vmatpush1.xpose.msra.mxu0 0.0
        %753 = vmatprep.mubr.f32.mxu0 0.0
        %754 = vmatmul.mubr.f32.gmra.mrb[0].mxu0 %v685
        %v755 = vpop.f32.mrb[0].mxu0
        %v756 = vadd.f32 0.0, %v755
        %v757 = vpop.f32.mrb[0].mxu0
        %758 = vdwg.mxu0
        %v759 = vsel %vm596, %v756, -inf
        %760 = vmax.xlane.f32.xlu0 %v759
        %v761 = vpop.xlane.xlu0 %760
        %v762 = vsub.f32 %v756, %v761
        %v763 = vmul.f32 %v762, 1.442695
        %v764 = vpow.pop %v763
        %v765 = vsel %vm596, %v764, 0.0
        %766 = vadd.xlane.f32.xlu0 %v765
        %v767 = vpop.xlane.xlu0 %766
        %v768 = vrcp.pop %v767
        %v769 = vmul.f32 %v764, %v768
        %771 = vrot.lane.b32.xlu0 %v513, 64
        %v772 = vpop.permute.xlu0 %771
        %v775 = vsel %vm596, %v769, 0
        %777 = vmatprep.subr.mxu0 0.0
        %778 = vmatpush1.msra.mxu0 %v772
        %779 = vmatprep.subr.mxu0 0.0
        %780 = vmatpush1.msra.mxu0 0.0
        %781 = vmatprep.subr.mxu0 0.0
        %782 = vmatpush1.msra.mxu0 0.0
        %783 = vmatprep.subr.mxu0 0.0
        %784 = vmatpush1.msra.mxu0 0.0
        %785 = vmatprep.subr.mxu0 0.0
        %786 = vmatpush1.msra.mxu0 0.0
        %787 = vmatprep.subr.mxu0 0.0
        %788 = vmatpush1.msra.mxu0 0.0
        %789 = vmatprep.subr.mxu0 0.0
        %790 = vmatpush1.msra.mxu0 0.0
        %791 = vmatprep.subr.mxu0 0.0
        %792 = vmatpush1.msra.mxu0 0.0
        %793 = vmatprep.subr.mxu0 0.0
        %794 = vmatpush1.msra.mxu0 0.0
        %795 = vmatprep.subr.mxu0 0.0
        %796 = vmatpush1.msra.mxu0 0.0
        %797 = vmatprep.subr.mxu0 0.0
        %798 = vmatpush1.msra.mxu0 0.0
        %799 = vmatprep.subr.mxu0 0.0
        %800 = vmatpush1.msra.mxu0 0.0
        %801 = vmatprep.subr.mxu0 0.0
        %802 = vmatpush1.msra.mxu0 0.0
        %803 = vmatprep.subr.mxu0 0.0
        %804 = vmatpush1.msra.mxu0 0.0
        %805 = vmatprep.subr.mxu0 0.0
        %806 = vmatpush1.msra.mxu0 0.0
        %807 = vmatprep.subr.mxu0 0.0
        %808 = vmatpush1.msra.mxu0 0.0
        %809 = vmatprep.subr.mxu0 0.0
        %810 = vmatpush1.msra.mxu0 0.0
        %811 = vmatprep.subr.mxu0 0.0
        %812 = vmatpush1.msra.mxu0 0.0
        %813 = vmatprep.subr.mxu0 0.0
        %814 = vmatpush1.msra.mxu0 0.0
        %815 = vmatprep.subr.mxu0 0.0
        %816 = vmatpush1.msra.mxu0 0.0
        %817 = vmatprep.subr.mxu0 0.0
        %818 = vmatpush1.msra.mxu0 0.0
        %819 = vmatprep.subr.mxu0 0.0
        %820 = vmatpush1.msra.mxu0 0.0
        %821 = vmatprep.subr.mxu0 0.0
        %822 = vmatpush1.msra.mxu0 0.0
        %823 = vmatprep.subr.mxu0 0.0
        %824 = vmatpush1.msra.mxu0 0.0
        %825 = vmatprep.subr.mxu0 0.0
        %826 = vmatpush1.msra.mxu0 0.0
        %827 = vmatprep.subr.mxu0 0.0
        %828 = vmatpush1.msra.mxu0 0.0
        %829 = vmatprep.subr.mxu0 0.0
        %830 = vmatpush1.msra.mxu0 0.0
        %831 = vmatprep.subr.mxu0 0.0
        %832 = vmatpush1.msra.mxu0 0.0
        %833 = vmatprep.subr.mxu0 0.0
        %834 = vmatpush1.msra.mxu0 0.0
        %835 = vmatprep.subr.mxu0 0.0
        %836 = vmatpush1.msra.mxu0 0.0
        %837 = vmatprep.subr.mxu0 0.0
        %838 = vmatpush1.msra.mxu0 0.0
        %839 = vmatprep.subr.mxu0 0.0
        %840 = vmatpush1.msra.mxu0 0.0
        %841 = vmatprep.mubr.f32.mxu0 0.0
        %842 = vmatmul.mubr.f32.gmra.mrb[0].mxu0 %v775
        %v843 = vpop.f32.mrb[0].mxu0
        %v844 = vadd.f32 0.0, %v843
        %v845 = vpop.f32.mrb[0].mxu0
        %846 = vdwg.mxu0
        %848 = vrot.lane.b32.xlu0 %v844, 64
        %v849 = vpop.permute.xlu0 %848
        %v851 = vsel %vm519, %v678, %v849
        %v852 = vpack.c.bf16 %v851, %v851
        %v853 = vld [vmem:[%s2] sm:$0xf]
        %v854 = vld [vmem:[%s2 + $0x4] sm:$0xf]
        %v855 = vld [vmem:[%s2 + $0x8] sm:$0xf]
        %v856 = vld [vmem:[%s2 + $0xc] sm:$0xf]
        %v857 = vld [vmem:[%s2 + $0x10] sm:$0xf]
        %v858 = vld [vmem:[%s2 + $0x14] sm:$0xf]
        %v859 = vld [vmem:[%s2 + $0x18] sm:$0xf]
        %v860 = vld [vmem:[%s2 + $0x1c] sm:$0xf]
        %v861 = vld [vmem:[%s2 + $0x20] sm:$0xf]
        %v862 = vld [vmem:[%s2 + $0x24] sm:$0xf]
        %v863 = vld [vmem:[%s2 + $0x28] sm:$0xf]
        %v864 = vld [vmem:[%s2 + $0x2c] sm:$0xf]
        %v865 = vld [vmem:[%s2 + $0x30] sm:$0xf]
        %v866 = vld [vmem:[%s2 + $0x34] sm:$0xf]
        %v867 = vld [vmem:[%s2 + $0x38] sm:$0xf]
        %v868 = vld [vmem:[%s2 + $0x3c] sm:$0xf]
        %v885 = vunpack.c.l.b16 %v853
        %v886 = vunpack.c.l.b16 %v854
        %v887 = vunpack.c.l.b16 %v855
        %v888 = vunpack.c.l.b16 %v856
        %v889 = vunpack.c.l.b16 %v857
        %v890 = vunpack.c.l.b16 %v858
        %v891 = vunpack.c.l.b16 %v859
        %v892 = vunpack.c.l.b16 %v860
        %v893 = vunpack.c.l.b16 %v861
        %v894 = vunpack.c.l.b16 %v862
        %v895 = vunpack.c.l.b16 %v863
        %v896 = vunpack.c.l.b16 %v864
        %v897 = vunpack.c.l.b16 %v865
        %v898 = vunpack.c.l.b16 %v866
        %v899 = vunpack.c.l.b16 %v867
        %v900 = vunpack.c.l.b16 %v868
        %v901 = vpack.c.b16 %v886, %v885
        %v902 = vpack.c.b16 %v888, %v887
        %v903 = vpack.c.b16 %v890, %v889
        %v904 = vpack.c.b16 %v892, %v891
        %v905 = vpack.c.b16 %v894, %v893
        %v906 = vpack.c.b16 %v896, %v895
        %v907 = vpack.c.b16 %v898, %v897
        %v908 = vpack.c.b16 %v900, %v899
        %917 = vmatprep.subr.bf16.mxu0 0
        %918 = vmatpush1.bf16.msra.mxu0 %v901
        %919 = vmatprep.subr.bf16.mxu0 0
        %920 = vmatpush1.bf16.msra.mxu0 %v902
        %921 = vmatprep.subr.bf16.mxu0 0
        %922 = vmatpush1.bf16.msra.mxu0 %v903
        %923 = vmatprep.subr.bf16.mxu0 0
        %924 = vmatpush1.bf16.msra.mxu0 %v904
        %925 = vmatprep.subr.bf16.mxu0 0
        %926 = vmatpush1.bf16.msra.mxu0 %v905
        %927 = vmatprep.subr.bf16.mxu0 0
        %928 = vmatpush1.bf16.msra.mxu0 %v906
        %929 = vmatprep.subr.bf16.mxu0 0
        %930 = vmatpush1.bf16.msra.mxu0 %v907
        %931 = vmatprep.subr.bf16.mxu0 0
        %932 = vmatpush1.bf16.msra.mxu0 %v908
        %933 = vmatprep.subr.bf16.mxu0 0
        %934 = vmatpush1.bf16.msra.mxu0 0
        %935 = vmatprep.subr.bf16.mxu0 0
        %936 = vmatpush1.bf16.msra.mxu0 0
        %937 = vmatprep.subr.bf16.mxu0 0
        %938 = vmatpush1.bf16.msra.mxu0 0
        %939 = vmatprep.subr.bf16.mxu0 0
        %940 = vmatpush1.bf16.msra.mxu0 0
        %941 = vmatprep.subr.bf16.mxu0 0
        %942 = vmatpush1.bf16.msra.mxu0 0
        %943 = vmatprep.subr.bf16.mxu0 0
        %944 = vmatpush1.bf16.msra.mxu0 0
        %945 = vmatprep.subr.bf16.mxu0 0
        %946 = vmatpush1.bf16.msra.mxu0 0
        %947 = vmatprep.subr.bf16.mxu0 0
        %948 = vmatpush1.bf16.msra.mxu0 0
        %949 = vmatprep.mubr.bf16.mxu0 0
        %950 = vmatmul.mubr.bf16.gmra.mrb[0].mxu0 %v852
        %v951 = vpop.f32.mrb[0].mxu0
        %v952 = vadd.f32 %v275, %v951
        %v953 = vpop.f32.mrb[0].mxu0
        %v954 = vpop.f32.mrb[0].mxu0
        %v955 = vpop.f32.mrb[0].mxu0
        %956 = vdwg.mxu0
        %v957 = vld [vmem:[%s5] sm:$0x1]
        %v958 = vld [vmem:[%s5 + $0x1] sm:$0x1]
        %959 = vadd.xlane.f32.xlu0 %v952
        %v960 = vpop.xlane.xlu0 %959
        %v961 = vrcp.pop 128.0
        %v962 = vmul.f32 %v960, %v961
        %v963 = vmul.f32 %v952, %v952
        %964 = vadd.xlane.f32.xlu0 %v963
        %v965 = vpop.xlane.xlu0 %964
        %v966 = vmul.f32 %v965, %v961
        %v967 = vmul.f32 %v962, %v962
        %v968 = vsub.f32 %v966, %v967
        %v969 = vsub.f32 %v952, %v962
        %v970 = vadd.f32 %v968, 1e-06
        %v971 = vrsqrt.pop %v970
        %v972 = vmul.f32 %v969, %v971
        %v973 = vlaneseq
        %v974 = vshrl.u32 %v973, 7
        %v975 = vsub.s32 0, %v974
        %v976 = vrot.slane %v957, %v975
        %v977 = vmul.f32 %v972, %v976
        %v978 = vlaneseq
        %v979 = vshrl.u32 %v978, 7
        %v980 = vsub.s32 0, %v979
        %v981 = vrot.slane %v958, %v980
        %v982 = vadd.f32 %v977, %v981
        %v983 = vpack.c.bf16 %v982, %v982
        %v984 = vld [vmem:[%s3] sm:$0xff]
        %v985 = vld [vmem:[%s3 + $0x8] sm:$0xff]
        %v986 = vld [vmem:[%s3 + $0x10] sm:$0xff]
        %v987 = vld [vmem:[%s3 + $0x18] sm:$0xff]
        %v988 = vld [vmem:[%s3 + $0x20] sm:$0xff]
        %v989 = vld [vmem:[%s3 + $0x28] sm:$0xff]
        %v990 = vld [vmem:[%s3 + $0x30] sm:$0xff]
        %v991 = vld [vmem:[%s3 + $0x38] sm:$0xff]
        %v992 = vld [vmem:[%s3 + $0x40] sm:$0xff]
        %v993 = vld [vmem:[%s3 + $0x48] sm:$0xff]
        %v994 = vld [vmem:[%s3 + $0x50] sm:$0xff]
        %v995 = vld [vmem:[%s3 + $0x58] sm:$0xff]
        %v996 = vld [vmem:[%s3 + $0x60] sm:$0xff]
        %v997 = vld [vmem:[%s3 + $0x68] sm:$0xff]
        %v998 = vld [vmem:[%s3 + $0x70] sm:$0xff]
        %v999 = vld [vmem:[%s3 + $0x78] sm:$0xff]
        %v1000 = vld [vmem:[%s3 + $0x80] sm:$0xff]
        %v1001 = vld [vmem:[%s3 + $0x88] sm:$0xff]
        %v1002 = vld [vmem:[%s3 + $0x90] sm:$0xff]
        %v1003 = vld [vmem:[%s3 + $0x98] sm:$0xff]
        %v1004 = vld [vmem:[%s3 + $0xa0] sm:$0xff]
        %v1005 = vld [vmem:[%s3 + $0xa8] sm:$0xff]
        %v1006 = vld [vmem:[%s3 + $0xb0] sm:$0xff]
        %v1007 = vld [vmem:[%s3 + $0xb8] sm:$0xff]
        %v1008 = vld [vmem:[%s3 + $0xc0] sm:$0xff]
        %v1009 = vld [vmem:[%s3 + $0xc8] sm:$0xff]
        %v1010 = vld [vmem:[%s3 + $0xd0] sm:$0xff]
        %v1011 = vld [vmem:[%s3 + $0xd8] sm:$0xff]
        %v1012 = vld [vmem:[%s3 + $0xe0] sm:$0xff]
        %v1013 = vld [vmem:[%s3 + $0xe8] sm:$0xff]
        %v1014 = vld [vmem:[%s3 + $0xf0] sm:$0xff]
        %v1015 = vld [vmem:[%s3 + $0xf8] sm:$0xff]
        %v1016 = vld [vmem:[%s6] ss:$4 sm:$0xf]
        %v1018 = vlaneseq
        %v1019 = vshrl.u32 %v1018, 7
        %v1020 = vsub.s32 0, %v1019
        %v1021 = vrot.slane %v1016, %v1020
        %v1022 = vlaneseq
        %v1023 = vshrl.u32 %v1022, 7
        %v1024 = vsub.s32 1, %v1023
        %v1025 = vrot.slane %v1016, %v1024
        %v1026 = vlaneseq
        %v1027 = vshrl.u32 %v1026, 7
        %v1028 = vsub.s32 2, %v1027
        %v1029 = vrot.slane %v1016, %v1028
        %v1030 = vlaneseq
        %v1031 = vshrl.u32 %v1030, 7
        %v1032 = vsub.s32 3, %v1031
        %v1033 = vrot.slane %v1016, %v1032
        %v1070 = vunpack.c.l.b16 %v984
        %v1071 = vunpack.c.h.b16 %v984
        %v1072 = vunpack.c.l.b16 %v985
        %v1073 = vunpack.c.h.b16 %v985
        %v1074 = vunpack.c.l.b16 %v986
        %v1075 = vunpack.c.h.b16 %v986
        %v1076 = vunpack.c.l.b16 %v987
        %v1077 = vunpack.c.h.b16 %v987
        %v1078 = vunpack.c.l.b16 %v988
        %v1079 = vunpack.c.h.b16 %v988
        %v1080 = vunpack.c.l.b16 %v989
        %v1081 = vunpack.c.h.b16 %v989
        %v1082 = vunpack.c.l.b16 %v990
        %v1083 = vunpack.c.h.b16 %v990
        %v1084 = vunpack.c.l.b16 %v991
        %v1085 = vunpack.c.h.b16 %v991
        %v1086 = vunpack.c.l.b16 %v992
        %v1087 = vunpack.c.h.b16 %v992
        %v1088 = vunpack.c.l.b16 %v993
        %v1089 = vunpack.c.h.b16 %v993
        %v1090 = vunpack.c.l.b16 %v994
        %v1091 = vunpack.c.h.b16 %v994
        %v1092 = vunpack.c.l.b16 %v995
        %v1093 = vunpack.c.h.b16 %v995
        %v1094 = vunpack.c.l.b16 %v996
        %v1095 = vunpack.c.h.b16 %v996
        %v1096 = vunpack.c.l.b16 %v997
        %v1097 = vunpack.c.h.b16 %v997
        %v1098 = vunpack.c.l.b16 %v998
        %v1099 = vunpack.c.h.b16 %v998
        %v1100 = vunpack.c.l.b16 %v999
        %v1101 = vunpack.c.h.b16 %v999
        %v1102 = vunpack.c.l.b16 %v1000
        %v1103 = vunpack.c.h.b16 %v1000
        %v1104 = vunpack.c.l.b16 %v1001
        %v1105 = vunpack.c.h.b16 %v1001
        %v1106 = vunpack.c.l.b16 %v1002
        %v1107 = vunpack.c.h.b16 %v1002
        %v1108 = vunpack.c.l.b16 %v1003
        %v1109 = vunpack.c.h.b16 %v1003
        %v1110 = vunpack.c.l.b16 %v1004
        %v1111 = vunpack.c.h.b16 %v1004
        %v1112 = vunpack.c.l.b16 %v1005
        %v1113 = vunpack.c.h.b16 %v1005
        %v1114 = vunpack.c.l.b16 %v1006
        %v1115 = vunpack.c.h.b16 %v1006
        %v1116 = vunpack.c.l.b16 %v1007
        %v1117 = vunpack.c.h.b16 %v1007
        %v1118 = vunpack.c.l.b16 %v1008
        %v1119 = vunpack.c.h.b16 %v1008
        %v1120 = vunpack.c.l.b16 %v1009
        %v1121 = vunpack.c.h.b16 %v1009
        %v1122 = vunpack.c.l.b16 %v1010
        %v1123 = vunpack.c.h.b16 %v1010
        %v1124 = vunpack.c.l.b16 %v1011
        %v1125 = vunpack.c.h.b16 %v1011
        %v1126 = vunpack.c.l.b16 %v1012
        %v1127 = vunpack.c.h.b16 %v1012
        %v1128 = vunpack.c.l.b16 %v1013
        %v1129 = vunpack.c.h.b16 %v1013
        %v1130 = vunpack.c.l.b16 %v1014
        %v1131 = vunpack.c.h.b16 %v1014
        %v1132 = vunpack.c.l.b16 %v1015
        %v1133 = vunpack.c.h.b16 %v1015
        %v1134 = vpack.c.b16 %v1074, %v1070
        %v1135 = vpack.c.b16 %v1075, %v1071
        %v1136 = vpack.c.b16 %v1076, %v1072
        %v1137 = vpack.c.b16 %v1077, %v1073
        %v1138 = vpack.c.b16 %v1082, %v1078
        %v1139 = vpack.c.b16 %v1083, %v1079
        %v1140 = vpack.c.b16 %v1084, %v1080
        %v1141 = vpack.c.b16 %v1085, %v1081
        %v1142 = vpack.c.b16 %v1090, %v1086
        %v1143 = vpack.c.b16 %v1091, %v1087
        %v1144 = vpack.c.b16 %v1092, %v1088
        %v1145 = vpack.c.b16 %v1093, %v1089
        %v1146 = vpack.c.b16 %v1098, %v1094
        %v1147 = vpack.c.b16 %v1099, %v1095
        %v1148 = vpack.c.b16 %v1100, %v1096
        %v1149 = vpack.c.b16 %v1101, %v1097
        %v1150 = vpack.c.b16 %v1106, %v1102
        %v1151 = vpack.c.b16 %v1107, %v1103
        %v1152 = vpack.c.b16 %v1108, %v1104
        %v1153 = vpack.c.b16 %v1109, %v1105
        %v1154 = vpack.c.b16 %v1114, %v1110
        %v1155 = vpack.c.b16 %v1115, %v1111
        %v1156 = vpack.c.b16 %v1116, %v1112
        %v1157 = vpack.c.b16 %v1117, %v1113
        %v1158 = vpack.c.b16 %v1122, %v1118
        %v1159 = vpack.c.b16 %v1123, %v1119
        %v1160 = vpack.c.b16 %v1124, %v1120
        %v1161 = vpack.c.b16 %v1125, %v1121
        %v1162 = vpack.c.b16 %v1130, %v1126
        %v1163 = vpack.c.b16 %v1131, %v1127
        %v1164 = vpack.c.b16 %v1132, %v1128
        %v1165 = vpack.c.b16 %v1133, %v1129
        %1198 = vmatprep.subr.bf16.mxu0 %v1135
        %1199 = vmatpush1.bf16.msra.mxu0 %v1134
        %1200 = vmatprep.subr.bf16.mxu0 %v1139
        %1201 = vmatpush1.bf16.msra.mxu0 %v1138
        %1202 = vmatprep.subr.bf16.mxu0 %v1143
        %1203 = vmatpush1.bf16.msra.mxu0 %v1142
        %1204 = vmatprep.subr.bf16.mxu0 %v1147
        %1205 = vmatpush1.bf16.msra.mxu0 %v1146
        %1206 = vmatprep.subr.bf16.mxu0 %v1151
        %1207 = vmatpush1.bf16.msra.mxu0 %v1150
        %1208 = vmatprep.subr.bf16.mxu0 %v1155
        %1209 = vmatpush1.bf16.msra.mxu0 %v1154
        %1210 = vmatprep.subr.bf16.mxu0 %v1159
        %1211 = vmatpush1.bf16.msra.mxu0 %v1158
        %1212 = vmatprep.subr.bf16.mxu0 %v1163
        %1213 = vmatpush1.bf16.msra.mxu0 %v1162
        %1214 = vmatprep.subr.bf16.mxu0 0
        %1215 = vmatpush1.bf16.msra.mxu0 0
        %1216 = vmatprep.subr.bf16.mxu0 0
        %1217 = vmatpush1.bf16.msra.mxu0 0
        %1218 = vmatprep.subr.bf16.mxu0 0
        %1219 = vmatpush1.bf16.msra.mxu0 0
        %1220 = vmatprep.subr.bf16.mxu0 0
        %1221 = vmatpush1.bf16.msra.mxu0 0
        %1222 = vmatprep.subr.bf16.mxu0 0
        %1223 = vmatpush1.bf16.msra.mxu0 0
        %1224 = vmatprep.subr.bf16.mxu0 0
        %1225 = vmatpush1.bf16.msra.mxu0 0
        %1226 = vmatprep.subr.bf16.mxu0 0
        %1227 = vmatpush1.bf16.msra.mxu0 0
        %1228 = vmatprep.subr.bf16.mxu0 0
        %1229 = vmatpush1.bf16.msra.mxu0 0
        %1230 = vmatprep.mubr.bf16.mxu0 0
        %1231 = vmatmul.mubr.bf16.gmra.mrb[0].mxu0 %v983
        %v1232 = vpop.f32.mrb[0].mxu0
        %v1233 = vadd.f32 %v1021, %v1232
        %v1234 = vpop.f32.mrb[0].mxu0
        %v1235 = vadd.f32 %v1025, %v1234
        %v1236 = vpop.f32.mrb[0].mxu0
        %v1237 = vpop.f32.mrb[0].mxu0
        %1238 = vdwg.mxu0
        %1239 = vmatprep.subr.bf16.mxu0 %v1137
        %1240 = vmatpush1.bf16.msra.mxu0 %v1136
        %1241 = vmatprep.subr.bf16.mxu0 %v1141
        %1242 = vmatpush1.bf16.msra.mxu0 %v1140
        %1243 = vmatprep.subr.bf16.mxu0 %v1145
        %1244 = vmatpush1.bf16.msra.mxu0 %v1144
        %1245 = vmatprep.subr.bf16.mxu0 %v1149
        %1246 = vmatpush1.bf16.msra.mxu0 %v1148
        %1247 = vmatprep.subr.bf16.mxu0 %v1153
        %1248 = vmatpush1.bf16.msra.mxu0 %v1152
        %1249 = vmatprep.subr.bf16.mxu0 %v1157
        %1250 = vmatpush1.bf16.msra.mxu0 %v1156
        %1251 = vmatprep.subr.bf16.mxu0 %v1161
        %1252 = vmatpush1.bf16.msra.mxu0 %v1160
        %1253 = vmatprep.subr.bf16.mxu0 %v1165
        %1254 = vmatpush1.bf16.msra.mxu0 %v1164
        %1255 = vmatprep.subr.bf16.mxu0 0
        %1256 = vmatpush1.bf16.msra.mxu0 0
        %1257 = vmatprep.subr.bf16.mxu0 0
        %1258 = vmatpush1.bf16.msra.mxu0 0
        %1259 = vmatprep.subr.bf16.mxu0 0
        %1260 = vmatpush1.bf16.msra.mxu0 0
        %1261 = vmatprep.subr.bf16.mxu0 0
        %1262 = vmatpush1.bf16.msra.mxu0 0
        %1263 = vmatprep.subr.bf16.mxu0 0
        %1264 = vmatpush1.bf16.msra.mxu0 0
        %1265 = vmatprep.subr.bf16.mxu0 0
        %1266 = vmatpush1.bf16.msra.mxu0 0
        %1267 = vmatprep.subr.bf16.mxu0 0
        %1268 = vmatpush1.bf16.msra.mxu0 0
        %1269 = vmatprep.subr.bf16.mxu0 0
        %1270 = vmatpush1.bf16.msra.mxu0 0
        %1271 = vmatprep.mubr.bf16.mxu0 0
        %1272 = vmatmul.mubr.bf16.gmra.mrb[0].mxu0 %v983
        %v1273 = vpop.f32.mrb[0].mxu0
        %v1274 = vadd.f32 %v1029, %v1273
        %v1275 = vpop.f32.mrb[0].mxu0
        %v1276 = vadd.f32 %v1033, %v1275
        %v1277 = vpop.f32.mrb[0].mxu0
        %v1278 = vpop.f32.mrb[0].mxu0
        %1279 = vdwg.mxu0
        %v1280 = vmax.f32 %v1233, 0.0
        %v1281 = vmax.f32 %v1235, 0.0
        %v1282 = vmax.f32 %v1274, 0.0
        %v1283 = vmax.f32 %v1276, 0.0
        %v1284 = vpack.c.bf16 %v1280, %v1280
        %v1285 = vpack.c.bf16 %v1281, %v1281
        %v1286 = vpack.c.bf16 %v1282, %v1282
        %v1287 = vpack.c.bf16 %v1283, %v1283
        %v1288 = vld [vmem:[%s4] sm:$0xf]
        %v1289 = vld [vmem:[%s4 + $0x4] sm:$0xf]
        %v1290 = vld [vmem:[%s4 + $0x8] sm:$0xf]
        %v1291 = vld [vmem:[%s4 + $0xc] sm:$0xf]
        %v1292 = vld [vmem:[%s4 + $0x10] sm:$0xf]
        %v1293 = vld [vmem:[%s4 + $0x14] sm:$0xf]
        %v1294 = vld [vmem:[%s4 + $0x18] sm:$0xf]
        %v1295 = vld [vmem:[%s4 + $0x1c] sm:$0xf]
        %v1296 = vld [vmem:[%s4 + $0x20] sm:$0xf]
        %v1297 = vld [vmem:[%s4 + $0x24] sm:$0xf]
        %v1298 = vld [vmem:[%s4 + $0x28] sm:$0xf]
        %v1299 = vld [vmem:[%s4 + $0x2c] sm:$0xf]
        %v1300 = vld [vmem:[%s4 + $0x30] sm:$0xf]
        %v1301 = vld [vmem:[%s4 + $0x34] sm:$0xf]
        %v1302 = vld [vmem:[%s4 + $0x38] sm:$0xf]
        %v1303 = vld [vmem:[%s4 + $0x3c] sm:$0xf]
        %v1304 = vld [vmem:[%s4 + $0x40] sm:$0xf]
        %v1305 = vld [vmem:[%s4 + $0x44] sm:$0xf]
        %v1306 = vld [vmem:[%s4 + $0x48] sm:$0xf]
        %v1307 = vld [vmem:[%s4 + $0x4c] sm:$0xf]
        %v1308 = vld [vmem:[%s4 + $0x50] sm:$0xf]
        %v1309 = vld [vmem:[%s4 + $0x54] sm:$0xf]
        %v1310 = vld [vmem:[%s4 + $0x58] sm:$0xf]
        %v1311 = vld [vmem:[%s4 + $0x5c] sm:$0xf]
        %v1312 = vld [vmem:[%s4 + $0x60] sm:$0xf]
        %v1313 = vld [vmem:[%s4 + $0x64] sm:$0xf]
        %v1314 = vld [vmem:[%s4 + $0x68] sm:$0xf]
        %v1315 = vld [vmem:[%s4 + $0x6c] sm:$0xf]
        %v1316 = vld [vmem:[%s4 + $0x70] sm:$0xf]
        %v1317 = vld [vmem:[%s4 + $0x74] sm:$0xf]
        %v1318 = vld [vmem:[%s4 + $0x78] sm:$0xf]
        %v1319 = vld [vmem:[%s4 + $0x7c] sm:$0xf]
        %v1320 = vld [vmem:[%s4 + $0x80] sm:$0xf]
        %v1321 = vld [vmem:[%s4 + $0x84] sm:$0xf]
        %v1322 = vld [vmem:[%s4 + $0x88] sm:$0xf]
        %v1323 = vld [vmem:[%s4 + $0x8c] sm:$0xf]
        %v1324 = vld [vmem:[%s4 + $0x90] sm:$0xf]
        %v1325 = vld [vmem:[%s4 + $0x94] sm:$0xf]
        %v1326 = vld [vmem:[%s4 + $0x98] sm:$0xf]
        %v1327 = vld [vmem:[%s4 + $0x9c] sm:$0xf]
        %v1328 = vld [vmem:[%s4 + $0xa0] sm:$0xf]
        %v1329 = vld [vmem:[%s4 + $0xa4] sm:$0xf]
        %v1330 = vld [vmem:[%s4 + $0xa8] sm:$0xf]
        %v1331 = vld [vmem:[%s4 + $0xac] sm:$0xf]
        %v1332 = vld [vmem:[%s4 + $0xb0] sm:$0xf]
        %v1333 = vld [vmem:[%s4 + $0xb4] sm:$0xf]
        %v1334 = vld [vmem:[%s4 + $0xb8] sm:$0xf]
        %v1335 = vld [vmem:[%s4 + $0xbc] sm:$0xf]
        %v1336 = vld [vmem:[%s4 + $0xc0] sm:$0xf]
        %v1337 = vld [vmem:[%s4 + $0xc4] sm:$0xf]
        %v1338 = vld [vmem:[%s4 + $0xc8] sm:$0xf]
        %v1339 = vld [vmem:[%s4 + $0xcc] sm:$0xf]
        %v1340 = vld [vmem:[%s4 + $0xd0] sm:$0xf]
        %v1341 = vld [vmem:[%s4 + $0xd4] sm:$0xf]
        %v1342 = vld [vmem:[%s4 + $0xd8] sm:$0xf]
        %v1343 = vld [vmem:[%s4 + $0xdc] sm:$0xf]
        %v1344 = vld [vmem:[%s4 + $0xe0] sm:$0xf]
        %v1345 = vld [vmem:[%s4 + $0xe4] sm:$0xf]
        %v1346 = vld [vmem:[%s4 + $0xe8] sm:$0xf]
        %v1347 = vld [vmem:[%s4 + $0xec] sm:$0xf]
        %v1348 = vld [vmem:[%s4 + $0xf0] sm:$0xf]
        %v1349 = vld [vmem:[%s4 + $0xf4] sm:$0xf]
        %v1350 = vld [vmem:[%s4 + $0xf8] sm:$0xf]
        %v1351 = vld [vmem:[%s4 + $0xfc] sm:$0xf]
        %v1352 = vld [vmem:[%s5 + $0x2] sm:$0x1]
        %v1353 = vlaneseq
        %v1354 = vshrl.u32 %v1353, 7
        %v1355 = vsub.s32 0, %v1354
        %v1356 = vrot.slane %v1352, %v1355
        %v1421 = vunpack.c.l.b16 %v1288
        %v1422 = vunpack.c.l.b16 %v1289
        %v1423 = vunpack.c.l.b16 %v1290
        %v1424 = vunpack.c.l.b16 %v1291
        %v1425 = vunpack.c.l.b16 %v1292
        %v1426 = vunpack.c.l.b16 %v1293
        %v1427 = vunpack.c.l.b16 %v1294
        %v1428 = vunpack.c.l.b16 %v1295
        %v1429 = vunpack.c.l.b16 %v1296
        %v1430 = vunpack.c.l.b16 %v1297
        %v1431 = vunpack.c.l.b16 %v1298
        %v1432 = vunpack.c.l.b16 %v1299
        %v1433 = vunpack.c.l.b16 %v1300
        %v1434 = vunpack.c.l.b16 %v1301
        %v1435 = vunpack.c.l.b16 %v1302
        %v1436 = vunpack.c.l.b16 %v1303
        %v1437 = vunpack.c.l.b16 %v1304
        %v1438 = vunpack.c.l.b16 %v1305
        %v1439 = vunpack.c.l.b16 %v1306
        %v1440 = vunpack.c.l.b16 %v1307
        %v1441 = vunpack.c.l.b16 %v1308
        %v1442 = vunpack.c.l.b16 %v1309
        %v1443 = vunpack.c.l.b16 %v1310
        %v1444 = vunpack.c.l.b16 %v1311
        %v1445 = vunpack.c.l.b16 %v1312
        %v1446 = vunpack.c.l.b16 %v1313
        %v1447 = vunpack.c.l.b16 %v1314
        %v1448 = vunpack.c.l.b16 %v1315
        %v1449 = vunpack.c.l.b16 %v1316
        %v1450 = vunpack.c.l.b16 %v1317
        %v1451 = vunpack.c.l.b16 %v1318
        %v1452 = vunpack.c.l.b16 %v1319
        %v1453 = vunpack.c.l.b16 %v1320
        %v1454 = vunpack.c.l.b16 %v1321
        %v1455 = vunpack.c.l.b16 %v1322
        %v1456 = vunpack.c.l.b16 %v1323
        %v1457 = vunpack.c.l.b16 %v1324
        %v1458 = vunpack.c.l.b16 %v1325
        %v1459 = vunpack.c.l.b16 %v1326
        %v1460 = vunpack.c.l.b16 %v1327
        %v1461 = vunpack.c.l.b16 %v1328
        %v1462 = vunpack.c.l.b16 %v1329
        %v1463 = vunpack.c.l.b16 %v1330
        %v1464 = vunpack.c.l.b16 %v1331
        %v1465 = vunpack.c.l.b16 %v1332
        %v1466 = vunpack.c.l.b16 %v1333
        %v1467 = vunpack.c.l.b16 %v1334
        %v1468 = vunpack.c.l.b16 %v1335
        %v1469 = vunpack.c.l.b16 %v1336
        %v1470 = vunpack.c.l.b16 %v1337
        %v1471 = vunpack.c.l.b16 %v1338
        %v1472 = vunpack.c.l.b16 %v1339
        %v1473 = vunpack.c.l.b16 %v1340
        %v1474 = vunpack.c.l.b16 %v1341
        %v1475 = vunpack.c.l.b16 %v1342
        %v1476 = vunpack.c.l.b16 %v1343
        %v1477 = vunpack.c.l.b16 %v1344
        %v1478 = vunpack.c.l.b16 %v1345
        %v1479 = vunpack.c.l.b16 %v1346
        %v1480 = vunpack.c.l.b16 %v1347
        %v1481 = vunpack.c.l.b16 %v1348
        %v1482 = vunpack.c.l.b16 %v1349
        %v1483 = vunpack.c.l.b16 %v1350
        %v1484 = vunpack.c.l.b16 %v1351
        %v1485 = vpack.c.b16 %v1422, %v1421
        %v1486 = vpack.c.b16 %v1424, %v1423
        %v1487 = vpack.c.b16 %v1426, %v1425
        %v1488 = vpack.c.b16 %v1428, %v1427
        %v1489 = vpack.c.b16 %v1430, %v1429
        %v1490 = vpack.c.b16 %v1432, %v1431
        %v1491 = vpack.c.b16 %v1434, %v1433
        %v1492 = vpack.c.b16 %v1436, %v1435
        %v1493 = vpack.c.b16 %v1438, %v1437
        %v1494 = vpack.c.b16 %v1440, %v1439
        %v1495 = vpack.c.b16 %v1442, %v1441
        %v1496 = vpack.c.b16 %v1444, %v1443
        %v1497 = vpack.c.b16 %v1446, %v1445
        %v1498 = vpack.c.b16 %v1448, %v1447
        %v1499 = vpack.c.b16 %v1450, %v1449
        %v1500 = vpack.c.b16 %v1452, %v1451
        %v1501 = vpack.c.b16 %v1454, %v1453
        %v1502 = vpack.c.b16 %v1456, %v1455
        %v1503 = vpack.c.b16 %v1458, %v1457
        %v1504 = vpack.c.b16 %v1460, %v1459
        %v1505 = vpack.c.b16 %v1462, %v1461
        %v1506 = vpack.c.b16 %v1464, %v1463
        %v1507 = vpack.c.b16 %v1466, %v1465
        %v1508 = vpack.c.b16 %v1468, %v1467
        %v1509 = vpack.c.b16 %v1470, %v1469
        %v1510 = vpack.c.b16 %v1472, %v1471
        %v1511 = vpack.c.b16 %v1474, %v1473
        %v1512 = vpack.c.b16 %v1476, %v1475
        %v1513 = vpack.c.b16 %v1478, %v1477
        %v1514 = vpack.c.b16 %v1480, %v1479
        %v1515 = vpack.c.b16 %v1482, %v1481
        %v1516 = vpack.c.b16 %v1484, %v1483
        %1549 = vmatprep.subr.bf16.mxu0 0
        %1550 = vmatpush1.bf16.msra.mxu0 %v1485
        %1551 = vmatprep.subr.bf16.mxu0 0
        %1552 = vmatpush1.bf16.msra.mxu0 %v1486
        %1553 = vmatprep.subr.bf16.mxu0 0
        %1554 = vmatpush1.bf16.msra.mxu0 %v1487
        %1555 = vmatprep.subr.bf16.mxu0 0
        %1556 = vmatpush1.bf16.msra.mxu0 %v1488
        %1557 = vmatprep.subr.bf16.mxu0 0
        %1558 = vmatpush1.bf16.msra.mxu0 %v1489
        %1559 = vmatprep.subr.bf16.mxu0 0
        %1560 = vmatpush1.bf16.msra.mxu0 %v1490
        %1561 = vmatprep.subr.bf16.mxu0 0
        %1562 = vmatpush1.bf16.msra.mxu0 %v1491
        %1563 = vmatprep.subr.bf16.mxu0 0
        %1564 = vmatpush1.bf16.msra.mxu0 %v1492
        %1565 = vmatprep.subr.bf16.mxu0 0
        %1566 = vmatpush1.bf16.msra.mxu0 %v1493
        %1567 = vmatprep.subr.bf16.mxu0 0
        %1568 = vmatpush1.bf16.msra.mxu0 %v1494
        %1569 = vmatprep.subr.bf16.mxu0 0
        %1570 = vmatpush1.bf16.msra.mxu0 %v1495
        %1571 = vmatprep.subr.bf16.mxu0 0
        %1572 = vmatpush1.bf16.msra.mxu0 %v1496
        %1573 = vmatprep.subr.bf16.mxu0 0
        %1574 = vmatpush1.bf16.msra.mxu0 %v1497
        %1575 = vmatprep.subr.bf16.mxu0 0
        %1576 = vmatpush1.bf16.msra.mxu0 %v1498
        %1577 = vmatprep.subr.bf16.mxu0 0
        %1578 = vmatpush1.bf16.msra.mxu0 %v1499
        %1579 = vmatprep.subr.bf16.mxu0 0
        %1580 = vmatpush1.bf16.msra.mxu0 %v1500
        %1581 = vmatprep.mubr.bf16.mxu0 %v1285
        %1582 = vmatmul.mubr.bf16.gmra.mrb[0].mxu0 %v1284
        %v1583 = vpop.f32.mrb[0].mxu0
        %v1584 = vadd.f32 %v1356, %v1583
        %v1585 = vpop.f32.mrb[0].mxu0
        %v1586 = vpop.f32.mrb[0].mxu0
        %v1587 = vpop.f32.mrb[0].mxu0
        %1588 = vdwg.mxu0
        %1589 = vmatprep.subr.bf16.mxu0 0
        %1590 = vmatpush1.bf16.msra.mxu0 %v1501
        %1591 = vmatprep.subr.bf16.mxu0 0
        %1592 = vmatpush1.bf16.msra.mxu0 %v1502
        %1593 = vmatprep.subr.bf16.mxu0 0
        %1594 = vmatpush1.bf16.msra.mxu0 %v1503
        %1595 = vmatprep.subr.bf16.mxu0 0
        %1596 = vmatpush1.bf16.msra.mxu0 %v1504
        %1597 = vmatprep.subr.bf16.mxu0 0
        %1598 = vmatpush1.bf16.msra.mxu0 %v1505
        %1599 = vmatprep.subr.bf16.mxu0 0
        %1600 = vmatpush1.bf16.msra.mxu0 %v1506
        %1601 = vmatprep.subr.bf16.mxu0 0
        %1602 = vmatpush1.bf16.msra.mxu0 %v1507
        %1603 = vmatprep.subr.bf16.mxu0 0
        %1604 = vmatpush1.bf16.msra.mxu0 %v1508
        %1605 = vmatprep.subr.bf16.mxu0 0
        %1606 = vmatpush1.bf16.msra.mxu0 %v1509
        %1607 = vmatprep.subr.bf16.mxu0 0
        %1608 = vmatpush1.bf16.msra.mxu0 %v1510
        %1609 = vmatprep.subr.bf16.mxu0 0
        %1610 = vmatpush1.bf16.msra.mxu0 %v1511
        %1611 = vmatprep.subr.bf16.mxu0 0
        %1612 = vmatpush1.bf16.msra.mxu0 %v1512
        %1613 = vmatprep.subr.bf16.mxu0 0
        %1614 = vmatpush1.bf16.msra.mxu0 %v1513
        %1615 = vmatprep.subr.bf16.mxu0 0
        %1616 = vmatpush1.bf16.msra.mxu0 %v1514
        %1617 = vmatprep.subr.bf16.mxu0 0
        %1618 = vmatpush1.bf16.msra.mxu0 %v1515
        %1619 = vmatprep.subr.bf16.mxu0 0
        %1620 = vmatpush1.bf16.msra.mxu0 %v1516
        %1621 = vmatprep.mubr.bf16.mxu0 %v1287
        %1622 = vmatmul.mubr.bf16.gmra.mrb[0].mxu0 %v1286
        %v1623 = vpop.f32.mrb[0].mxu0
        %v1624 = vadd.f32 %v1584, %v1623
        %v1625 = vpop.f32.mrb[0].mxu0
        %v1626 = vpop.f32.mrb[0].mxu0
        %v1627 = vpop.f32.mrb[0].mxu0
        %1628 = vdwg.mxu0
        %v1629 = vadd.f32 %v1624, %v982
        %v1630 = vld [vmem:[%s5 + $0x3] sm:$0x1]
        %v1631 = vld [vmem:[%s5 + $0x4] sm:$0x1]
        %1632 = vadd.xlane.f32.xlu0 %v1629
        %v1633 = vpop.xlane.xlu0 %1632
        %v1634 = vmul.f32 %v1633, %v961
        %v1635 = vmul.f32 %v1629, %v1629
        %1636 = vadd.xlane.f32.xlu0 %v1635
        %v1637 = vpop.xlane.xlu0 %1636
        %v1638 = vmul.f32 %v1637, %v961
        %v1639 = vmul.f32 %v1634, %v1634
        %v1640 = vsub.f32 %v1638, %v1639
        %v1641 = vsub.f32 %v1629, %v1634
        %v1642 = vadd.f32 %v1640, 1e-06
        %v1643 = vrsqrt.pop %v1642
        %v1644 = vmul.f32 %v1641, %v1643
        %v1645 = vlaneseq
        %v1646 = vshrl.u32 %v1645, 7
        %v1647 = vsub.s32 0, %v1646
        %v1648 = vrot.slane %v1630, %v1647
        %v1649 = vmul.f32 %v1644, %v1648
        %v1650 = vlaneseq
        %v1651 = vshrl.u32 %v1650, 7
        %v1652 = vsub.s32 0, %v1651
        %v1653 = vrot.slane %v1631, %v1652
        %v1654 = vadd.f32 %v1649, %v1653
        %v1655 = vpack.c.bf16 %v1654, %v1654
        %s1656 = scalar_lea.vmem %s1, 192
        %v1657 = vld [vmem:[%s1656] sm:$0xff]
        %v1658 = vld [vmem:[%s1656 + $0x8] sm:$0xf]
        %v1659 = vld [vmem:[%s1656 + $0xc] sm:$0xff]
        %v1660 = vld [vmem:[%s1656 + $0x14] sm:$0xf]
        %v1661 = vld [vmem:[%s1656 + $0x18] sm:$0xff]
        %v1662 = vld [vmem:[%s1656 + $0x20] sm:$0xf]
        %v1663 = vld [vmem:[%s1656 + $0x24] sm:$0xff]
        %v1664 = vld [vmem:[%s1656 + $0x2c] sm:$0xf]
        %v1665 = vld [vmem:[%s1656 + $0x30] sm:$0xff]
        %v1666 = vld [vmem:[%s1656 + $0x38] sm:$0xf]
        %v1667 = vld [vmem:[%s1656 + $0x3c] sm:$0xff]
        %v1668 = vld [vmem:[%s1656 + $0x44] sm:$0xf]
        %v1669 = vld [vmem:[%s1656 + $0x48] sm:$0xff]
        %v1670 = vld [vmem:[%s1656 + $0x50] sm:$0xf]
        %v1671 = vld [vmem:[%s1656 + $0x54] sm:$0xff]
        %v1672 = vld [vmem:[%s1656 + $0x5c] sm:$0xf]
        %v1673 = vld [vmem:[%s1656 + $0x60] sm:$0xff]
        %v1674 = vld [vmem:[%s1656 + $0x68] sm:$0xf]
        %v1675 = vld [vmem:[%s1656 + $0x6c] sm:$0xff]
        %v1676 = vld [vmem:[%s1656 + $0x74] sm:$0xf]
        %v1677 = vld [vmem:[%s1656 + $0x78] sm:$0xff]
        %v1678 = vld [vmem:[%s1656 + $0x80] sm:$0xf]
        %v1679 = vld [vmem:[%s1656 + $0x84] sm:$0xff]
        %v1680 = vld [vmem:[%s1656 + $0x8c] sm:$0xf]
        %v1681 = vld [vmem:[%s1656 + $0x90] sm:$0xff]
        %v1682 = vld [vmem:[%s1656 + $0x98] sm:$0xf]
        %v1683 = vld [vmem:[%s1656 + $0x9c] sm:$0xff]
        %v1684 = vld [vmem:[%s1656 + $0xa4] sm:$0xf]
        %v1685 = vld [vmem:[%s1656 + $0xa8] sm:$0xff]
        %v1686 = vld [vmem:[%s1656 + $0xb0] sm:$0xf]
        %v1687 = vld [vmem:[%s1656 + $0xb4] sm:$0xff]
        %v1688 = vld [vmem:[%s1656 + $0xbc] sm:$0xf]
        %v1721 = vunpack.c.l.b16 %v1657
        %v1722 = vunpack.c.h.b16 %v1657
        %v1723 = vunpack.c.l.b16 %v1658
        %v1724 = vunpack.c.l.b16 %v1659
        %v1725 = vunpack.c.h.b16 %v1659
        %v1726 = vunpack.c.l.b16 %v1660
        %v1727 = vunpack.c.l.b16 %v1661
        %v1728 = vunpack.c.h.b16 %v1661
        %v1729 = vunpack.c.l.b16 %v1662
        %v1730 = vunpack.c.l.b16 %v1663
        %v1731 = vunpack.c.h.b16 %v1663
        %v1732 = vunpack.c.l.b16 %v1664
        %v1733 = vunpack.c.l.b16 %v1665
        %v1734 = vunpack.c.h.b16 %v1665
        %v1735 = vunpack.c.l.b16 %v1666
        %v1736 = vunpack.c.l.b16 %v1667
        %v1737 = vunpack.c.h.b16 %v1667
        %v1738 = vunpack.c.l.b16 %v1668
        %v1739 = vunpack.c.l.b16 %v1669
        %v1740 = vunpack.c.h.b16 %v1669
        %v1741 = vunpack.c.l.b16 %v1670
        %v1742 = vunpack.c.l.b16 %v1671
        %v1743 = vunpack.c.h.b16 %v1671
        %v1744 = vunpack.c.l.b16 %v1672
        %v1745 = vunpack.c.l.b16 %v1673
        %v1746 = vunpack.c.h.b16 %v1673
        %v1747 = vunpack.c.l.b16 %v1674
        %v1748 = vunpack.c.l.b16 %v1675
        %v1749 = vunpack.c.h.b16 %v1675
        %v1750 = vunpack.c.l.b16 %v1676
        %v1751 = vunpack.c.l.b16 %v1677
        %v1752 = vunpack.c.h.b16 %v1677
        %v1753 = vunpack.c.l.b16 %v1678
        %v1754 = vunpack.c.l.b16 %v1679
        %v1755 = vunpack.c.h.b16 %v1679
        %v1756 = vunpack.c.l.b16 %v1680
        %v1757 = vunpack.c.l.b16 %v1681
        %v1758 = vunpack.c.h.b16 %v1681
        %v1759 = vunpack.c.l.b16 %v1682
        %v1760 = vunpack.c.l.b16 %v1683
        %v1761 = vunpack.c.h.b16 %v1683
        %v1762 = vunpack.c.l.b16 %v1684
        %v1763 = vunpack.c.l.b16 %v1685
        %v1764 = vunpack.c.h.b16 %v1685
        %v1765 = vunpack.c.l.b16 %v1686
        %v1766 = vunpack.c.l.b16 %v1687
        %v1767 = vunpack.c.h.b16 %v1687
        %v1768 = vunpack.c.l.b16 %v1688
        %v1769 = vpack.c.b16 %v1724, %v1721
        %v1770 = vpack.c.b16 %v1725, %v1722
        %v1771 = vpack.c.b16 %v1726, %v1723
        %v1772 = vpack.c.b16 %v1730, %v1727
        %v1773 = vpack.c.b16 %v1731, %v1728
        %v1774 = vpack.c.b16 %v1732, %v1729
        %v1775 = vpack.c.b16 %v1736, %v1733
        %v1776 = vpack.c.b16 %v1737, %v1734
        %v1777 = vpack.c.b16 %v1738, %v1735
        %v1778 = vpack.c.b16 %v1742, %v1739
        %v1779 = vpack.c.b16 %v1743, %v1740
        %v1780 = vpack.c.b16 %v1744, %v1741
        %v1781 = vpack.c.b16 %v1748, %v1745
        %v1782 = vpack.c.b16 %v1749, %v1746
        %v1783 = vpack.c.b16 %v1750, %v1747
        %v1784 = vpack.c.b16 %v1754, %v1751
        %v1785 = vpack.c.b16 %v1755, %v1752
        %v1786 = vpack.c.b16 %v1756, %v1753
        %v1787 = vpack.c.b16 %v1760, %v1757
        %v1788 = vpack.c.b16 %v1761, %v1758
        %v1789 = vpack.c.b16 %v1762, %v1759
        %v1790 = vpack.c.b16 %v1766, %v1763
        %v1791 = vpack.c.b16 %v1767, %v1764
        %v1792 = vpack.c.b16 %v1768, %v1765
        %1817 = vmatprep.subr.bf16.mxu0 %v1770
        %1818 = vmatpush1.bf16.msra.mxu0 %v1769
        %1819 = vmatprep.subr.bf16.mxu0 %v1773
        %1820 = vmatpush1.bf16.msra.mxu0 %v1772
        %1821 = vmatprep.subr.bf16.mxu0 %v1776
        %1822 = vmatpush1.bf16.msra.mxu0 %v1775
        %1823 = vmatprep.subr.bf16.mxu0 %v1779
        %1824 = vmatpush1.bf16.msra.mxu0 %v1778
        %1825 = vmatprep.subr.bf16.mxu0 %v1782
        %1826 = vmatpush1.bf16.msra.mxu0 %v1781
        %1827 = vmatprep.subr.bf16.mxu0 %v1785
        %1828 = vmatpush1.bf16.msra.mxu0 %v1784
        %1829 = vmatprep.subr.bf16.mxu0 %v1788
        %1830 = vmatpush1.bf16.msra.mxu0 %v1787
        %1831 = vmatprep.subr.bf16.mxu0 %v1791
        %1832 = vmatpush1.bf16.msra.mxu0 %v1790
        %1833 = vmatprep.subr.bf16.mxu0 0
        %1834 = vmatpush1.bf16.msra.mxu0 0
        %1835 = vmatprep.subr.bf16.mxu0 0
        %1836 = vmatpush1.bf16.msra.mxu0 0
        %1837 = vmatprep.subr.bf16.mxu0 0
        %1838 = vmatpush1.bf16.msra.mxu0 0
        %1839 = vmatprep.subr.bf16.mxu0 0
        %1840 = vmatpush1.bf16.msra.mxu0 0
        %1841 = vmatprep.subr.bf16.mxu0 0
        %1842 = vmatpush1.bf16.msra.mxu0 0
        %1843 = vmatprep.subr.bf16.mxu0 0
        %1844 = vmatpush1.bf16.msra.mxu0 0
        %1845 = vmatprep.subr.bf16.mxu0 0
        %1846 = vmatpush1.bf16.msra.mxu0 0
        %1847 = vmatprep.subr.bf16.mxu0 0
        %1848 = vmatpush1.bf16.msra.mxu0 0
        %1849 = vmatprep.mubr.bf16.mxu0 0
        %1850 = vmatmul.mubr.bf16.gmra.mrb[0].mxu0 %v1655
        %v1851 = vpop.f32.mrb[0].mxu0
        %v1852 = vadd.f32 0.0, %v1851
        %v1853 = vpop.f32.mrb[0].mxu0
        %v1854 = vadd.f32 0.0, %v1853
        %v1855 = vpop.f32.mrb[0].mxu0
        %v1856 = vpop.f32.mrb[0].mxu0
        %1857 = vdwg.mxu0
        %1858 = vmatprep.subr.bf16.mxu0 0
        %1859 = vmatpush1.bf16.msra.mxu0 %v1771
        %1860 = vmatprep.subr.bf16.mxu0 0
        %1861 = vmatpush1.bf16.msra.mxu0 %v1774
        %1862 = vmatprep.subr.bf16.mxu0 0
        %1863 = vmatpush1.bf16.msra.mxu0 %v1777
        %1864 = vmatprep.subr.bf16.mxu0 0
        %1865 = vmatpush1.bf16.msra.mxu0 %v1780
        %1866 = vmatprep.subr.bf16.mxu0 0
        %1867 = vmatpush1.bf16.msra.mxu0 %v1783
        %1868 = vmatprep.subr.bf16.mxu0 0
        %1869 = vmatpush1.bf16.msra.mxu0 %v1786
        %1870 = vmatprep.subr.bf16.mxu0 0
        %1871 = vmatpush1.bf16.msra.mxu0 %v1789
        %1872 = vmatprep.subr.bf16.mxu0 0
        %1873 = vmatpush1.bf16.msra.mxu0 %v1792
        %1874 = vmatprep.subr.bf16.mxu0 0
        %1875 = vmatpush1.bf16.msra.mxu0 0
        %1876 = vmatprep.subr.bf16.mxu0 0
        %1877 = vmatpush1.bf16.msra.mxu0 0
        %1878 = vmatprep.subr.bf16.mxu0 0
        %1879 = vmatpush1.bf16.msra.mxu0 0
        %1880 = vmatprep.subr.bf16.mxu0 0
        %1881 = vmatpush1.bf16.msra.mxu0 0
        %1882 = vmatprep.subr.bf16.mxu0 0
        %1883 = vmatpush1.bf16.msra.mxu0 0
        %1884 = vmatprep.subr.bf16.mxu0 0
        %1885 = vmatpush1.bf16.msra.mxu0 0
        %1886 = vmatprep.subr.bf16.mxu0 0
        %1887 = vmatpush1.bf16.msra.mxu0 0
        %1888 = vmatprep.subr.bf16.mxu0 0
        %1889 = vmatpush1.bf16.msra.mxu0 0
        %1890 = vmatprep.mubr.bf16.mxu0 0
        %1891 = vmatmul.mubr.bf16.gmra.mrb[0].mxu0 %v1655
        %v1892 = vpop.f32.mrb[0].mxu0
        %v1893 = vadd.f32 0.0, %v1892
        %v1894 = vpop.f32.mrb[0].mxu0
        %v1895 = vpop.f32.mrb[0].mxu0
        %v1896 = vpop.f32.mrb[0].mxu0
        %1897 = vdwg.mxu0
        %v1898 = vmul.f32 %v1852, 0.125
        %v1900 = vsel %vm519, %v1898, 0
        %v1903 = vsel %vm519, %v1854, 0
        %1905 = vmatprep.subr.mxu0 0.0
        %1906 = vmatpush1.xpose.msra.mxu0 %v1903
        %1907 = vmatprep.subr.mxu0 0.0
        %1908 = vmatpush1.xpose.msra.mxu0 0.0
        %1909 = vmatprep.subr.mxu0 0.0
        %1910 = vmatpush1.xpose.msra.mxu0 0.0
        %1911 = vmatprep.subr.mxu0 0.0
        %1912 = vmatpush1.xpose.msra.mxu0 0.0
        %1913 = vmatprep.subr.mxu0 0.0
        %1914 = vmatpush1.xpose.msra.mxu0 0.0
        %1915 = vmatprep.subr.mxu0 0.0
        %1916 = vmatpush1.xpose.msra.mxu0 0.0
        %1917 = vmatprep.subr.mxu0 0.0
        %1918 = vmatpush1.xpose.msra.mxu0 0.0
        %1919 = vmatprep.subr.mxu0 0.0
        %1920 = vmatpush1.xpose.msra.mxu0 0.0
        %1921 = vmatprep.subr.mxu0 0.0
        %1922 = vmatpush1.xpose.msra.mxu0 0.0
        %1923 = vmatprep.subr.mxu0 0.0
        %1924 = vmatpush1.xpose.msra.mxu0 0.0
        %1925 = vmatprep.subr.mxu0 0.0
        %1926 = vmatpush1.xpose.msra.mxu0 0.0
        %1927 = vmatprep.subr.mxu0 0.0
        %1928 = vmatpush1.xpose.msra.mxu0 0.0
        %1929 = vmatprep.subr.mxu0 0.0
        %1930 = vmatpush1.xpose.msra.mxu0 0.0
        %1931 = vmatprep.subr.mxu0 0.0
        %1932 = vmatpush1.xpose.msra.mxu0 0.0
        %1933 = vmatprep.subr.mxu0 0.0
        %1934 = vmatpush1.xpose.msra.mxu0 0.0
        %1935 = vmatprep.subr.mxu0 0.0
        %1936 = vmatpush1.xpose.msra.mxu0 0.0
        %1937 = vmatprep.subr.mxu0 0.0
        %1938 = vmatpush1.xpose.msra.mxu0 0.0
        %1939 = vmatprep.subr.mxu0 0.0
        %1940 = vmatpush1.xpose.msra.mxu0 0.0
        %1941 = vmatprep.subr.mxu0 0.0
        %1942 = vmatpush1.xpose.msra.mxu0 0.0
        %1943 = vmatprep.subr.mxu0 0.0
        %1944 = vmatpush1.xpose.msra.mxu0 0.0
        %1945 = vmatprep.subr.mxu0 0.0
        %1946 = vmatpush1.xpose.msra.mxu0 0.0
        %1947 = vmatprep.subr.mxu0 0.0
        %1948 = vmatpush1.xpose.msra.mxu0 0.0
        %1949 = vmatprep.subr.mxu0 0.0
        %1950 = vmatpush1.xpose.msra.mxu0 0.0
        %1951 = vmatprep.subr.mxu0 0.0
        %1952 = vmatpush1.xpose.msra.mxu0 0.0
        %1953 = vmatprep.subr.mxu0 0.0
        %1954 = vmatpush1.xpose.msra.mxu0 0.0
        %1955 = vmatprep.subr.mxu0 0.0
        %1956 = vmatpush1.xpose.msra.mxu0 0.0
        %1957 = vmatprep.subr.mxu0 0.0
        %1958 = vmatpush1.xpose.msra.mxu0 0.0
        %1959 = vmatprep.subr.mxu0 0.0
        %1960 = vmatpush1.xpose.msra.mxu0 0.0
        %1961 = vmatprep.subr.mxu0 0.0
        %1962 = vmatpush1.xpose.msra.mxu0 0.0
        %1963 = vmatprep.subr.mxu0 0.0
        %1964 = vmatpush1.xpose.msra.mxu0 0.0
        %1965 = vmatprep.subr.mxu0 0.0
        %1966 = vmatpush1.xpose.msra.mxu0 0.0
        %1967 = vmatprep.subr.mxu0 0.0
        %1968 = vmatpush1.xpose.msra.mxu0 0.0
        %1969 = vmatprep.mubr.f32.mxu0 0.0
        %1970 = vmatmul.mubr.f32.gmra.mrb[0].mxu0 %v1900
        %v1971 = vpop.f32.mrb[0].mxu0
        %v1972 = vadd.f32 0.0, %v1971
        %v1973 = vpop.f32.mrb[0].mxu0
        %1974 = vdwg.mxu0
        %v1975 = vsel %vm596, %v1972, -inf
        %1976 = vmax.xlane.f32.xlu0 %v1975
        %v1977 = vpop.xlane.xlu0 %1976
        %v1978 = vsub.f32 %v1972, %v1977
        %v1979 = vmul.f32 %v1978, 1.442695
        %v1980 = vpow.pop %v1979
        %v1981 = vsel %vm596, %v1980, 0.0
        %1982 = vadd.xlane.f32.xlu0 %v1981
        %v1983 = vpop.xlane.xlu0 %1982
        %v1984 = vrcp.pop %v1983
        %v1985 = vmul.f32 %v1980, %v1984
        %v1987 = vsel %vm596, %v1985, 0
        %1989 = vmatprep.subr.mxu0 0.0
        %1990 = vmatpush1.msra.mxu0 %v1893
        %1991 = vmatprep.subr.mxu0 0.0
        %1992 = vmatpush1.msra.mxu0 0.0
        %1993 = vmatprep.subr.mxu0 0.0
        %1994 = vmatpush1.msra.mxu0 0.0
        %1995 = vmatprep.subr.mxu0 0.0
        %1996 = vmatpush1.msra.mxu0 0.0
        %1997 = vmatprep.subr.mxu0 0.0
        %1998 = vmatpush1.msra.mxu0 0.0
        %1999 = vmatprep.subr.mxu0 0.0
        %2000 = vmatpush1.msra.mxu0 0.0
        %2001 = vmatprep.subr.mxu0 0.0
        %2002 = vmatpush1.msra.mxu0 0.0
        %2003 = vmatprep.subr.mxu0 0.0
        %2004 = vmatpush1.msra.mxu0 0.0
        %2005 = vmatprep.subr.mxu0 0.0
        %2006 = vmatpush1.msra.mxu0 0.0
        %2007 = vmatprep.subr.mxu0 0.0
        %2008 = vmatpush1.msra.mxu0 0.0
        %2009 = vmatprep.subr.mxu0 0.0
        %2010 = vmatpush1.msra.mxu0 0.0
        %2011 = vmatprep.subr.mxu0 0.0
        %2012 = vmatpush1.msra.mxu0 0.0
        %2013 = vmatprep.subr.mxu0 0.0
        %2014 = vmatpush1.msra.mxu0 0.0
        %2015 = vmatprep.subr.mxu0 0.0
        %2016 = vmatpush1.msra.mxu0 0.0
        %2017 = vmatprep.subr.mxu0 0.0
        %2018 = vmatpush1.msra.mxu0 0.0
        %2019 = vmatprep.subr.mxu0 0.0
        %2020 = vmatpush1.msra.mxu0 0.0
        %2021 = vmatprep.subr.mxu0 0.0
        %2022 = vmatpush1.msra.mxu0 0.0
        %2023 = vmatprep.subr.mxu0 0.0
        %2024 = vmatpush1.msra.mxu0 0.0
        %2025 = vmatprep.subr.mxu0 0.0
        %2026 = vmatpush1.msra.mxu0 0.0
        %2027 = vmatprep.subr.mxu0 0.0
        %2028 = vmatpush1.msra.mxu0 0.0
        %2029 = vmatprep.subr.mxu0 0.0
        %2030 = vmatpush1.msra.mxu0 0.0
        %2031 = vmatprep.subr.mxu0 0.0
        %2032 = vmatpush1.msra.mxu0 0.0
        %2033 = vmatprep.subr.mxu0 0.0
        %2034 = vmatpush1.msra.mxu0 0.0
        %2035 = vmatprep.subr.mxu0 0.0
        %2036 = vmatpush1.msra.mxu0 0.0
        %2037 = vmatprep.subr.mxu0 0.0
        %2038 = vmatpush1.msra.mxu0 0.0
        %2039 = vmatprep.subr.mxu0 0.0
        %2040 = vmatpush1.msra.mxu0 0.0
        %2041 = vmatprep.subr.mxu0 0.0
        %2042 = vmatpush1.msra.mxu0 0.0
        %2043 = vmatprep.subr.mxu0 0.0
        %2044 = vmatpush1.msra.mxu0 0.0
        %2045 = vmatprep.subr.mxu0 0.0
        %2046 = vmatpush1.msra.mxu0 0.0
        %2047 = vmatprep.subr.mxu0 0.0
        %2048 = vmatpush1.msra.mxu0 0.0
        %2049 = vmatprep.subr.mxu0 0.0
        %2050 = vmatpush1.msra.mxu0 0.0
        %2051 = vmatprep.subr.mxu0 0.0
        %2052 = vmatpush1.msra.mxu0 0.0
        %2053 = vmatprep.mubr.f32.mxu0 0.0
        %2054 = vmatmul.mubr.f32.gmra.mrb[0].mxu0 %v1987
        %v2055 = vpop.f32.mrb[0].mxu0
        %v2056 = vadd.f32 0.0, %v2055
        %v2057 = vpop.f32.mrb[0].mxu0
        %2058 = vdwg.mxu0
        %2059 = vrot.lane.b32.xlu0 %v1898, 64
        %v2060 = vpop.permute.xlu0 %2059
        %2061 = vrot.lane.b32.xlu0 %v1854, 64
        %v2062 = vpop.permute.xlu0 %2061
        %v2063 = vsel %vm519, %v2060, 0
        %v2065 = vsel %vm519, %v2062, 0
        %2067 = vmatprep.subr.mxu0 0.0
        %2068 = vmatpush1.xpose.msra.mxu0 %v2065
        %2069 = vmatprep.subr.mxu0 0.0
        %2070 = vmatpush1.xpose.msra.mxu0 0.0
        %2071 = vmatprep.subr.mxu0 0.0
        %2072 = vmatpush1.xpose.msra.mxu0 0.0
        %2073 = vmatprep.subr.mxu0 0.0
        %2074 = vmatpush1.xpose.msra.mxu0 0.0
        %2075 = vmatprep.subr.mxu0 0.0
        %2076 = vmatpush1.xpose.msra.mxu0 0.0
        %2077 = vmatprep.subr.mxu0 0.0
        %2078 = vmatpush1.xpose.msra.mxu0 0.0
        %2079 = vmatprep.subr.mxu0 0.0
        %2080 = vmatpush1.xpose.msra.mxu0 0.0
        %2081 = vmatprep.subr.mxu0 0.0
        %2082 = vmatpush1.xpose.msra.mxu0 0.0
        %2083 = vmatprep.subr.mxu0 0.0
        %2084 = vmatpush1.xpose.msra.mxu0 0.0
        %2085 = vmatprep.subr.mxu0 0.0
        %2086 = vmatpush1.xpose.msra.mxu0 0.0
        %2087 = vmatprep.subr.mxu0 0.0
        %2088 = vmatpush1.xpose.msra.mxu0 0.0
        %2089 = vmatprep.subr.mxu0 0.0
        %2090 = vmatpush1.xpose.msra.mxu0 0.0
        %2091 = vmatprep.subr.mxu0 0.0
        %2092 = vmatpush1.xpose.msra.mxu0 0.0
        %2093 = vmatprep.subr.mxu0 0.0
        %2094 = vmatpush1.xpose.msra.mxu0 0.0
        %2095 = vmatprep.subr.mxu0 0.0
        %2096 = vmatpush1.xpose.msra.mxu0 0.0
        %2097 = vmatprep.subr.mxu0 0.0
        %2098 = vmatpush1.xpose.msra.mxu0 0.0
        %2099 = vmatprep.subr.mxu0 0.0
        %2100 = vmatpush1.xpose.msra.mxu0 0.0
        %2101 = vmatprep.subr.mxu0 0.0
        %2102 = vmatpush1.xpose.msra.mxu0 0.0
        %2103 = vmatprep.subr.mxu0 0.0
        %2104 = vmatpush1.xpose.msra.mxu0 0.0
        %2105 = vmatprep.subr.mxu0 0.0
        %2106 = vmatpush1.xpose.msra.mxu0 0.0
        %2107 = vmatprep.subr.mxu0 0.0
        %2108 = vmatpush1.xpose.msra.mxu0 0.0
        %2109 = vmatprep.subr.mxu0 0.0
        %2110 = vmatpush1.xpose.msra.mxu0 0.0
        %2111 = vmatprep.subr.mxu0 0.0
        %2112 = vmatpush1.xpose.msra.mxu0 0.0
        %2113 = vmatprep.subr.mxu0 0.0
        %2114 = vmatpush1.xpose.msra.mxu0 0.0
        %2115 = vmatprep.subr.mxu0 0.0
        %2116 = vmatpush1.xpose.msra.mxu0 0.0
        %2117 = vmatprep.subr.mxu0 0.0
        %2118 = vmatpush1.xpose.msra.mxu0 0.0
        %2119 = vmatprep.subr.mxu0 0.0
        %2120 = vmatpush1.xpose.msra.mxu0 0.0
        %2121 = vmatprep.subr.mxu0 0.0
        %2122 = vmatpush1.xpose.msra.mxu0 0.0
        %2123 = vmatprep.subr.mxu0 0.0
        %2124 = vmatpush1.xpose.msra.mxu0 0.0
        %2125 = vmatprep.subr.mxu0 0.0
        %2126 = vmatpush1.xpose.msra.mxu0 0.0
        %2127 = vmatprep.subr.mxu0 0.0
        %2128 = vmatpush1.xpose.msra.mxu0 0.0
        %2129 = vmatprep.subr.mxu0 0.0
        %2130 = vmatpush1.xpose.msra.mxu0 0.0
        %2131 = vmatprep.mubr.f32.mxu0 0.0
        %2132 = vmatmul.mubr.f32.gmra.mrb[0].mxu0 %v2063
        %v2133 = vpop.f32.mrb[0].mxu0
        %v2134 = vadd.f32 0.0, %v2133
        %v2135 = vpop.f32.mrb[0].mxu0
        %2136 = vdwg.mxu0
        %v2137 = vsel %vm596, %v2134, -inf
        %2138 = vmax.xlane.f32.xlu0 %v2137
        %v2139 = vpop.xlane.xlu0 %2138
        %v2140 = vsub.f32 %v2134, %v2139
        %v2141 = vmul.f32 %v2140, 1.442695
        %v2142 = vpow.pop %v2141
        %v2143 = vsel %vm596, %v2142, 0.0
        %2144 = vadd.xlane.f32.xlu0 %v2143
        %v2145 = vpop.xlane.xlu0 %2144
        %v2146 = vrcp.pop %v2145
        %v2147 = vmul.f32 %v2142, %v2146
        %2149 = vrot.lane.b32.xlu0 %v1893, 64
        %v2150 = vpop.permute.xlu0 %2149
        %v2153 = vsel %vm596, %v2147, 0
        %2155 = vmatprep.subr.mxu0 0.0
        %2156 = vmatpush1.msra.mxu0 %v2150
        %2157 = vmatprep.subr.mxu0 0.0
        %2158 = vmatpush1.msra.mxu0 0.0
        %2159 = vmatprep.subr.mxu0 0.0
        %2160 = vmatpush1.msra.mxu0 0.0
        %2161 = vmatprep.subr.mxu0 0.0
        %2162 = vmatpush1.msra.mxu0 0.0
        %2163 = vmatprep.subr.mxu0 0.0
        %2164 = vmatpush1.msra.mxu0 0.0
        %2165 = vmatprep.subr.mxu0 0.0
        %2166 = vmatpush1.msra.mxu0 0.0
        %2167 = vmatprep.subr.mxu0 0.0
        %2168 = vmatpush1.msra.mxu0 0.0
        %2169 = vmatprep.subr.mxu0 0.0
        %2170 = vmatpush1.msra.mxu0 0.0
        %2171 = vmatprep.subr.mxu0 0.0
        %2172 = vmatpush1.msra.mxu0 0.0
        %2173 = vmatprep.subr.mxu0 0.0
        %2174 = vmatpush1.msra.mxu0 0.0
        %2175 = vmatprep.subr.mxu0 0.0
        %2176 = vmatpush1.msra.mxu0 0.0
        %2177 = vmatprep.subr.mxu0 0.0
        %2178 = vmatpush1.msra.mxu0 0.0
        %2179 = vmatprep.subr.mxu0 0.0
        %2180 = vmatpush1.msra.mxu0 0.0
        %2181 = vmatprep.subr.mxu0 0.0
        %2182 = vmatpush1.msra.mxu0 0.0
        %2183 = vmatprep.subr.mxu0 0.0
        %2184 = vmatpush1.msra.mxu0 0.0
        %2185 = vmatprep.subr.mxu0 0.0
        %2186 = vmatpush1.msra.mxu0 0.0
        %2187 = vmatprep.subr.mxu0 0.0
        %2188 = vmatpush1.msra.mxu0 0.0
        %2189 = vmatprep.subr.mxu0 0.0
        %2190 = vmatpush1.msra.mxu0 0.0
        %2191 = vmatprep.subr.mxu0 0.0
        %2192 = vmatpush1.msra.mxu0 0.0
        %2193 = vmatprep.subr.mxu0 0.0
        %2194 = vmatpush1.msra.mxu0 0.0
        %2195 = vmatprep.subr.mxu0 0.0
        %2196 = vmatpush1.msra.mxu0 0.0
        %2197 = vmatprep.subr.mxu0 0.0
        %2198 = vmatpush1.msra.mxu0 0.0
        %2199 = vmatprep.subr.mxu0 0.0
        %2200 = vmatpush1.msra.mxu0 0.0
        %2201 = vmatprep.subr.mxu0 0.0
        %2202 = vmatpush1.msra.mxu0 0.0
        %2203 = vmatprep.subr.mxu0 0.0
        %2204 = vmatpush1.msra.mxu0 0.0
        %2205 = vmatprep.subr.mxu0 0.0
        %2206 = vmatpush1.msra.mxu0 0.0
        %2207 = vmatprep.subr.mxu0 0.0
        %2208 = vmatpush1.msra.mxu0 0.0
        %2209 = vmatprep.subr.mxu0 0.0
        %2210 = vmatpush1.msra.mxu0 0.0
        %2211 = vmatprep.subr.mxu0 0.0
        %2212 = vmatpush1.msra.mxu0 0.0
        %2213 = vmatprep.subr.mxu0 0.0
        %2214 = vmatpush1.msra.mxu0 0.0
        %2215 = vmatprep.subr.mxu0 0.0
        %2216 = vmatpush1.msra.mxu0 0.0
        %2217 = vmatprep.subr.mxu0 0.0
        %2218 = vmatpush1.msra.mxu0 0.0
        %2219 = vmatprep.mubr.f32.mxu0 0.0
        %2220 = vmatmul.mubr.f32.gmra.mrb[0].mxu0 %v2153
        %v2221 = vpop.f32.mrb[0].mxu0
        %v2222 = vadd.f32 0.0, %v2221
        %v2223 = vpop.f32.mrb[0].mxu0
        %2224 = vdwg.mxu0
        %2226 = vrot.lane.b32.xlu0 %v2222, 64
        %v2227 = vpop.permute.xlu0 %2226
        %v2229 = vsel %vm519, %v2056, %v2227
        %v2230 = vpack.c.bf16 %v2229, %v2229
        %s2231 = scalar_lea.vmem %s2, 64
        %v2232 = vld [vmem:[%s2231] sm:$0xf]
        %v2233 = vld [vmem:[%s2231 + $0x4] sm:$0xf]
        %v2234 = vld [vmem:[%s2231 + $0x8] sm:$0xf]
        %v2235 = vld [vmem:[%s2231 + $0xc] sm:$0xf]
        %v2236 = vld [vmem:[%s2231 + $0x10] sm:$0xf]
        %v2237 = vld [vmem:[%s2231 + $0x14] sm:$0xf]
        %v2238 = vld [vmem:[%s2231 + $0x18] sm:$0xf]
        %v2239 = vld [vmem:[%s2231 + $0x1c] sm:$0xf]
        %v2240 = vld [vmem:[%s2231 + $0x20] sm:$0xf]
        %v2241 = vld [vmem:[%s2231 + $0x24] sm:$0xf]
        %v2242 = vld [vmem:[%s2231 + $0x28] sm:$0xf]
        %v2243 = vld [vmem:[%s2231 + $0x2c] sm:$0xf]
        %v2244 = vld [vmem:[%s2231 + $0x30] sm:$0xf]
        %v2245 = vld [vmem:[%s2231 + $0x34] sm:$0xf]
        %v2246 = vld [vmem:[%s2231 + $0x38] sm:$0xf]
        %v2247 = vld [vmem:[%s2231 + $0x3c] sm:$0xf]
        %v2264 = vunpack.c.l.b16 %v2232
        %v2265 = vunpack.c.l.b16 %v2233
        %v2266 = vunpack.c.l.b16 %v2234
        %v2267 = vunpack.c.l.b16 %v2235
        %v2268 = vunpack.c.l.b16 %v2236
        %v2269 = vunpack.c.l.b16 %v2237
        %v2270 = vunpack.c.l.b16 %v2238
        %v2271 = vunpack.c.l.b16 %v2239
        %v2272 = vunpack.c.l.b16 %v2240
        %v2273 = vunpack.c.l.b16 %v2241
        %v2274 = vunpack.c.l.b16 %v2242
        %v2275 = vunpack.c.l.b16 %v2243
        %v2276 = vunpack.c.l.b16 %v2244
        %v2277 = vunpack.c.l.b16 %v2245
        %v2278 = vunpack.c.l.b16 %v2246
        %v2279 = vunpack.c.l.b16 %v2247
        %v2280 = vpack.c.b16 %v2265, %v2264
        %v2281 = vpack.c.b16 %v2267, %v2266
        %v2282 = vpack.c.b16 %v2269, %v2268
        %v2283 = vpack.c.b16 %v2271, %v2270
        %v2284 = vpack.c.b16 %v2273, %v2272
        %v2285 = vpack.c.b16 %v2275, %v2274
        %v2286 = vpack.c.b16 %v2277, %v2276
        %v2287 = vpack.c.b16 %v2279, %v2278
        %2296 = vmatprep.subr.bf16.mxu0 0
        %2297 = vmatpush1.bf16.msra.mxu0 %v2280
        %2298 = vmatprep.subr.bf16.mxu0 0
        %2299 = vmatpush1.bf16.msra.mxu0 %v2281
        %2300 = vmatprep.subr.bf16.mxu0 0
        %2301 = vmatpush1.bf16.msra.mxu0 %v2282
        %2302 = vmatprep.subr.bf16.mxu0 0
        %2303 = vmatpush1.bf16.msra.mxu0 %v2283
        %2304 = vmatprep.subr.bf16.mxu0 0
        %2305 = vmatpush1.bf16.msra.mxu0 %v2284
        %2306 = vmatprep.subr.bf16.mxu0 0
        %2307 = vmatpush1.bf16.msra.mxu0 %v2285
        %2308 = vmatprep.subr.bf16.mxu0 0
        %2309 = vmatpush1.bf16.msra.mxu0 %v2286
        %2310 = vmatprep.subr.bf16.mxu0 0
        %2311 = vmatpush1.bf16.msra.mxu0 %v2287
        %2312 = vmatprep.subr.bf16.mxu0 0
        %2313 = vmatpush1.bf16.msra.mxu0 0
        %2314 = vmatprep.subr.bf16.mxu0 0
        %2315 = vmatpush1.bf16.msra.mxu0 0
        %2316 = vmatprep.subr.bf16.mxu0 0
        %2317 = vmatpush1.bf16.msra.mxu0 0
        %2318 = vmatprep.subr.bf16.mxu0 0
        %2319 = vmatpush1.bf16.msra.mxu0 0
        %2320 = vmatprep.subr.bf16.mxu0 0
        %2321 = vmatpush1.bf16.msra.mxu0 0
        %2322 = vmatprep.subr.bf16.mxu0 0
        %2323 = vmatpush1.bf16.msra.mxu0 0
        %2324 = vmatprep.subr.bf16.mxu0 0
        %2325 = vmatpush1.bf16.msra.mxu0 0
        %2326 = vmatprep.subr.bf16.mxu0 0
        %2327 = vmatpush1.bf16.msra.mxu0 0
        %2328 = vmatprep.mubr.bf16.mxu0 0
        %2329 = vmatmul.mubr.bf16.gmra.mrb[0].mxu0 %v2230
        %v2330 = vpop.f32.mrb[0].mxu0
        %v2331 = vadd.f32 %v1654, %v2330
        %v2332 = vpop.f32.mrb[0].mxu0
        %v2333 = vpop.f32.mrb[0].mxu0
        %v2334 = vpop.f32.mrb[0].mxu0
        %2335 = vdwg.mxu0
        %v2336 = vld [vmem:[%s5 + $0x5] sm:$0x1]
        %v2337 = vld [vmem:[%s5 + $0x6] sm:$0x1]
        %2338 = vadd.xlane.f32.xlu0 %v2331
        %v2339 = vpop.xlane.xlu0 %2338
        %v2340 = vmul.f32 %v2339, %v961
        %v2341 = vmul.f32 %v2331, %v2331
        %2342 = vadd.xlane.f32.xlu0 %v2341
        %v2343 = vpop.xlane.xlu0 %2342
        %v2344 = vmul.f32 %v2343, %v961
        %v2345 = vmul.f32 %v2340, %v2340
        %v2346 = vsub.f32 %v2344, %v2345
        %v2347 = vsub.f32 %v2331, %v2340
        %v2348 = vadd.f32 %v2346, 1e-06
        %v2349 = vrsqrt.pop %v2348
        %v2350 = vmul.f32 %v2347, %v2349
        %v2351 = vlaneseq
        %v2352 = vshrl.u32 %v2351, 7
        %v2353 = vsub.s32 0, %v2352
        %v2354 = vrot.slane %v2336, %v2353
        %v2355 = vmul.f32 %v2350, %v2354
        %v2356 = vlaneseq
        %v2357 = vshrl.u32 %v2356, 7
        %v2358 = vsub.s32 0, %v2357
        %v2359 = vrot.slane %v2337, %v2358
        %v2360 = vadd.f32 %v2355, %v2359
        %v2361 = vpack.c.bf16 %v2360, %v2360
        %s2362 = scalar_lea.vmem %s3, 256
        %v2363 = vld [vmem:[%s2362] sm:$0xff]
        %v2364 = vld [vmem:[%s2362 + $0x8] sm:$0xff]
        %v2365 = vld [vmem:[%s2362 + $0x10] sm:$0xff]
        %v2366 = vld [vmem:[%s2362 + $0x18] sm:$0xff]
        %v2367 = vld [vmem:[%s2362 + $0x20] sm:$0xff]
        %v2368 = vld [vmem:[%s2362 + $0x28] sm:$0xff]
        %v2369 = vld [vmem:[%s2362 + $0x30] sm:$0xff]
        %v2370 = vld [vmem:[%s2362 + $0x38] sm:$0xff]
        %v2371 = vld [vmem:[%s2362 + $0x40] sm:$0xff]
        %v2372 = vld [vmem:[%s2362 + $0x48] sm:$0xff]
        %v2373 = vld [vmem:[%s2362 + $0x50] sm:$0xff]
        %v2374 = vld [vmem:[%s2362 + $0x58] sm:$0xff]
        %v2375 = vld [vmem:[%s2362 + $0x60] sm:$0xff]
        %v2376 = vld [vmem:[%s2362 + $0x68] sm:$0xff]
        %v2377 = vld [vmem:[%s2362 + $0x70] sm:$0xff]
        %v2378 = vld [vmem:[%s2362 + $0x78] sm:$0xff]
        %v2379 = vld [vmem:[%s2362 + $0x80] sm:$0xff]
        %v2380 = vld [vmem:[%s2362 + $0x88] sm:$0xff]
        %v2381 = vld [vmem:[%s2362 + $0x90] sm:$0xff]
        %v2382 = vld [vmem:[%s2362 + $0x98] sm:$0xff]
        %v2383 = vld [vmem:[%s2362 + $0xa0] sm:$0xff]
        %v2384 = vld [vmem:[%s2362 + $0xa8] sm:$0xff]
        %v2385 = vld [vmem:[%s2362 + $0xb0] sm:$0xff]
        %v2386 = vld [vmem:[%s2362 + $0xb8] sm:$0xff]
        %v2387 = vld [vmem:[%s2362 + $0xc0] sm:$0xff]
        %v2388 = vld [vmem:[%s2362 + $0xc8] sm:$0xff]
        %v2389 = vld [vmem:[%s2362 + $0xd0] sm:$0xff]
        %v2390 = vld [vmem:[%s2362 + $0xd8] sm:$0xff]
        %v2391 = vld [vmem:[%s2362 + $0xe0] sm:$0xff]
        %v2392 = vld [vmem:[%s2362 + $0xe8] sm:$0xff]
        %v2393 = vld [vmem:[%s2362 + $0xf0] sm:$0xff]
        %v2394 = vld [vmem:[%s2362 + $0xf8] sm:$0xff]
        %s2395 = scalar_lea.vmem %s6, 1
        %v2396 = vld [vmem:[%s2395] ss:$4 sm:$0xf]
        %v2398 = vlaneseq
        %v2399 = vshrl.u32 %v2398, 7
        %v2400 = vsub.s32 0, %v2399
        %v2401 = vrot.slane %v2396, %v2400
        %v2402 = vlaneseq
        %v2403 = vshrl.u32 %v2402, 7
        %v2404 = vsub.s32 1, %v2403
        %v2405 = vrot.slane %v2396, %v2404
        %v2406 = vlaneseq
        %v2407 = vshrl.u32 %v2406, 7
        %v2408 = vsub.s32 2, %v2407
        %v2409 = vrot.slane %v2396, %v2408
        %v2410 = vlaneseq
        %v2411 = vshrl.u32 %v2410, 7
        %v2412 = vsub.s32 3, %v2411
        %v2413 = vrot.slane %v2396, %v2412
        %v2450 = vunpack.c.l.b16 %v2363
        %v2451 = vunpack.c.h.b16 %v2363
        %v2452 = vunpack.c.l.b16 %v2364
        %v2453 = vunpack.c.h.b16 %v2364
        %v2454 = vunpack.c.l.b16 %v2365
        %v2455 = vunpack.c.h.b16 %v2365
        %v2456 = vunpack.c.l.b16 %v2366
        %v2457 = vunpack.c.h.b16 %v2366
        %v2458 = vunpack.c.l.b16 %v2367
        %v2459 = vunpack.c.h.b16 %v2367
        %v2460 = vunpack.c.l.b16 %v2368
        %v2461 = vunpack.c.h.b16 %v2368
        %v2462 = vunpack.c.l.b16 %v2369
        %v2463 = vunpack.c.h.b16 %v2369
        %v2464 = vunpack.c.l.b16 %v2370
        %v2465 = vunpack.c.h.b16 %v2370
        %v2466 = vunpack.c.l.b16 %v2371
        %v2467 = vunpack.c.h.b16 %v2371
        %v2468 = vunpack.c.l.b16 %v2372
        %v2469 = vunpack.c.h.b16 %v2372
        %v2470 = vunpack.c.l.b16 %v2373
        %v2471 = vunpack.c.h.b16 %v2373
        %v2472 = vunpack.c.l.b16 %v2374
        %v2473 = vunpack.c.h.b16 %v2374
        %v2474 = vunpack.c.l.b16 %v2375
        %v2475 = vunpack.c.h.b16 %v2375
        %v2476 = vunpack.c.l.b16 %v2376
        %v2477 = vunpack.c.h.b16 %v2376
        %v2478 = vunpack.c.l.b16 %v2377
        %v2479 = vunpack.c.h.b16 %v2377
        %v2480 = vunpack.c.l.b16 %v2378
        %v2481 = vunpack.c.h.b16 %v2378
        %v2482 = vunpack.c.l.b16 %v2379
        %v2483 = vunpack.c.h.b16 %v2379
        %v2484 = vunpack.c.l.b16 %v2380
        %v2485 = vunpack.c.h.b16 %v2380
        %v2486 = vunpack.c.l.b16 %v2381
        %v2487 = vunpack.c.h.b16 %v2381
        %v2488 = vunpack.c.l.b16 %v2382
        %v2489 = vunpack.c.h.b16 %v2382
        %v2490 = vunpack.c.l.b16 %v2383
        %v2491 = vunpack.c.h.b16 %v2383
        %v2492 = vunpack.c.l.b16 %v2384
        %v2493 = vunpack.c.h.b16 %v2384
        %v2494 = vunpack.c.l.b16 %v2385
        %v2495 = vunpack.c.h.b16 %v2385
        %v2496 = vunpack.c.l.b16 %v2386
        %v2497 = vunpack.c.h.b16 %v2386
        %v2498 = vunpack.c.l.b16 %v2387
        %v2499 = vunpack.c.h.b16 %v2387
        %v2500 = vunpack.c.l.b16 %v2388
        %v2501 = vunpack.c.h.b16 %v2388
        %v2502 = vunpack.c.l.b16 %v2389
        %v2503 = vunpack.c.h.b16 %v2389
        %v2504 = vunpack.c.l.b16 %v2390
        %v2505 = vunpack.c.h.b16 %v2390
        %v2506 = vunpack.c.l.b16 %v2391
        %v2507 = vunpack.c.h.b16 %v2391
        %v2508 = vunpack.c.l.b16 %v2392
        %v2509 = vunpack.c.h.b16 %v2392
        %v2510 = vunpack.c.l.b16 %v2393
        %v2511 = vunpack.c.h.b16 %v2393
        %v2512 = vunpack.c.l.b16 %v2394
        %v2513 = vunpack.c.h.b16 %v2394
        %v2514 = vpack.c.b16 %v2454, %v2450
        %v2515 = vpack.c.b16 %v2455, %v2451
        %v2516 = vpack.c.b16 %v2456, %v2452
        %v2517 = vpack.c.b16 %v2457, %v2453
        %v2518 = vpack.c.b16 %v2462, %v2458
        %v2519 = vpack.c.b16 %v2463, %v2459
        %v2520 = vpack.c.b16 %v2464, %v2460
        %v2521 = vpack.c.b16 %v2465, %v2461
        %v2522 = vpack.c.b16 %v2470, %v2466
        %v2523 = vpack.c.b16 %v2471, %v2467
        %v2524 = vpack.c.b16 %v2472, %v2468
        %v2525 = vpack.c.b16 %v2473, %v2469
        %v2526 = vpack.c.b16 %v2478, %v2474
        %v2527 = vpack.c.b16 %v2479, %v2475
        %v2528 = vpack.c.b16 %v2480, %v2476
        %v2529 = vpack.c.b16 %v2481, %v2477
        %v2530 = vpack.c.b16 %v2486, %v2482
        %v2531 = vpack.c.b16 %v2487, %v2483
        %v2532 = vpack.c.b16 %v2488, %v2484
        %v2533 = vpack.c.b16 %v2489, %v2485
        %v2534 = vpack.c.b16 %v2494, %v2490
        %v2535 = vpack.c.b16 %v2495, %v2491
        %v2536 = vpack.c.b16 %v2496, %v2492
        %v2537 = vpack.c.b16 %v2497, %v2493
        %v2538 = vpack.c.b16 %v2502, %v2498
        %v2539 = vpack.c.b16 %v2503, %v2499
        %v2540 = vpack.c.b16 %v2504, %v2500
        %v2541 = vpack.c.b16 %v2505, %v2501
        %v2542 = vpack.c.b16 %v2510, %v2506
        %v2543 = vpack.c.b16 %v2511, %v2507
        %v2544 = vpack.c.b16 %v2512, %v2508
        %v2545 = vpack.c.b16 %v2513, %v2509
        %2578 = vmatprep.subr.bf16.mxu0 %v2515
        %2579 = vmatpush1.bf16.msra.mxu0 %v2514
        %2580 = vmatprep.subr.bf16.mxu0 %v2519
        %2581 = vmatpush1.bf16.msra.mxu0 %v2518
        %2582 = vmatprep.subr.bf16.mxu0 %v2523
        %2583 = vmatpush1.bf16.msra.mxu0 %v2522
        %2584 = vmatprep.subr.bf16.mxu0 %v2527
        %2585 = vmatpush1.bf16.msra.mxu0 %v2526
        %2586 = vmatprep.subr.bf16.mxu0 %v2531
        %2587 = vmatpush1.bf16.msra.mxu0 %v2530
        %2588 = vmatprep.subr.bf16.mxu0 %v2535
        %2589 = vmatpush1.bf16.msra.mxu0 %v2534
        %2590 = vmatprep.subr.bf16.mxu0 %v2539
        %2591 = vmatpush1.bf16.msra.mxu0 %v2538
        %2592 = vmatprep.subr.bf16.mxu0 %v2543
        %2593 = vmatpush1.bf16.msra.mxu0 %v2542
        %2594 = vmatprep.subr.bf16.mxu0 0
        %2595 = vmatpush1.bf16.msra.mxu0 0
        %2596 = vmatprep.subr.bf16.mxu0 0
        %2597 = vmatpush1.bf16.msra.mxu0 0
        %2598 = vmatprep.subr.bf16.mxu0 0
        %2599 = vmatpush1.bf16.msra.mxu0 0
        %2600 = vmatprep.subr.bf16.mxu0 0
        %2601 = vmatpush1.bf16.msra.mxu0 0
        %2602 = vmatprep.subr.bf16.mxu0 0
        %2603 = vmatpush1.bf16.msra.mxu0 0
        %2604 = vmatprep.subr.bf16.mxu0 0
        %2605 = vmatpush1.bf16.msra.mxu0 0
        %2606 = vmatprep.subr.bf16.mxu0 0
        %2607 = vmatpush1.bf16.msra.mxu0 0
        %2608 = vmatprep.subr.bf16.mxu0 0
        %2609 = vmatpush1.bf16.msra.mxu0 0
        %2610 = vmatprep.mubr.bf16.mxu0 0
        %2611 = vmatmul.mubr.bf16.gmra.mrb[0].mxu0 %v2361
        %v2612 = vpop.f32.mrb[0].mxu0
        %v2613 = vadd.f32 %v2401, %v2612
        %v2614 = vpop.f32.mrb[0].mxu0
        %v2615 = vadd.f32 %v2405, %v2614
        %v2616 = vpop.f32.mrb[0].mxu0
        %v2617 = vpop.f32.mrb[0].mxu0
        %2618 = vdwg.mxu0
        %2619 = vmatprep.subr.bf16.mxu0 %v2517
        %2620 = vmatpush1.bf16.msra.mxu0 %v2516
        %2621 = vmatprep.subr.bf16.mxu0 %v2521
        %2622 = vmatpush1.bf16.msra.mxu0 %v2520
        %2623 = vmatprep.subr.bf16.mxu0 %v2525
        %2624 = vmatpush1.bf16.msra.mxu0 %v2524
        %2625 = vmatprep.subr.bf16.mxu0 %v2529
        %2626 = vmatpush1.bf16.msra.mxu0 %v2528
        %2627 = vmatprep.subr.bf16.mxu0 %v2533
        %2628 = vmatpush1.bf16.msra.mxu0 %v2532
        %2629 = vmatprep.subr.bf16.mxu0 %v2537
        %2630 = vmatpush1.bf16.msra.mxu0 %v2536
        %2631 = vmatprep.subr.bf16.mxu0 %v2541
        %2632 = vmatpush1.bf16.msra.mxu0 %v2540
        %2633 = vmatprep.subr.bf16.mxu0 %v2545
        %2634 = vmatpush1.bf16.msra.mxu0 %v2544
        %2635 = vmatprep.subr.bf16.mxu0 0
        %2636 = vmatpush1.bf16.msra.mxu0 0
        %2637 = vmatprep.subr.bf16.mxu0 0
        %2638 = vmatpush1.bf16.msra.mxu0 0
        %2639 = vmatprep.subr.bf16.mxu0 0
        %2640 = vmatpush1.bf16.msra.mxu0 0
        %2641 = vmatprep.subr.bf16.mxu0 0
        %2642 = vmatpush1.bf16.msra.mxu0 0
        %2643 = vmatprep.subr.bf16.mxu0 0
        %2644 = vmatpush1.bf16.msra.mxu0 0
        %2645 = vmatprep.subr.bf16.mxu0 0
        %2646 = vmatpush1.bf16.msra.mxu0 0
        %2647 = vmatprep.subr.bf16.mxu0 0
        %2648 = vmatpush1.bf16.msra.mxu0 0
        %2649 = vmatprep.subr.bf16.mxu0 0
        %2650 = vmatpush1.bf16.msra.mxu0 0
        %2651 = vmatprep.mubr.bf16.mxu0 0
        %2652 = vmatmul.mubr.bf16.gmra.mrb[0].mxu0 %v2361
        %v2653 = vpop.f32.mrb[0].mxu0
        %v2654 = vadd.f32 %v2409, %v2653
        %v2655 = vpop.f32.mrb[0].mxu0
        %v2656 = vadd.f32 %v2413, %v2655
        %v2657 = vpop.f32.mrb[0].mxu0
        %v2658 = vpop.f32.mrb[0].mxu0
        %2659 = vdwg.mxu0
        %v2660 = vmax.f32 %v2613, 0.0
        %v2661 = vmax.f32 %v2615, 0.0
        %v2662 = vmax.f32 %v2654, 0.0
        %v2663 = vmax.f32 %v2656, 0.0
        %v2664 = vpack.c.bf16 %v2660, %v2660
        %v2665 = vpack.c.bf16 %v2661, %v2661
        %v2666 = vpack.c.bf16 %v2662, %v2662
        %v2667 = vpack.c.bf16 %v2663, %v2663
        %s2668 = scalar_lea.vmem %s4, 256
        %v2669 = vld [vmem:[%s2668] sm:$0xf]
        %v2670 = vld [vmem:[%s2668 + $0x4] sm:$0xf]
        %v2671 = vld [vmem:[%s2668 + $0x8] sm:$0xf]
        %v2672 = vld [vmem:[%s2668 + $0xc] sm:$0xf]
        %v2673 = vld [vmem:[%s2668 + $0x10] sm:$0xf]
        %v2674 = vld [vmem:[%s2668 + $0x14] sm:$0xf]
        %v2675 = vld [vmem:[%s2668 + $0x18] sm:$0xf]
        %v2676 = vld [vmem:[%s2668 + $0x1c] sm:$0xf]
        %v2677 = vld [vmem:[%s2668 + $0x20] sm:$0xf]
        %v2678 = vld [vmem:[%s2668 + $0x24] sm:$0xf]
        %v2679 = vld [vmem:[%s2668 + $0x28] sm:$0xf]
        %v2680 = vld [vmem:[%s2668 + $0x2c] sm:$0xf]
        %v2681 = vld [vmem:[%s2668 + $0x30] sm:$0xf]
        %v2682 = vld [vmem:[%s2668 + $0x34] sm:$0xf]
        %v2683 = vld [vmem:[%s2668 + $0x38] sm:$0xf]
        %v2684 = vld [vmem:[%s2668 + $0x3c] sm:$0xf]
        %v2685 = vld [vmem:[%s2668 + $0x40] sm:$0xf]
        %v2686 = vld [vmem:[%s2668 + $0x44] sm:$0xf]
        %v2687 = vld [vmem:[%s2668 + $0x48] sm:$0xf]
        %v2688 = vld [vmem:[%s2668 + $0x4c] sm:$0xf]
        %v2689 = vld [vmem:[%s2668 + $0x50] sm:$0xf]
        %v2690 = vld [vmem:[%s2668 + $0x54] sm:$0xf]
        %v2691 = vld [vmem:[%s2668 + $0x58] sm:$0xf]
        %v2692 = vld [vmem:[%s2668 + $0x5c] sm:$0xf]
        %v2693 = vld [vmem:[%s2668 + $0x60] sm:$0xf]
        %v2694 = vld [vmem:[%s2668 + $0x64] sm:$0xf]
        %v2695 = vld [vmem:[%s2668 + $0x68] sm:$0xf]
        %v2696 = vld [vmem:[%s2668 + $0x6c] sm:$0xf]
        %v2697 = vld [vmem:[%s2668 + $0x70] sm:$0xf]
        %v2698 = vld [vmem:[%s2668 + $0x74] sm:$0xf]
        %v2699 = vld [vmem:[%s2668 + $0x78] sm:$0xf]
        %v2700 = vld [vmem:[%s2668 + $0x7c] sm:$0xf]
        %v2701 = vld [vmem:[%s2668 + $0x80] sm:$0xf]
        %v2702 = vld [vmem:[%s2668 + $0x84] sm:$0xf]
        %v2703 = vld [vmem:[%s2668 + $0x88] sm:$0xf]
        %v2704 = vld [vmem:[%s2668 + $0x8c] sm:$0xf]
        %v2705 = vld [vmem:[%s2668 + $0x90] sm:$0xf]
        %v2706 = vld [vmem:[%s2668 + $0x94] sm:$0xf]
        %v2707 = vld [vmem:[%s2668 + $0x98] sm:$0xf]
        %v2708 = vld [vmem:[%s2668 + $0x9c] sm:$0xf]
        %v2709 = vld [vmem:[%s2668 + $0xa0] sm:$0xf]
        %v2710 = vld [vmem:[%s2668 + $0xa4] sm:$0xf]
        %v2711 = vld [vmem:[%s2668 + $0xa8] sm:$0xf]
        %v2712 = vld [vmem:[%s2668 + $0xac] sm:$0xf]
        %v2713 = vld [vmem:[%s2668 + $0xb0] sm:$0xf]
        %v2714 = vld [vmem:[%s2668 + $0xb4] sm:$0xf]
        %v2715 = vld [vmem:[%s2668 + $0xb8] sm:$0xf]
        %v2716 = vld [vmem:[%s2668 + $0xbc] sm:$0xf]
        %v2717 = vld [vmem:[%s2668 + $0xc0] sm:$0xf]
        %v2718 = vld [vmem:[%s2668 + $0xc4] sm:$0xf]
        %v2719 = vld [vmem:[%s2668 + $0xc8] sm:$0xf]
        %v2720 = vld [vmem:[%s2668 + $0xcc] sm:$0xf]
        %v2721 = vld [vmem:[%s2668 + $0xd0] sm:$0xf]
        %v2722 = vld [vmem:[%s2668 + $0xd4] sm:$0xf]
        %v2723 = vld [vmem:[%s2668 + $0xd8] sm:$0xf]
        %v2724 = vld [vmem:[%s2668 + $0xdc] sm:$0xf]
        %v2725 = vld [vmem:[%s2668 + $0xe0] sm:$0xf]
        %v2726 = vld [vmem:[%s2668 + $0xe4] sm:$0xf]
        %v2727 = vld [vmem:[%s2668 + $0xe8] sm:$0xf]
        %v2728 = vld [vmem:[%s2668 + $0xec] sm:$0xf]
        %v2729 = vld [vmem:[%s2668 + $0xf0] sm:$0xf]
        %v2730 = vld [vmem:[%s2668 + $0xf4] sm:$0xf]
        %v2731 = vld [vmem:[%s2668 + $0xf8] sm:$0xf]
        %v2732 = vld [vmem:[%s2668 + $0xfc] sm:$0xf]
        %v2733 = vld [vmem:[%s5 + $0x7] sm:$0x1]
        %v2734 = vlaneseq
        %v2735 = vshrl.u32 %v2734, 7
        %v2736 = vsub.s32 0, %v2735
        %v2737 = vrot.slane %v2733, %v2736
        %v2802 = vunpack.c.l.b16 %v2669
        %v2803 = vunpack.c.l.b16 %v2670
        %v2804 = vunpack.c.l.b16 %v2671
        %v2805 = vunpack.c.l.b16 %v2672
        %v2806 = vunpack.c.l.b16 %v2673
        %v2807 = vunpack.c.l.b16 %v2674
        %v2808 = vunpack.c.l.b16 %v2675
        %v2809 = vunpack.c.l.b16 %v2676
        %v2810 = vunpack.c.l.b16 %v2677
        %v2811 = vunpack.c.l.b16 %v2678
        %v2812 = vunpack.c.l.b16 %v2679
        %v2813 = vunpack.c.l.b16 %v2680
        %v2814 = vunpack.c.l.b16 %v2681
        %v2815 = vunpack.c.l.b16 %v2682
        %v2816 = vunpack.c.l.b16 %v2683
        %v2817 = vunpack.c.l.b16 %v2684
        %v2818 = vunpack.c.l.b16 %v2685
        %v2819 = vunpack.c.l.b16 %v2686
        %v2820 = vunpack.c.l.b16 %v2687
        %v2821 = vunpack.c.l.b16 %v2688
        %v2822 = vunpack.c.l.b16 %v2689
        %v2823 = vunpack.c.l.b16 %v2690
        %v2824 = vunpack.c.l.b16 %v2691
        %v2825 = vunpack.c.l.b16 %v2692
        %v2826 = vunpack.c.l.b16 %v2693
        %v2827 = vunpack.c.l.b16 %v2694
        %v2828 = vunpack.c.l.b16 %v2695
        %v2829 = vunpack.c.l.b16 %v2696
        %v2830 = vunpack.c.l.b16 %v2697
        %v2831 = vunpack.c.l.b16 %v2698
        %v2832 = vunpack.c.l.b16 %v2699
        %v2833 = vunpack.c.l.b16 %v2700
        %v2834 = vunpack.c.l.b16 %v2701
        %v2835 = vunpack.c.l.b16 %v2702
        %v2836 = vunpack.c.l.b16 %v2703
        %v2837 = vunpack.c.l.b16 %v2704
        %v2838 = vunpack.c.l.b16 %v2705
        %v2839 = vunpack.c.l.b16 %v2706
        %v2840 = vunpack.c.l.b16 %v2707
        %v2841 = vunpack.c.l.b16 %v2708
        %v2842 = vunpack.c.l.b16 %v2709
        %v2843 = vunpack.c.l.b16 %v2710
        %v2844 = vunpack.c.l.b16 %v2711
        %v2845 = vunpack.c.l.b16 %v2712
        %v2846 = vunpack.c.l.b16 %v2713
        %v2847 = vunpack.c.l.b16 %v2714
        %v2848 = vunpack.c.l.b16 %v2715
        %v2849 = vunpack.c.l.b16 %v2716
        %v2850 = vunpack.c.l.b16 %v2717
        %v2851 = vunpack.c.l.b16 %v2718
        %v2852 = vunpack.c.l.b16 %v2719
        %v2853 = vunpack.c.l.b16 %v2720
        %v2854 = vunpack.c.l.b16 %v2721
        %v2855 = vunpack.c.l.b16 %v2722
        %v2856 = vunpack.c.l.b16 %v2723
        %v2857 = vunpack.c.l.b16 %v2724
        %v2858 = vunpack.c.l.b16 %v2725
        %v2859 = vunpack.c.l.b16 %v2726
        %v2860 = vunpack.c.l.b16 %v2727
        %v2861 = vunpack.c.l.b16 %v2728
        %v2862 = vunpack.c.l.b16 %v2729
        %v2863 = vunpack.c.l.b16 %v2730
        %v2864 = vunpack.c.l.b16 %v2731
        %v2865 = vunpack.c.l.b16 %v2732
        %v2866 = vpack.c.b16 %v2803, %v2802
        %v2867 = vpack.c.b16 %v2805, %v2804
        %v2868 = vpack.c.b16 %v2807, %v2806
        %v2869 = vpack.c.b16 %v2809, %v2808
        %v2870 = vpack.c.b16 %v2811, %v2810
        %v2871 = vpack.c.b16 %v2813, %v2812
        %v2872 = vpack.c.b16 %v2815, %v2814
        %v2873 = vpack.c.b16 %v2817, %v2816
        %v2874 = vpack.c.b16 %v2819, %v2818
        %v2875 = vpack.c.b16 %v2821, %v2820
        %v2876 = vpack.c.b16 %v2823, %v2822
        %v2877 = vpack.c.b16 %v2825, %v2824
        %v2878 = vpack.c.b16 %v2827, %v2826
        %v2879 = vpack.c.b16 %v2829, %v2828
        %v2880 = vpack.c.b16 %v2831, %v2830
        %v2881 = vpack.c.b16 %v2833, %v2832
        %v2882 = vpack.c.b16 %v2835, %v2834
        %v2883 = vpack.c.b16 %v2837, %v2836
        %v2884 = vpack.c.b16 %v2839, %v2838
        %v2885 = vpack.c.b16 %v2841, %v2840
        %v2886 = vpack.c.b16 %v2843, %v2842
        %v2887 = vpack.c.b16 %v2845, %v2844
        %v2888 = vpack.c.b16 %v2847, %v2846
        %v2889 = vpack.c.b16 %v2849, %v2848
        %v2890 = vpack.c.b16 %v2851, %v2850
        %v2891 = vpack.c.b16 %v2853, %v2852
        %v2892 = vpack.c.b16 %v2855, %v2854
        %v2893 = vpack.c.b16 %v2857, %v2856
        %v2894 = vpack.c.b16 %v2859, %v2858
        %v2895 = vpack.c.b16 %v2861, %v2860
        %v2896 = vpack.c.b16 %v2863, %v2862
        %v2897 = vpack.c.b16 %v2865, %v2864
        %2930 = vmatprep.subr.bf16.mxu0 0
        %2931 = vmatpush1.bf16.msra.mxu0 %v2866
        %2932 = vmatprep.subr.bf16.mxu0 0
        %2933 = vmatpush1.bf16.msra.mxu0 %v2867
        %2934 = vmatprep.subr.bf16.mxu0 0
        %2935 = vmatpush1.bf16.msra.mxu0 %v2868
        %2936 = vmatprep.subr.bf16.mxu0 0
        %2937 = vmatpush1.bf16.msra.mxu0 %v2869
        %2938 = vmatprep.subr.bf16.mxu0 0
        %2939 = vmatpush1.bf16.msra.mxu0 %v2870
        %2940 = vmatprep.subr.bf16.mxu0 0
        %2941 = vmatpush1.bf16.msra.mxu0 %v2871
        %2942 = vmatprep.subr.bf16.mxu0 0
        %2943 = vmatpush1.bf16.msra.mxu0 %v2872
        %2944 = vmatprep.subr.bf16.mxu0 0
        %2945 = vmatpush1.bf16.msra.mxu0 %v2873
        %2946 = vmatprep.subr.bf16.mxu0 0
        %2947 = vmatpush1.bf16.msra.mxu0 %v2874
        %2948 = vmatprep.subr.bf16.mxu0 0
        %2949 = vmatpush1.bf16.msra.mxu0 %v2875
        %2950 = vmatprep.subr.bf16.mxu0 0
        %2951 = vmatpush1.bf16.msra.mxu0 %v2876
        %2952 = vmatprep.subr.bf16.mxu0 0
        %2953 = vmatpush1.bf16.msra.mxu0 %v2877
        %2954 = vmatprep.subr.bf16.mxu0 0
        %2955 = vmatpush1.bf16.msra.mxu0 %v2878
        %2956 = vmatprep.subr.bf16.mxu0 0
        %2957 = vmatpush1.bf16.msra.mxu0 %v2879
        %2958 = vmatprep.subr.bf16.mxu0 0
        %2959 = vmatpush1.bf16.msra.mxu0 %v2880
        %2960 = vmatprep.subr.bf16.mxu0 0
        %2961 = vmatpush1.bf16.msra.mxu0 %v2881
        %2962 = vmatprep.mubr.bf16.mxu0 %v2665
        %2963 = vmatmul.mubr.bf16.gmra.mrb[0].mxu0 %v2664
        %v2964 = vpop.f32.mrb[0].mxu0
        %v2965 = vadd.f32 %v2737, %v2964
        %v2966 = vpop.f32.mrb[0].mxu0
        %v2967 = vpop.f32.mrb[0].mxu0
        %v2968 = vpop.f32.mrb[0].mxu0
        %2969 = vdwg.mxu0
        %2970 = vmatprep.subr.bf16.mxu0 0
        %2971 = vmatpush1.bf16.msra.mxu0 %v2882
        %2972 = vmatprep.subr.bf16.mxu0 0
        %2973 = vmatpush1.bf16.msra.mxu0 %v2883
        %2974 = vmatprep.subr.bf16.mxu0 0
        %2975 = vmatpush1.bf16.msra.mxu0 %v2884
        %2976 = vmatprep.subr.bf16.mxu0 0
        %2977 = vmatpush1.bf16.msra.mxu0 %v2885
        %2978 = vmatprep.subr.bf16.mxu0 0
        %2979 = vmatpush1.bf16.msra.mxu0 %v2886
        %2980 = vmatprep.subr.bf16.mxu0 0
        %2981 = vmatpush1.bf16.msra.mxu0 %v2887
        %2982 = vmatprep.subr.bf16.mxu0 0
        %2983 = vmatpush1.bf16.msra.mxu0 %v2888
        %2984 = vmatprep.subr.bf16.mxu0 0
        %2985 = vmatpush1.bf16.msra.mxu0 %v2889
        %2986 = vmatprep.subr.bf16.mxu0 0
        %2987 = vmatpush1.bf16.msra.mxu0 %v2890
        %2988 = vmatprep.subr.bf16.mxu0 0
        %2989 = vmatpush1.bf16.msra.mxu0 %v2891
        %2990 = vmatprep.subr.bf16.mxu0 0
        %2991 = vmatpush1.bf16.msra.mxu0 %v2892
        %2992 = vmatprep.subr.bf16.mxu0 0
        %2993 = vmatpush1.bf16.msra.mxu0 %v2893
        %2994 = vmatprep.subr.bf16.mxu0 0
        %2995 = vmatpush1.bf16.msra.mxu0 %v2894
        %2996 = vmatprep.subr.bf16.mxu0 0
        %2997 = vmatpush1.bf16.msra.mxu0 %v2895
        %2998 = vmatprep.subr.bf16.mxu0 0
        %2999 = vmatpush1.bf16.msra.mxu0 %v2896
        %3000 = vmatprep.subr.bf16.mxu0 0
        %3001 = vmatpush1.bf16.msra.mxu0 %v2897
        %3002 = vmatprep.mubr.bf16.mxu0 %v2667
        %3003 = vmatmul.mubr.bf16.gmra.mrb[0].mxu0 %v2666
        %v3004 = vpop.f32.mrb[0].mxu0
        %v3005 = vadd.f32 %v2965, %v3004
        %v3006 = vpop.f32.mrb[0].mxu0
        %v3007 = vpop.f32.mrb[0].mxu0
        %v3008 = vpop.f32.mrb[0].mxu0
        %3009 = vdwg.mxu0
        %v3010 = vadd.f32 %v3005, %v2360
        %v3011 = vld [vmem:[%s5 + $0x8] sm:$0x1]
        %v3012 = vld [vmem:[%s5 + $0x9] sm:$0x1]
        %3013 = vadd.xlane.f32.xlu0 %v3010
        %v3014 = vpop.xlane.xlu0 %3013
        %v3015 = vmul.f32 %v3014, %v961
        %v3016 = vmul.f32 %v3010, %v3010
        %3017 = vadd.xlane.f32.xlu0 %v3016
        %v3018 = vpop.xlane.xlu0 %3017
        %v3019 = vmul.f32 %v3018, %v961
        %v3020 = vmul.f32 %v3015, %v3015
        %v3021 = vsub.f32 %v3019, %v3020
        %v3022 = vsub.f32 %v3010, %v3015
        %v3023 = vadd.f32 %v3021, 1e-06
        %v3024 = vrsqrt.pop %v3023
        %v3025 = vmul.f32 %v3022, %v3024
        %v3026 = vlaneseq
        %v3027 = vshrl.u32 %v3026, 7
        %v3028 = vsub.s32 0, %v3027
        %v3029 = vrot.slane %v3011, %v3028
        %v3030 = vmul.f32 %v3025, %v3029
        %v3031 = vlaneseq
        %v3032 = vshrl.u32 %v3031, 7
        %v3033 = vsub.s32 0, %v3032
        %v3034 = vrot.slane %v3012, %v3033
        %v3035 = vadd.f32 %v3030, %v3034
        %v3036 = vpack.c.bf16 %v3035, %v3035
        %s3037 = scalar_lea.vmem %s1, 384
        %v3038 = vld [vmem:[%s3037] sm:$0xff]
        %v3039 = vld [vmem:[%s3037 + $0x8] sm:$0xf]
        %v3040 = vld [vmem:[%s3037 + $0xc] sm:$0xff]
        %v3041 = vld [vmem:[%s3037 + $0x14] sm:$0xf]
        %v3042 = vld [vmem:[%s3037 + $0x18] sm:$0xff]
        %v3043 = vld [vmem:[%s3037 + $0x20] sm:$0xf]
        %v3044 = vld [vmem:[%s3037 + $0x24] sm:$0xff]
        %v3045 = vld [vmem:[%s3037 + $0x2c] sm:$0xf]
        %v3046 = vld [vmem:[%s3037 + $0x30] sm:$0xff]
        %v3047 = vld [vmem:[%s3037 + $0x38] sm:$0xf]
        %v3048 = vld [vmem:[%s3037 + $0x3c] sm:$0xff]
        %v3049 = vld [vmem:[%s3037 + $0x44] sm:$0xf]
        %v3050 = vld [vmem:[%s3037 + $0x48] sm:$0xff]
        %v3051 = vld [vmem:[%s3037 + $0x50] sm:$0xf]
        %v3052 = vld [vmem:[%s3037 + $0x54] sm:$0xff]
        %v3053 = vld [vmem:[%s3037 + $0x5c] sm:$0xf]
        %v3054 = vld [vmem:[%s3037 + $0x60] sm:$0xff]
        %v3055 = vld [vmem:[%s3037 + $0x68] sm:$0xf]
        %v3056 = vld [vmem:[%s3037 + $0x6c] sm:$0xff]
        %v3057 = vld [vmem:[%s3037 + $0x74] sm:$0xf]
        %v3058 = vld [vmem:[%s3037 + $0x78] sm:$0xff]
        %v3059 = vld [vmem:[%s3037 + $0x80] sm:$0xf]
        %v3060 = vld [vmem:[%s3037 + $0x84] sm:$0xff]
        %v3061 = vld [vmem:[%s3037 + $0x8c] sm:$0xf]
        %v3062 = vld [vmem:[%s3037 + $0x90] sm:$0xff]
        %v3063 = vld [vmem:[%s3037 + $0x98] sm:$0xf]
        %v3064 = vld [vmem:[%s3037 + $0x9c] sm:$0xff]
        %v3065 = vld [vmem:[%s3037 + $0xa4] sm:$0xf]
        %v3066 = vld [vmem:[%s3037 + $0xa8] sm:$0xff]
        %v3067 = vld [vmem:[%s3037 + $0xb0] sm:$0xf]
        %v3068 = vld [vmem:[%s3037 + $0xb4] sm:$0xff]
        %v3069 = vld [vmem:[%s3037 + $0xbc] sm:$0xf]
        %v3102 = vunpack.c.l.b16 %v3038
        %v3103 = vunpack.c.h.b16 %v3038
        %v3104 = vunpack.c.l.b16 %v3039
        %v3105 = vunpack.c.l.b16 %v3040
        %v3106 = vunpack.c.h.b16 %v3040
        %v3107 = vunpack.c.l.b16 %v3041
        %v3108 = vunpack.c.l.b16 %v3042
        %v3109 = vunpack.c.h.b16 %v3042
        %v3110 = vunpack.c.l.b16 %v3043
        %v3111 = vunpack.c.l.b16 %v3044
        %v3112 = vunpack.c.h.b16 %v3044
        %v3113 = vunpack.c.l.b16 %v3045
        %v3114 = vunpack.c.l.b16 %v3046
        %v3115 = vunpack.c.h.b16 %v3046
        %v3116 = vunpack.c.l.b16 %v3047
        %v3117 = vunpack.c.l.b16 %v3048
        %v3118 = vunpack.c.h.b16 %v3048
        %v3119 = vunpack.c.l.b16 %v3049
        %v3120 = vunpack.c.l.b16 %v3050
        %v3121 = vunpack.c.h.b16 %v3050
        %v3122 = vunpack.c.l.b16 %v3051
        %v3123 = vunpack.c.l.b16 %v3052
        %v3124 = vunpack.c.h.b16 %v3052
        %v3125 = vunpack.c.l.b16 %v3053
        %v3126 = vunpack.c.l.b16 %v3054
        %v3127 = vunpack.c.h.b16 %v3054
        %v3128 = vunpack.c.l.b16 %v3055
        %v3129 = vunpack.c.l.b16 %v3056
        %v3130 = vunpack.c.h.b16 %v3056
        %v3131 = vunpack.c.l.b16 %v3057
        %v3132 = vunpack.c.l.b16 %v3058
        %v3133 = vunpack.c.h.b16 %v3058
        %v3134 = vunpack.c.l.b16 %v3059
        %v3135 = vunpack.c.l.b16 %v3060
        %v3136 = vunpack.c.h.b16 %v3060
        %v3137 = vunpack.c.l.b16 %v3061
        %v3138 = vunpack.c.l.b16 %v3062
        %v3139 = vunpack.c.h.b16 %v3062
        %v3140 = vunpack.c.l.b16 %v3063
        %v3141 = vunpack.c.l.b16 %v3064
        %v3142 = vunpack.c.h.b16 %v3064
        %v3143 = vunpack.c.l.b16 %v3065
        %v3144 = vunpack.c.l.b16 %v3066
        %v3145 = vunpack.c.h.b16 %v3066
        %v3146 = vunpack.c.l.b16 %v3067
        %v3147 = vunpack.c.l.b16 %v3068
        %v3148 = vunpack.c.h.b16 %v3068
        %v3149 = vunpack.c.l.b16 %v3069
        %v3150 = vpack.c.b16 %v3105, %v3102
        %v3151 = vpack.c.b16 %v3106, %v3103
        %v3152 = vpack.c.b16 %v3107, %v3104
        %v3153 = vpack.c.b16 %v3111, %v3108
        %v3154 = vpack.c.b16 %v3112, %v3109
        %v3155 = vpack.c.b16 %v3113, %v3110
        %v3156 = vpack.c.b16 %v3117, %v3114
        %v3157 = vpack.c.b16 %v3118, %v3115
        %v3158 = vpack.c.b16 %v3119, %v3116
        %v3159 = vpack.c.b16 %v3123, %v3120
        %v3160 = vpack.c.b16 %v3124, %v3121
        %v3161 = vpack.c.b16 %v3125, %v3122
        %v3162 = vpack.c.b16 %v3129, %v3126
        %v3163 = vpack.c.b16 %v3130, %v3127
        %v3164 = vpack.c.b16 %v3131, %v3128
        %v3165 = vpack.c.b16 %v3135, %v3132
        %v3166 = vpack.c.b16 %v3136, %v3133
        %v3167 = vpack.c.b16 %v3137, %v3134
        %v3168 = vpack.c.b16 %v3141, %v3138
        %v3169 = vpack.c.b16 %v3142, %v3139
        %v3170 = vpack.c.b16 %v3143, %v3140
        %v3171 = vpack.c.b16 %v3147, %v3144
        %v3172 = vpack.c.b16 %v3148, %v3145
        %v3173 = vpack.c.b16 %v3149, %v3146
        %3198 = vmatprep.subr.bf16.mxu0 %v3151
        %3199 = vmatpush1.bf16.msra.mxu0 %v3150
        %3200 = vmatprep.subr.bf16.mxu0 %v3154
        %3201 = vmatpush1.bf16.msra.mxu0 %v3153
        %3202 = vmatprep.subr.bf16.mxu0 %v3157
        %3203 = vmatpush1.bf16.msra.mxu0 %v3156
        %3204 = vmatprep.subr.bf16.mxu0 %v3160
        %3205 = vmatpush1.bf16.msra.mxu0 %v3159
        %3206 = vmatprep.subr.bf16.mxu0 %v3163
        %3207 = vmatpush1.bf16.msra.mxu0 %v3162
        %3208 = vmatprep.subr.bf16.mxu0 %v3166
        %3209 = vmatpush1.bf16.msra.mxu0 %v3165
        %3210 = vmatprep.subr.bf16.mxu0 %v3169
        %3211 = vmatpush1.bf16.msra.mxu0 %v3168
        %3212 = vmatprep.subr.bf16.mxu0 %v3172
        %3213 = vmatpush1.bf16.msra.mxu0 %v3171
        %3214 = vmatprep.subr.bf16.mxu0 0
        %3215 = vmatpush1.bf16.msra.mxu0 0
        %3216 = vmatprep.subr.bf16.mxu0 0
        %3217 = vmatpush1.bf16.msra.mxu0 0
        %3218 = vmatprep.subr.bf16.mxu0 0
        %3219 = vmatpush1.bf16.msra.mxu0 0
        %3220 = vmatprep.subr.bf16.mxu0 0
        %3221 = vmatpush1.bf16.msra.mxu0 0
        %3222 = vmatprep.subr.bf16.mxu0 0
        %3223 = vmatpush1.bf16.msra.mxu0 0
        %3224 = vmatprep.subr.bf16.mxu0 0
        %3225 = vmatpush1.bf16.msra.mxu0 0
        %3226 = vmatprep.subr.bf16.mxu0 0
        %3227 = vmatpush1.bf16.msra.mxu0 0
        %3228 = vmatprep.subr.bf16.mxu0 0
        %3229 = vmatpush1.bf16.msra.mxu0 0
        %3230 = vmatprep.mubr.bf16.mxu0 0
        %3231 = vmatmul.mubr.bf16.gmra.mrb[0].mxu0 %v3036
        %v3232 = vpop.f32.mrb[0].mxu0
        %v3233 = vadd.f32 0.0, %v3232
        %v3234 = vpop.f32.mrb[0].mxu0
        %v3235 = vadd.f32 0.0, %v3234
        %v3236 = vpop.f32.mrb[0].mxu0
        %v3237 = vpop.f32.mrb[0].mxu0
        %3238 = vdwg.mxu0
        %3239 = vmatprep.subr.bf16.mxu0 0
        %3240 = vmatpush1.bf16.msra.mxu0 %v3152
        %3241 = vmatprep.subr.bf16.mxu0 0
        %3242 = vmatpush1.bf16.msra.mxu0 %v3155
        %3243 = vmatprep.subr.bf16.mxu0 0
        %3244 = vmatpush1.bf16.msra.mxu0 %v3158
        %3245 = vmatprep.subr.bf16.mxu0 0
        %3246 = vmatpush1.bf16.msra.mxu0 %v3161
        %3247 = vmatprep.subr.bf16.mxu0 0
        %3248 = vmatpush1.bf16.msra.mxu0 %v3164
        %3249 = vmatprep.subr.bf16.mxu0 0
        %3250 = vmatpush1.bf16.msra.mxu0 %v3167
        %3251 = vmatprep.subr.bf16.mxu0 0
        %3252 = vmatpush1.bf16.msra.mxu0 %v3170
        %3253 = vmatprep.subr.bf16.mxu0 0
        %3254 = vmatpush1.bf16.msra.mxu0 %v3173
        %3255 = vmatprep.subr.bf16.mxu0 0
        %3256 = vmatpush1.bf16.msra.mxu0 0
        %3257 = vmatprep.subr.bf16.mxu0 0
        %3258 = vmatpush1.bf16.msra.mxu0 0
        %3259 = vmatprep.subr.bf16.mxu0 0
        %3260 = vmatpush1.bf16.msra.mxu0 0
        %3261 = vmatprep.subr.bf16.mxu0 0
        %3262 = vmatpush1.bf16.msra.mxu0 0
        %3263 = vmatprep.subr.bf16.mxu0 0
        %3264 = vmatpush1.bf16.msra.mxu0 0
        %3265 = vmatprep.subr.bf16.mxu0 0
        %3266 = vmatpush1.bf16.msra.mxu0 0
        %3267 = vmatprep.subr.bf16.mxu0 0
        %3268 = vmatpush1.bf16.msra.mxu0 0
        %3269 = vmatprep.subr.bf16.mxu0 0
        %3270 = vmatpush1.bf16.msra.mxu0 0
        %3271 = vmatprep.mubr.bf16.mxu0 0
        %3272 = vmatmul.mubr.bf16.gmra.mrb[0].mxu0 %v3036
        %v3273 = vpop.f32.mrb[0].mxu0
        %v3274 = vadd.f32 0.0, %v3273
        %v3275 = vpop.f32.mrb[0].mxu0
        %v3276 = vpop.f32.mrb[0].mxu0
        %v3277 = vpop.f32.mrb[0].mxu0
        %3278 = vdwg.mxu0
        %v3279 = vmul.f32 %v3233, 0.125
        %v3281 = vsel %vm519, %v3279, 0
        %v3284 = vsel %vm519, %v3235, 0
        %3286 = vmatprep.subr.mxu0 0.0
        %3287 = vmatpush1.xpose.msra.mxu0 %v3284
        %3288 = vmatprep.subr.mxu0 0.0
        %3289 = vmatpush1.xpose.msra.mxu0 0.0
        %3290 = vmatprep.subr.mxu0 0.0
        %3291 = vmatpush1.xpose.msra.mxu0 0.0
        %3292 = vmatprep.subr.mxu0 0.0
        %3293 = vmatpush1.xpose.msra.mxu0 0.0
        %3294 = vmatprep.subr.mxu0 0.0
        %3295 = vmatpush1.xpose.msra.mxu0 0.0
        %3296 = vmatprep.subr.mxu0 0.0
        %3297 = vmatpush1.xpose.msra.mxu0 0.0
        %3298 = vmatprep.subr.mxu0 0.0
        %3299 = vmatpush1.xpose.msra.mxu0 0.0
        %3300 = vmatprep.subr.mxu0 0.0
        %3301 = vmatpush1.xpose.msra.mxu0 0.0
        %3302 = vmatprep.subr.mxu0 0.0
        %3303 = vmatpush1.xpose.msra.mxu0 0.0
        %3304 = vmatprep.subr.mxu0 0.0
        %3305 = vmatpush1.xpose.msra.mxu0 0.0
        %3306 = vmatprep.subr.mxu0 0.0
        %3307 = vmatpush1.xpose.msra.mxu0 0.0
        %3308 = vmatprep.subr.mxu0 0.0
        %3309 = vmatpush1.xpose.msra.mxu0 0.0
        %3310 = vmatprep.subr.mxu0 0.0
        %3311 = vmatpush1.xpose.msra.mxu0 0.0
        %3312 = vmatprep.subr.mxu0 0.0
        %3313 = vmatpush1.xpose.msra.mxu0 0.0
        %3314 = vmatprep.subr.mxu0 0.0
        %3315 = vmatpush1.xpose.msra.mxu0 0.0
        %3316 = vmatprep.subr.mxu0 0.0
        %3317 = vmatpush1.xpose.msra.mxu0 0.0
        %3318 = vmatprep.subr.mxu0 0.0
        %3319 = vmatpush1.xpose.msra.mxu0 0.0
        %3320 = vmatprep.subr.mxu0 0.0
        %3321 = vmatpush1.xpose.msra.mxu0 0.0
        %3322 = vmatprep.subr.mxu0 0.0
        %3323 = vmatpush1.xpose.msra.mxu0 0.0
        %3324 = vmatprep.subr.mxu0 0.0
        %3325 = vmatpush1.xpose.msra.mxu0 0.0
        %3326 = vmatprep.subr.mxu0 0.0
        %3327 = vmatpush1.xpose.msra.mxu0 0.0
        %3328 = vmatprep.subr.mxu0 0.0
        %3329 = vmatpush1.xpose.msra.mxu0 0.0
        %3330 = vmatprep.subr.mxu0 0.0
        %3331 = vmatpush1.xpose.msra.mxu0 0.0
        %3332 = vmatprep.subr.mxu0 0.0
        %3333 = vmatpush1.xpose.msra.mxu0 0.0
        %3334 = vmatprep.subr.mxu0 0.0
        %3335 = vmatpush1.xpose.msra.mxu0 0.0
        %3336 = vmatprep.subr.mxu0 0.0
        %3337 = vmatpush1.xpose.msra.mxu0 0.0
        %3338 = vmatprep.subr.mxu0 0.0
        %3339 = vmatpush1.xpose.msra.mxu0 0.0
        %3340 = vmatprep.subr.mxu0 0.0
        %3341 = vmatpush1.xpose.msra.mxu0 0.0
        %3342 = vmatprep.subr.mxu0 0.0
        %3343 = vmatpush1.xpose.msra.mxu0 0.0
        %3344 = vmatprep.subr.mxu0 0.0
        %3345 = vmatpush1.xpose.msra.mxu0 0.0
        %3346 = vmatprep.subr.mxu0 0.0
        %3347 = vmatpush1.xpose.msra.mxu0 0.0
        %3348 = vmatprep.subr.mxu0 0.0
        %3349 = vmatpush1.xpose.msra.mxu0 0.0
        %3350 = vmatprep.mubr.f32.mxu0 0.0
        %3351 = vmatmul.mubr.f32.gmra.mrb[0].mxu0 %v3281
        %v3352 = vpop.f32.mrb[0].mxu0
        %v3353 = vadd.f32 0.0, %v3352
        %v3354 = vpop.f32.mrb[0].mxu0
        %3355 = vdwg.mxu0
        %v3356 = vsel %vm596, %v3353, -inf
        %3357 = vmax.xlane.f32.xlu0 %v3356
        %v3358 = vpop.xlane.xlu0 %3357
        %v3359 = vsub.f32 %v3353, %v3358
        %v3360 = vmul.f32 %v3359, 1.442695
        %v3361 = vpow.pop %v3360
        %v3362 = vsel %vm596, %v3361, 0.0
        %3363 = vadd.xlane.f32.xlu0 %v3362
        %v3364 = vpop.xlane.xlu0 %3363
        %v3365 = vrcp.pop %v3364
        %v3366 = vmul.f32 %v3361, %v3365
        %v3368 = vsel %vm596, %v3366, 0
        %3370 = vmatprep.subr.mxu0 0.0
        %3371 = vmatpush1.msra.mxu0 %v3274
        %3372 = vmatprep.subr.mxu0 0.0
        %3373 = vmatpush1.msra.mxu0 0.0
        %3374 = vmatprep.subr.mxu0 0.0
        %3375 = vmatpush1.msra.mxu0 0.0
        %3376 = vmatprep.subr.mxu0 0.0
        %3377 = vmatpush1.msra.mxu0 0.0
        %3378 = vmatprep.subr.mxu0 0.0
        %3379 = vmatpush1.msra.mxu0 0.0
        %3380 = vmatprep.subr.mxu0 0.0
        %3381 = vmatpush1.msra.mxu0 0.0
        %3382 = vmatprep.subr.mxu0 0.0
        %3383 = vmatpush1.msra.mxu0 0.0
        %3384 = vmatprep.subr.mxu0 0.0
        %3385 = vmatpush1.msra.mxu0 0.0
        %3386 = vmatprep.subr.mxu0 0.0
        %3387 = vmatpush1.msra.mxu0 0.0
        %3388 = vmatprep.subr.mxu0 0.0
        %3389 = vmatpush1.msra.mxu0 0.0
        %3390 = vmatprep.subr.mxu0 0.0
        %3391 = vmatpush1.msra.mxu0 0.0
        %3392 = vmatprep.subr.mxu0 0.0
        %3393 = vmatpush1.msra.mxu0 0.0
        %3394 = vmatprep.subr.mxu0 0.0
        %3395 = vmatpush1.msra.mxu0 0.0
        %3396 = vmatprep.subr.mxu0 0.0
        %3397 = vmatpush1.msra.mxu0 0.0
        %3398 = vmatprep.subr.mxu0 0.0
        %3399 = vmatpush1.msra.mxu0 0.0
        %3400 = vmatprep.subr.mxu0 0.0
        %3401 = vmatpush1.msra.mxu0 0.0
        %3402 = vmatprep.subr.mxu0 0.0
        %3403 = vmatpush1.msra.mxu0 0.0
        %3404 = vmatprep.subr.mxu0 0.0
        %3405 = vmatpush1.msra.mxu0 0.0
        %3406 = vmatprep.subr.mxu0 0.0
        %3407 = vmatpush1.msra.mxu0 0.0
        %3408 = vmatprep.subr.mxu0 0.0
        %3409 = vmatpush1.msra.mxu0 0.0
        %3410 = vmatprep.subr.mxu0 0.0
        %3411 = vmatpush1.msra.mxu0 0.0
        %3412 = vmatprep.subr.mxu0 0.0
        %3413 = vmatpush1.msra.mxu0 0.0
        %3414 = vmatprep.subr.mxu0 0.0
        %3415 = vmatpush1.msra.mxu0 0.0
        %3416 = vmatprep.subr.mxu0 0.0
        %3417 = vmatpush1.msra.mxu0 0.0
        %3418 = vmatprep.subr.mxu0 0.0
        %3419 = vmatpush1.msra.mxu0 0.0
        %3420 = vmatprep.subr.mxu0 0.0
        %3421 = vmatpush1.msra.mxu0 0.0
        %3422 = vmatprep.subr.mxu0 0.0
        %3423 = vmatpush1.msra.mxu0 0.0
        %3424 = vmatprep.subr.mxu0 0.0
        %3425 = vmatpush1.msra.mxu0 0.0
        %3426 = vmatprep.subr.mxu0 0.0
        %3427 = vmatpush1.msra.mxu0 0.0
        %3428 = vmatprep.subr.mxu0 0.0
        %3429 = vmatpush1.msra.mxu0 0.0
        %3430 = vmatprep.subr.mxu0 0.0
        %3431 = vmatpush1.msra.mxu0 0.0
        %3432 = vmatprep.subr.mxu0 0.0
        %3433 = vmatpush1.msra.mxu0 0.0
        %3434 = vmatprep.mubr.f32.mxu0 0.0
        %3435 = vmatmul.mubr.f32.gmra.mrb[0].mxu0 %v3368
        %v3436 = vpop.f32.mrb[0].mxu0
        %v3437 = vadd.f32 0.0, %v3436
        %v3438 = vpop.f32.mrb[0].mxu0
        %3439 = vdwg.mxu0
        %3440 = vrot.lane.b32.xlu0 %v3279, 64
        %v3441 = vpop.permute.xlu0 %3440
        %3442 = vrot.lane.b32.xlu0 %v3235, 64
        %v3443 = vpop.permute.xlu0 %3442
        %v3444 = vsel %vm519, %v3441, 0
        %v3446 = vsel %vm519, %v3443, 0
        %3448 = vmatprep.subr.mxu0 0.0
        %3449 = vmatpush1.xpose.msra.mxu0 %v3446
        %3450 = vmatprep.subr.mxu0 0.0
        %3451 = vmatpush1.xpose.msra.mxu0 0.0
        %3452 = vmatprep.subr.mxu0 0.0
        %3453 = vmatpush1.xpose.msra.mxu0 0.0
        %3454 = vmatprep.subr.mxu0 0.0
        %3455 = vmatpush1.xpose.msra.mxu0 0.0
        %3456 = vmatprep.subr.mxu0 0.0
        %3457 = vmatpush1.xpose.msra.mxu0 0.0
        %3458 = vmatprep.subr.mxu0 0.0
        %3459 = vmatpush1.xpose.msra.mxu0 0.0
        %3460 = vmatprep.subr.mxu0 0.0
        %3461 = vmatpush1.xpose.msra.mxu0 0.0
        %3462 = vmatprep.subr.mxu0 0.0
        %3463 = vmatpush1.xpose.msra.mxu0 0.0
        %3464 = vmatprep.subr.mxu0 0.0
        %3465 = vmatpush1.xpose.msra.mxu0 0.0
        %3466 = vmatprep.subr.mxu0 0.0
        %3467 = vmatpush1.xpose.msra.mxu0 0.0
        %3468 = vmatprep.subr.mxu0 0.0
        %3469 = vmatpush1.xpose.msra.mxu0 0.0
        %3470 = vmatprep.subr.mxu0 0.0
        %3471 = vmatpush1.xpose.msra.mxu0 0.0
        %3472 = vmatprep.subr.mxu0 0.0
        %3473 = vmatpush1.xpose.msra.mxu0 0.0
        %3474 = vmatprep.subr.mxu0 0.0
        %3475 = vmatpush1.xpose.msra.mxu0 0.0
        %3476 = vmatprep.subr.mxu0 0.0
        %3477 = vmatpush1.xpose.msra.mxu0 0.0
        %3478 = vmatprep.subr.mxu0 0.0
        %3479 = vmatpush1.xpose.msra.mxu0 0.0
        %3480 = vmatprep.subr.mxu0 0.0
        %3481 = vmatpush1.xpose.msra.mxu0 0.0
        %3482 = vmatprep.subr.mxu0 0.0
        %3483 = vmatpush1.xpose.msra.mxu0 0.0
        %3484 = vmatprep.subr.mxu0 0.0
        %3485 = vmatpush1.xpose.msra.mxu0 0.0
        %3486 = vmatprep.subr.mxu0 0.0
        %3487 = vmatpush1.xpose.msra.mxu0 0.0
        %3488 = vmatprep.subr.mxu0 0.0
        %3489 = vmatpush1.xpose.msra.mxu0 0.0
        %3490 = vmatprep.subr.mxu0 0.0
        %3491 = vmatpush1.xpose.msra.mxu0 0.0
        %3492 = vmatprep.subr.mxu0 0.0
        %3493 = vmatpush1.xpose.msra.mxu0 0.0
        %3494 = vmatprep.subr.mxu0 0.0
        %3495 = vmatpush1.xpose.msra.mxu0 0.0
        %3496 = vmatprep.subr.mxu0 0.0
        %3497 = vmatpush1.xpose.msra.mxu0 0.0
        %3498 = vmatprep.subr.mxu0 0.0
        %3499 = vmatpush1.xpose.msra.mxu0 0.0
        %3500 = vmatprep.subr.mxu0 0.0
        %3501 = vmatpush1.xpose.msra.mxu0 0.0
        %3502 = vmatprep.subr.mxu0 0.0
        %3503 = vmatpush1.xpose.msra.mxu0 0.0
        %3504 = vmatprep.subr.mxu0 0.0
        %3505 = vmatpush1.xpose.msra.mxu0 0.0
        %3506 = vmatprep.subr.mxu0 0.0
        %3507 = vmatpush1.xpose.msra.mxu0 0.0
        %3508 = vmatprep.subr.mxu0 0.0
        %3509 = vmatpush1.xpose.msra.mxu0 0.0
        %3510 = vmatprep.subr.mxu0 0.0
        %3511 = vmatpush1.xpose.msra.mxu0 0.0
        %3512 = vmatprep.mubr.f32.mxu0 0.0
        %3513 = vmatmul.mubr.f32.gmra.mrb[0].mxu0 %v3444
        %v3514 = vpop.f32.mrb[0].mxu0
        %v3515 = vadd.f32 0.0, %v3514
        %v3516 = vpop.f32.mrb[0].mxu0
        %3517 = vdwg.mxu0
        %v3518 = vsel %vm596, %v3515, -inf
        %3519 = vmax.xlane.f32.xlu0 %v3518
        %v3520 = vpop.xlane.xlu0 %3519
        %v3521 = vsub.f32 %v3515, %v3520
        %v3522 = vmul.f32 %v3521, 1.442695
        %v3523 = vpow.pop %v3522
        %v3524 = vsel %vm596, %v3523, 0.0
        %3525 = vadd.xlane.f32.xlu0 %v3524
        %v3526 = vpop.xlane.xlu0 %3525
        %v3527 = vrcp.pop %v3526
        %v3528 = vmul.f32 %v3523, %v3527
        %3530 = vrot.lane.b32.xlu0 %v3274, 64
        %v3531 = vpop.permute.xlu0 %3530
        %v3534 = vsel %vm596, %v3528, 0
        %3536 = vmatprep.subr.mxu0 0.0
        %3537 = vmatpush1.msra.mxu0 %v3531
        %3538 = vmatprep.subr.mxu0 0.0
        %3539 = vmatpush1.msra.mxu0 0.0
        %3540 = vmatprep.subr.mxu0 0.0
        %3541 = vmatpush1.msra.mxu0 0.0
        %3542 = vmatprep.subr.mxu0 0.0
        %3543 = vmatpush1.msra.mxu0 0.0
        %3544 = vmatprep.subr.mxu0 0.0
        %3545 = vmatpush1.msra.mxu0 0.0
        %3546 = vmatprep.subr.mxu0 0.0
        %3547 = vmatpush1.msra.mxu0 0.0
        %3548 = vmatprep.subr.mxu0 0.0
        %3549 = vmatpush1.msra.mxu0 0.0
        %3550 = vmatprep.subr.mxu0 0.0
        %3551 = vmatpush1.msra.mxu0 0.0
        %3552 = vmatprep.subr.mxu0 0.0
        %3553 = vmatpush1.msra.mxu0 0.0
        %3554 = vmatprep.subr.mxu0 0.0
        %3555 = vmatpush1.msra.mxu0 0.0
        %3556 = vmatprep.subr.mxu0 0.0
        %3557 = vmatpush1.msra.mxu0 0.0
        %3558 = vmatprep.subr.mxu0 0.0
        %3559 = vmatpush1.msra.mxu0 0.0
        %3560 = vmatprep.subr.mxu0 0.0
        %3561 = vmatpush1.msra.mxu0 0.0
        %3562 = vmatprep.subr.mxu0 0.0
        %3563 = vmatpush1.msra.mxu0 0.0
        %3564 = vmatprep.subr.mxu0 0.0
        %3565 = vmatpush1.msra.mxu0 0.0
        %3566 = vmatprep.subr.mxu0 0.0
        %3567 = vmatpush1.msra.mxu0 0.0
        %3568 = vmatprep.subr.mxu0 0.0
        %3569 = vmatpush1.msra.mxu0 0.0
        %3570 = vmatprep.subr.mxu0 0.0
        %3571 = vmatpush1.msra.mxu0 0.0
        %3572 = vmatprep.subr.mxu0 0.0
        %3573 = vmatpush1.msra.mxu0 0.0
        %3574 = vmatprep.subr.mxu0 0.0
        %3575 = vmatpush1.msra.mxu0 0.0
        %3576 = vmatprep.subr.mxu0 0.0
        %3577 = vmatpush1.msra.mxu0 0.0
        %3578 = vmatprep.subr.mxu0 0.0
        %3579 = vmatpush1.msra.mxu0 0.0
        %3580 = vmatprep.subr.mxu0 0.0
        %3581 = vmatpush1.msra.mxu0 0.0
        %3582 = vmatprep.subr.mxu0 0.0
        %3583 = vmatpush1.msra.mxu0 0.0
        %3584 = vmatprep.subr.mxu0 0.0
        %3585 = vmatpush1.msra.mxu0 0.0
        %3586 = vmatprep.subr.mxu0 0.0
        %3587 = vmatpush1.msra.mxu0 0.0
        %3588 = vmatprep.subr.mxu0 0.0
        %3589 = vmatpush1.msra.mxu0 0.0
        %3590 = vmatprep.subr.mxu0 0.0
        %3591 = vmatpush1.msra.mxu0 0.0
        %3592 = vmatprep.subr.mxu0 0.0
        %3593 = vmatpush1.msra.mxu0 0.0
        %3594 = vmatprep.subr.mxu0 0.0
        %3595 = vmatpush1.msra.mxu0 0.0
        %3596 = vmatprep.subr.mxu0 0.0
        %3597 = vmatpush1.msra.mxu0 0.0
        %3598 = vmatprep.subr.mxu0 0.0
        %3599 = vmatpush1.msra.mxu0 0.0
        %3600 = vmatprep.mubr.f32.mxu0 0.0
        %3601 = vmatmul.mubr.f32.gmra.mrb[0].mxu0 %v3534
        %v3602 = vpop.f32.mrb[0].mxu0
        %v3603 = vadd.f32 0.0, %v3602
        %v3604 = vpop.f32.mrb[0].mxu0
        %3605 = vdwg.mxu0
        %3607 = vrot.lane.b32.xlu0 %v3603, 64
        %v3608 = vpop.permute.xlu0 %3607
        %v3610 = vsel %vm519, %v3437, %v3608
        %v3611 = vpack.c.bf16 %v3610, %v3610
        %s3612 = scalar_lea.vmem %s2, 128
        %v3613 = vld [vmem:[%s3612] sm:$0xf]
        %v3614 = vld [vmem:[%s3612 + $0x4] sm:$0xf]
        %v3615 = vld [vmem:[%s3612 + $0x8] sm:$0xf]
        %v3616 = vld [vmem:[%s3612 + $0xc] sm:$0xf]
        %v3617 = vld [vmem:[%s3612 + $0x10] sm:$0xf]
        %v3618 = vld [vmem:[%s3612 + $0x14] sm:$0xf]
        %v3619 = vld [vmem:[%s3612 + $0x18] sm:$0xf]
        %v3620 = vld [vmem:[%s3612 + $0x1c] sm:$0xf]
        %v3621 = vld [vmem:[%s3612 + $0x20] sm:$0xf]
        %v3622 = vld [vmem:[%s3612 + $0x24] sm:$0xf]
        %v3623 = vld [vmem:[%s3612 + $0x28] sm:$0xf]
        %v3624 = vld [vmem:[%s3612 + $0x2c] sm:$0xf]
        %v3625 = vld [vmem:[%s3612 + $0x30] sm:$0xf]
        %v3626 = vld [vmem:[%s3612 + $0x34] sm:$0xf]
        %v3627 = vld [vmem:[%s3612 + $0x38] sm:$0xf]
        %v3628 = vld [vmem:[%s3612 + $0x3c] sm:$0xf]
        %v3645 = vunpack.c.l.b16 %v3613
        %v3646 = vunpack.c.l.b16 %v3614
        %v3647 = vunpack.c.l.b16 %v3615
        %v3648 = vunpack.c.l.b16 %v3616
        %v3649 = vunpack.c.l.b16 %v3617
        %v3650 = vunpack.c.l.b16 %v3618
        %v3651 = vunpack.c.l.b16 %v3619
        %v3652 = vunpack.c.l.b16 %v3620
        %v3653 = vunpack.c.l.b16 %v3621
        %v3654 = vunpack.c.l.b16 %v3622
        %v3655 = vunpack.c.l.b16 %v3623
        %v3656 = vunpack.c.l.b16 %v3624
        %v3657 = vunpack.c.l.b16 %v3625
        %v3658 = vunpack.c.l.b16 %v3626
        %v3659 = vunpack.c.l.b16 %v3627
        %v3660 = vunpack.c.l.b16 %v3628
        %v3661 = vpack.c.b16 %v3646, %v3645
        %v3662 = vpack.c.b16 %v3648, %v3647
        %v3663 = vpack.c.b16 %v3650, %v3649
        %v3664 = vpack.c.b16 %v3652, %v3651
        %v3665 = vpack.c.b16 %v3654, %v3653
        %v3666 = vpack.c.b16 %v3656, %v3655
        %v3667 = vpack.c.b16 %v3658, %v3657
        %v3668 = vpack.c.b16 %v3660, %v3659
        %3677 = vmatprep.subr.bf16.mxu0 0
        %3678 = vmatpush1.bf16.msra.mxu0 %v3661
        %3679 = vmatprep.subr.bf16.mxu0 0
        %3680 = vmatpush1.bf16.msra.mxu0 %v3662
        %3681 = vmatprep.subr.bf16.mxu0 0
        %3682 = vmatpush1.bf16.msra.mxu0 %v3663
        %3683 = vmatprep.subr.bf16.mxu0 0
        %3684 = vmatpush1.bf16.msra.mxu0 %v3664
        %3685 = vmatprep.subr.bf16.mxu0 0
        %3686 = vmatpush1.bf16.msra.mxu0 %v3665
        %3687 = vmatprep.subr.bf16.mxu0 0
        %3688 = vmatpush1.bf16.msra.mxu0 %v3666
        %3689 = vmatprep.subr.bf16.mxu0 0
        %3690 = vmatpush1.bf16.msra.mxu0 %v3667
        %3691 = vmatprep.subr.bf16.mxu0 0
        %3692 = vmatpush1.bf16.msra.mxu0 %v3668
        %3693 = vmatprep.subr.bf16.mxu0 0
        %3694 = vmatpush1.bf16.msra.mxu0 0
        %3695 = vmatprep.subr.bf16.mxu0 0
        %3696 = vmatpush1.bf16.msra.mxu0 0
        %3697 = vmatprep.subr.bf16.mxu0 0
        %3698 = vmatpush1.bf16.msra.mxu0 0
        %3699 = vmatprep.subr.bf16.mxu0 0
        %3700 = vmatpush1.bf16.msra.mxu0 0
        %3701 = vmatprep.subr.bf16.mxu0 0
        %3702 = vmatpush1.bf16.msra.mxu0 0
        %3703 = vmatprep.subr.bf16.mxu0 0
        %3704 = vmatpush1.bf16.msra.mxu0 0
        %3705 = vmatprep.subr.bf16.mxu0 0
        %3706 = vmatpush1.bf16.msra.mxu0 0
        %3707 = vmatprep.subr.bf16.mxu0 0
        %3708 = vmatpush1.bf16.msra.mxu0 0
        %3709 = vmatprep.mubr.bf16.mxu0 0
        %3710 = vmatmul.mubr.bf16.gmra.mrb[0].mxu0 %v3611
        %v3711 = vpop.f32.mrb[0].mxu0
        %v3712 = vadd.f32 %v3035, %v3711
        %v3713 = vpop.f32.mrb[0].mxu0
        %v3714 = vpop.f32.mrb[0].mxu0
        %v3715 = vpop.f32.mrb[0].mxu0
        %3716 = vdwg.mxu0
        %v3717 = vld [vmem:[%s5 + $0xa] sm:$0x1]
        %v3718 = vld [vmem:[%s5 + $0xb] sm:$0x1]
        %3719 = vadd.xlane.f32.xlu0 %v3712
        %v3720 = vpop.xlane.xlu0 %3719
        %v3721 = vmul.f32 %v3720, %v961
        %v3722 = vmul.f32 %v3712, %v3712
        %3723 = vadd.xlane.f32.xlu0 %v3722
        %v3724 = vpop.xlane.xlu0 %3723
        %v3725 = vmul.f32 %v3724, %v961
        %v3726 = vmul.f32 %v3721, %v3721
        %v3727 = vsub.f32 %v3725, %v3726
        %v3728 = vsub.f32 %v3712, %v3721
        %v3729 = vadd.f32 %v3727, 1e-06
        %v3730 = vrsqrt.pop %v3729
        %v3731 = vmul.f32 %v3728, %v3730
        %v3732 = vlaneseq
        %v3733 = vshrl.u32 %v3732, 7
        %v3734 = vsub.s32 0, %v3733
        %v3735 = vrot.slane %v3717, %v3734
        %v3736 = vmul.f32 %v3731, %v3735
        %v3737 = vlaneseq
        %v3738 = vshrl.u32 %v3737, 7
        %v3739 = vsub.s32 0, %v3738
        %v3740 = vrot.slane %v3718, %v3739
        %v3741 = vadd.f32 %v3736, %v3740
        %v3742 = vpack.c.bf16 %v3741, %v3741
        %s3743 = scalar_lea.vmem %s3, 512
        %v3744 = vld [vmem:[%s3743] sm:$0xff]
        %v3745 = vld [vmem:[%s3743 + $0x8] sm:$0xff]
        %v3746 = vld [vmem:[%s3743 + $0x10] sm:$0xff]
        %v3747 = vld [vmem:[%s3743 + $0x18] sm:$0xff]
        %v3748 = vld [vmem:[%s3743 + $0x20] sm:$0xff]
        %v3749 = vld [vmem:[%s3743 + $0x28] sm:$0xff]
        %v3750 = vld [vmem:[%s3743 + $0x30] sm:$0xff]
        %v3751 = vld [vmem:[%s3743 + $0x38] sm:$0xff]
        %v3752 = vld [vmem:[%s3743 + $0x40] sm:$0xff]
        %v3753 = vld [vmem:[%s3743 + $0x48] sm:$0xff]
        %v3754 = vld [vmem:[%s3743 + $0x50] sm:$0xff]
        %v3755 = vld [vmem:[%s3743 + $0x58] sm:$0xff]
        %v3756 = vld [vmem:[%s3743 + $0x60] sm:$0xff]
        %v3757 = vld [vmem:[%s3743 + $0x68] sm:$0xff]
        %v3758 = vld [vmem:[%s3743 + $0x70] sm:$0xff]
        %v3759 = vld [vmem:[%s3743 + $0x78] sm:$0xff]
        %v3760 = vld [vmem:[%s3743 + $0x80] sm:$0xff]
        %v3761 = vld [vmem:[%s3743 + $0x88] sm:$0xff]
        %v3762 = vld [vmem:[%s3743 + $0x90] sm:$0xff]
        %v3763 = vld [vmem:[%s3743 + $0x98] sm:$0xff]
        %v3764 = vld [vmem:[%s3743 + $0xa0] sm:$0xff]
        %v3765 = vld [vmem:[%s3743 + $0xa8] sm:$0xff]
        %v3766 = vld [vmem:[%s3743 + $0xb0] sm:$0xff]
        %v3767 = vld [vmem:[%s3743 + $0xb8] sm:$0xff]
        %v3768 = vld [vmem:[%s3743 + $0xc0] sm:$0xff]
        %v3769 = vld [vmem:[%s3743 + $0xc8] sm:$0xff]
        %v3770 = vld [vmem:[%s3743 + $0xd0] sm:$0xff]
        %v3771 = vld [vmem:[%s3743 + $0xd8] sm:$0xff]
        %v3772 = vld [vmem:[%s3743 + $0xe0] sm:$0xff]
        %v3773 = vld [vmem:[%s3743 + $0xe8] sm:$0xff]
        %v3774 = vld [vmem:[%s3743 + $0xf0] sm:$0xff]
        %v3775 = vld [vmem:[%s3743 + $0xf8] sm:$0xff]
        %s3776 = scalar_lea.vmem %s6, 2
        %v3777 = vld [vmem:[%s3776] ss:$4 sm:$0xf]
        %v3779 = vlaneseq
        %v3780 = vshrl.u32 %v3779, 7
        %v3781 = vsub.s32 0, %v3780
        %v3782 = vrot.slane %v3777, %v3781
        %v3783 = vlaneseq
        %v3784 = vshrl.u32 %v3783, 7
        %v3785 = vsub.s32 1, %v3784
        %v3786 = vrot.slane %v3777, %v3785
        %v3787 = vlaneseq
        %v3788 = vshrl.u32 %v3787, 7
        %v3789 = vsub.s32 2, %v3788
        %v3790 = vrot.slane %v3777, %v3789
        %v3791 = vlaneseq
        %v3792 = vshrl.u32 %v3791, 7
        %v3793 = vsub.s32 3, %v3792
        %v3794 = vrot.slane %v3777, %v3793
        %v3831 = vunpack.c.l.b16 %v3744
        %v3832 = vunpack.c.h.b16 %v3744
        %v3833 = vunpack.c.l.b16 %v3745
        %v3834 = vunpack.c.h.b16 %v3745
        %v3835 = vunpack.c.l.b16 %v3746
        %v3836 = vunpack.c.h.b16 %v3746
        %v3837 = vunpack.c.l.b16 %v3747
        %v3838 = vunpack.c.h.b16 %v3747
        %v3839 = vunpack.c.l.b16 %v3748
        %v3840 = vunpack.c.h.b16 %v3748
        %v3841 = vunpack.c.l.b16 %v3749
        %v3842 = vunpack.c.h.b16 %v3749
        %v3843 = vunpack.c.l.b16 %v3750
        %v3844 = vunpack.c.h.b16 %v3750
        %v3845 = vunpack.c.l.b16 %v3751
        %v3846 = vunpack.c.h.b16 %v3751
        %v3847 = vunpack.c.l.b16 %v3752
        %v3848 = vunpack.c.h.b16 %v3752
        %v3849 = vunpack.c.l.b16 %v3753
        %v3850 = vunpack.c.h.b16 %v3753
        %v3851 = vunpack.c.l.b16 %v3754
        %v3852 = vunpack.c.h.b16 %v3754
        %v3853 = vunpack.c.l.b16 %v3755
        %v3854 = vunpack.c.h.b16 %v3755
        %v3855 = vunpack.c.l.b16 %v3756
        %v3856 = vunpack.c.h.b16 %v3756
        %v3857 = vunpack.c.l.b16 %v3757
        %v3858 = vunpack.c.h.b16 %v3757
        %v3859 = vunpack.c.l.b16 %v3758
        %v3860 = vunpack.c.h.b16 %v3758
        %v3861 = vunpack.c.l.b16 %v3759
        %v3862 = vunpack.c.h.b16 %v3759
        %v3863 = vunpack.c.l.b16 %v3760
        %v3864 = vunpack.c.h.b16 %v3760
        %v3865 = vunpack.c.l.b16 %v3761
        %v3866 = vunpack.c.h.b16 %v3761
        %v3867 = vunpack.c.l.b16 %v3762
        %v3868 = vunpack.c.h.b16 %v3762
        %v3869 = vunpack.c.l.b16 %v3763
        %v3870 = vunpack.c.h.b16 %v3763
        %v3871 = vunpack.c.l.b16 %v3764
        %v3872 = vunpack.c.h.b16 %v3764
        %v3873 = vunpack.c.l.b16 %v3765
        %v3874 = vunpack.c.h.b16 %v3765
        %v3875 = vunpack.c.l.b16 %v3766
        %v3876 = vunpack.c.h.b16 %v3766
        %v3877 = vunpack.c.l.b16 %v3767
        %v3878 = vunpack.c.h.b16 %v3767
        %v3879 = vunpack.c.l.b16 %v3768
        %v3880 = vunpack.c.h.b16 %v3768
        %v3881 = vunpack.c.l.b16 %v3769
        %v3882 = vunpack.c.h.b16 %v3769
        %v3883 = vunpack.c.l.b16 %v3770
        %v3884 = vunpack.c.h.b16 %v3770
        %v3885 = vunpack.c.l.b16 %v3771
        %v3886 = vunpack.c.h.b16 %v3771
        %v3887 = vunpack.c.l.b16 %v3772
        %v3888 = vunpack.c.h.b16 %v3772
        %v3889 = vunpack.c.l.b16 %v3773
        %v3890 = vunpack.c.h.b16 %v3773
        %v3891 = vunpack.c.l.b16 %v3774
        %v3892 = vunpack.c.h.b16 %v3774
        %v3893 = vunpack.c.l.b16 %v3775
        %v3894 = vunpack.c.h.b16 %v3775
        %v3895 = vpack.c.b16 %v3835, %v3831
        %v3896 = vpack.c.b16 %v3836, %v3832
        %v3897 = vpack.c.b16 %v3837, %v3833
        %v3898 = vpack.c.b16 %v3838, %v3834
        %v3899 = vpack.c.b16 %v3843, %v3839
        %v3900 = vpack.c.b16 %v3844, %v3840
        %v3901 = vpack.c.b16 %v3845, %v3841
        %v3902 = vpack.c.b16 %v3846, %v3842
        %v3903 = vpack.c.b16 %v3851, %v3847
        %v3904 = vpack.c.b16 %v3852, %v3848
        %v3905 = vpack.c.b16 %v3853, %v3849
        %v3906 = vpack.c.b16 %v3854, %v3850
        %v3907 = vpack.c.b16 %v3859, %v3855
        %v3908 = vpack.c.b16 %v3860, %v3856
        %v3909 = vpack.c.b16 %v3861, %v3857
        %v3910 = vpack.c.b16 %v3862, %v3858
        %v3911 = vpack.c.b16 %v3867, %v3863
        %v3912 = vpack.c.b16 %v3868, %v3864
        %v3913 = vpack.c.b16 %v3869, %v3865
        %v3914 = vpack.c.b16 %v3870, %v3866
        %v3915 = vpack.c.b16 %v3875, %v3871
        %v3916 = vpack.c.b16 %v3876, %v3872
        %v3917 = vpack.c.b16 %v3877, %v3873
        %v3918 = vpack.c.b16 %v3878, %v3874
        %v3919 = vpack.c.b16 %v3883, %v3879
        %v3920 = vpack.c.b16 %v3884, %v3880
        %v3921 = vpack.c.b16 %v3885, %v3881
        %v3922 = vpack.c.b16 %v3886, %v3882
        %v3923 = vpack.c.b16 %v3891, %v3887
        %v3924 = vpack.c.b16 %v3892, %v3888
        %v3925 = vpack.c.b16 %v3893, %v3889
        %v3926 = vpack.c.b16 %v3894, %v3890
        %3959 = vmatprep.subr.bf16.mxu0 %v3896
        %3960 = vmatpush1.bf16.msra.mxu0 %v3895
        %3961 = vmatprep.subr.bf16.mxu0 %v3900
        %3962 = vmatpush1.bf16.msra.mxu0 %v3899
        %3963 = vmatprep.subr.bf16.mxu0 %v3904
        %3964 = vmatpush1.bf16.msra.mxu0 %v3903
        %3965 = vmatprep.subr.bf16.mxu0 %v3908
        %3966 = vmatpush1.bf16.msra.mxu0 %v3907
        %3967 = vmatprep.subr.bf16.mxu0 %v3912
        %3968 = vmatpush1.bf16.msra.mxu0 %v3911
        %3969 = vmatprep.subr.bf16.mxu0 %v3916
        %3970 = vmatpush1.bf16.msra.mxu0 %v3915
        %3971 = vmatprep.subr.bf16.mxu0 %v3920
        %3972 = vmatpush1.bf16.msra.mxu0 %v3919
        %3973 = vmatprep.subr.bf16.mxu0 %v3924
        %3974 = vmatpush1.bf16.msra.mxu0 %v3923
        %3975 = vmatprep.subr.bf16.mxu0 0
        %3976 = vmatpush1.bf16.msra.mxu0 0
        %3977 = vmatprep.subr.bf16.mxu0 0
        %3978 = vmatpush1.bf16.msra.mxu0 0
        %3979 = vmatprep.subr.bf16.mxu0 0
        %3980 = vmatpush1.bf16.msra.mxu0 0
        %3981 = vmatprep.subr.bf16.mxu0 0
        %3982 = vmatpush1.bf16.msra.mxu0 0
        %3983 = vmatprep.subr.bf16.mxu0 0
        %3984 = vmatpush1.bf16.msra.mxu0 0
        %3985 = vmatprep.subr.bf16.mxu0 0
        %3986 = vmatpush1.bf16.msra.mxu0 0
        %3987 = vmatprep.subr.bf16.mxu0 0
        %3988 = vmatpush1.bf16.msra.mxu0 0
        %3989 = vmatprep.subr.bf16.mxu0 0
        %3990 = vmatpush1.bf16.msra.mxu0 0
        %3991 = vmatprep.mubr.bf16.mxu0 0
        %3992 = vmatmul.mubr.bf16.gmra.mrb[0].mxu0 %v3742
        %v3993 = vpop.f32.mrb[0].mxu0
        %v3994 = vadd.f32 %v3782, %v3993
        %v3995 = vpop.f32.mrb[0].mxu0
        %v3996 = vadd.f32 %v3786, %v3995
        %v3997 = vpop.f32.mrb[0].mxu0
        %v3998 = vpop.f32.mrb[0].mxu0
        %3999 = vdwg.mxu0
        %4000 = vmatprep.subr.bf16.mxu0 %v3898
        %4001 = vmatpush1.bf16.msra.mxu0 %v3897
        %4002 = vmatprep.subr.bf16.mxu0 %v3902
        %4003 = vmatpush1.bf16.msra.mxu0 %v3901
        %4004 = vmatprep.subr.bf16.mxu0 %v3906
        %4005 = vmatpush1.bf16.msra.mxu0 %v3905
        %4006 = vmatprep.subr.bf16.mxu0 %v3910
        %4007 = vmatpush1.bf16.msra.mxu0 %v3909
        %4008 = vmatprep.subr.bf16.mxu0 %v3914
        %4009 = vmatpush1.bf16.msra.mxu0 %v3913
        %4010 = vmatprep.subr.bf16.mxu0 %v3918
        %4011 = vmatpush1.bf16.msra.mxu0 %v3917
        %4012 = vmatprep.subr.bf16.mxu0 %v3922
        %4013 = vmatpush1.bf16.msra.mxu0 %v3921
        %4014 = vmatprep.subr.bf16.mxu0 %v3926
        %4015 = vmatpush1.bf16.msra.mxu0 %v3925
        %4016 = vmatprep.subr.bf16.mxu0 0
        %4017 = vmatpush1.bf16.msra.mxu0 0
        %4018 = vmatprep.subr.bf16.mxu0 0
        %4019 = vmatpush1.bf16.msra.mxu0 0
        %4020 = vmatprep.subr.bf16.mxu0 0
        %4021 = vmatpush1.bf16.msra.mxu0 0
        %4022 = vmatprep.subr.bf16.mxu0 0
        %4023 = vmatpush1.bf16.msra.mxu0 0
        %4024 = vmatprep.subr.bf16.mxu0 0
        %4025 = vmatpush1.bf16.msra.mxu0 0
        %4026 = vmatprep.subr.bf16.mxu0 0
        %4027 = vmatpush1.bf16.msra.mxu0 0
        %4028 = vmatprep.subr.bf16.mxu0 0
        %4029 = vmatpush1.bf16.msra.mxu0 0
        %4030 = vmatprep.subr.bf16.mxu0 0
        %4031 = vmatpush1.bf16.msra.mxu0 0
        %4032 = vmatprep.mubr.bf16.mxu0 0
        %4033 = vmatmul.mubr.bf16.gmra.mrb[0].mxu0 %v3742
        %v4034 = vpop.f32.mrb[0].mxu0
        %v4035 = vadd.f32 %v3790, %v4034
        %v4036 = vpop.f32.mrb[0].mxu0
        %v4037 = vadd.f32 %v3794, %v4036
        %v4038 = vpop.f32.mrb[0].mxu0
        %v4039 = vpop.f32.mrb[0].mxu0
        %4040 = vdwg.mxu0
        %v4041 = vmax.f32 %v3994, 0.0
        %v4042 = vmax.f32 %v3996, 0.0
        %v4043 = vmax.f32 %v4035, 0.0
        %v4044 = vmax.f32 %v4037, 0.0
        %v4045 = vpack.c.bf16 %v4041, %v4041
        %v4046 = vpack.c.bf16 %v4042, %v4042
        %v4047 = vpack.c.bf16 %v4043, %v4043
        %v4048 = vpack.c.bf16 %v4044, %v4044
        %s4049 = scalar_lea.vmem %s4, 512
        %v4050 = vld [vmem:[%s4049] sm:$0xf]
        %v4051 = vld [vmem:[%s4049 + $0x4] sm:$0xf]
        %v4052 = vld [vmem:[%s4049 + $0x8] sm:$0xf]
        %v4053 = vld [vmem:[%s4049 + $0xc] sm:$0xf]
        %v4054 = vld [vmem:[%s4049 + $0x10] sm:$0xf]
        %v4055 = vld [vmem:[%s4049 + $0x14] sm:$0xf]
        %v4056 = vld [vmem:[%s4049 + $0x18] sm:$0xf]
        %v4057 = vld [vmem:[%s4049 + $0x1c] sm:$0xf]
        %v4058 = vld [vmem:[%s4049 + $0x20] sm:$0xf]
        %v4059 = vld [vmem:[%s4049 + $0x24] sm:$0xf]
        %v4060 = vld [vmem:[%s4049 + $0x28] sm:$0xf]
        %v4061 = vld [vmem:[%s4049 + $0x2c] sm:$0xf]
        %v4062 = vld [vmem:[%s4049 + $0x30] sm:$0xf]
        %v4063 = vld [vmem:[%s4049 + $0x34] sm:$0xf]
        %v4064 = vld [vmem:[%s4049 + $0x38] sm:$0xf]
        %v4065 = vld [vmem:[%s4049 + $0x3c] sm:$0xf]
        %v4066 = vld [vmem:[%s4049 + $0x40] sm:$0xf]
        %v4067 = vld [vmem:[%s4049 + $0x44] sm:$0xf]
        %v4068 = vld [vmem:[%s4049 + $0x48] sm:$0xf]
        %v4069 = vld [vmem:[%s4049 + $0x4c] sm:$0xf]
        %v4070 = vld [vmem:[%s4049 + $0x50] sm:$0xf]
        %v4071 = vld [vmem:[%s4049 + $0x54] sm:$0xf]
        %v4072 = vld [vmem:[%s4049 + $0x58] sm:$0xf]
        %v4073 = vld [vmem:[%s4049 + $0x5c] sm:$0xf]
        %v4074 = vld [vmem:[%s4049 + $0x60] sm:$0xf]
        %v4075 = vld [vmem:[%s4049 + $0x64] sm:$0xf]
        %v4076 = vld [vmem:[%s4049 + $0x68] sm:$0xf]
        %v4077 = vld [vmem:[%s4049 + $0x6c] sm:$0xf]
        %v4078 = vld [vmem:[%s4049 + $0x70] sm:$0xf]
        %v4079 = vld [vmem:[%s4049 + $0x74] sm:$0xf]
        %v4080 = vld [vmem:[%s4049 + $0x78] sm:$0xf]
        %v4081 = vld [vmem:[%s4049 + $0x7c] sm:$0xf]
        %v4082 = vld [vmem:[%s4049 + $0x80] sm:$0xf]
        %v4083 = vld [vmem:[%s4049 + $0x84] sm:$0xf]
        %v4084 = vld [vmem:[%s4049 + $0x88] sm:$0xf]
        %v4085 = vld [vmem:[%s4049 + $0x8c] sm:$0xf]
        %v4086 = vld [vmem:[%s4049 + $0x90] sm:$0xf]
        %v4087 = vld [vmem:[%s4049 + $0x94] sm:$0xf]
        %v4088 = vld [vmem:[%s4049 + $0x98] sm:$0xf]
        %v4089 = vld [vmem:[%s4049 + $0x9c] sm:$0xf]
        %v4090 = vld [vmem:[%s4049 + $0xa0] sm:$0xf]
        %v4091 = vld [vmem:[%s4049 + $0xa4] sm:$0xf]
        %v4092 = vld [vmem:[%s4049 + $0xa8] sm:$0xf]
        %v4093 = vld [vmem:[%s4049 + $0xac] sm:$0xf]
        %v4094 = vld [vmem:[%s4049 + $0xb0] sm:$0xf]
        %v4095 = vld [vmem:[%s4049 + $0xb4] sm:$0xf]
        %v4096 = vld [vmem:[%s4049 + $0xb8] sm:$0xf]
        %v4097 = vld [vmem:[%s4049 + $0xbc] sm:$0xf]
        %v4098 = vld [vmem:[%s4049 + $0xc0] sm:$0xf]
        %v4099 = vld [vmem:[%s4049 + $0xc4] sm:$0xf]
        %v4100 = vld [vmem:[%s4049 + $0xc8] sm:$0xf]
        %v4101 = vld [vmem:[%s4049 + $0xcc] sm:$0xf]
        %v4102 = vld [vmem:[%s4049 + $0xd0] sm:$0xf]
        %v4103 = vld [vmem:[%s4049 + $0xd4] sm:$0xf]
        %v4104 = vld [vmem:[%s4049 + $0xd8] sm:$0xf]
        %v4105 = vld [vmem:[%s4049 + $0xdc] sm:$0xf]
        %v4106 = vld [vmem:[%s4049 + $0xe0] sm:$0xf]
        %v4107 = vld [vmem:[%s4049 + $0xe4] sm:$0xf]
        %v4108 = vld [vmem:[%s4049 + $0xe8] sm:$0xf]
        %v4109 = vld [vmem:[%s4049 + $0xec] sm:$0xf]
        %v4110 = vld [vmem:[%s4049 + $0xf0] sm:$0xf]
        %v4111 = vld [vmem:[%s4049 + $0xf4] sm:$0xf]
        %v4112 = vld [vmem:[%s4049 + $0xf8] sm:$0xf]
        %v4113 = vld [vmem:[%s4049 + $0xfc] sm:$0xf]
        %v4114 = vld [vmem:[%s5 + $0xc] sm:$0x1]
        %v4115 = vlaneseq
        %v4116 = vshrl.u32 %v4115, 7
        %v4117 = vsub.s32 0, %v4116
        %v4118 = vrot.slane %v4114, %v4117
        %v4183 = vunpack.c.l.b16 %v4050
        %v4184 = vunpack.c.l.b16 %v4051
        %v4185 = vunpack.c.l.b16 %v4052
        %v4186 = vunpack.c.l.b16 %v4053
        %v4187 = vunpack.c.l.b16 %v4054
        %v4188 = vunpack.c.l.b16 %v4055
        %v4189 = vunpack.c.l.b16 %v4056
        %v4190 = vunpack.c.l.b16 %v4057
        %v4191 = vunpack.c.l.b16 %v4058
        %v4192 = vunpack.c.l.b16 %v4059
        %v4193 = vunpack.c.l.b16 %v4060
        %v4194 = vunpack.c.l.b16 %v4061
        %v4195 = vunpack.c.l.b16 %v4062
        %v4196 = vunpack.c.l.b16 %v4063
        %v4197 = vunpack.c.l.b16 %v4064
        %v4198 = vunpack.c.l.b16 %v4065
        %v4199 = vunpack.c.l.b16 %v4066
        %v4200 = vunpack.c.l.b16 %v4067
        %v4201 = vunpack.c.l.b16 %v4068
        %v4202 = vunpack.c.l.b16 %v4069
        %v4203 = vunpack.c.l.b16 %v4070
        %v4204 = vunpack.c.l.b16 %v4071
        %v4205 = vunpack.c.l.b16 %v4072
        %v4206 = vunpack.c.l.b16 %v4073
        %v4207 = vunpack.c.l.b16 %v4074
        %v4208 = vunpack.c.l.b16 %v4075
        %v4209 = vunpack.c.l.b16 %v4076
        %v4210 = vunpack.c.l.b16 %v4077
        %v4211 = vunpack.c.l.b16 %v4078
        %v4212 = vunpack.c.l.b16 %v4079
        %v4213 = vunpack.c.l.b16 %v4080
        %v4214 = vunpack.c.l.b16 %v4081
        %v4215 = vunpack.c.l.b16 %v4082
        %v4216 = vunpack.c.l.b16 %v4083
        %v4217 = vunpack.c.l.b16 %v4084
        %v4218 = vunpack.c.l.b16 %v4085
        %v4219 = vunpack.c.l.b16 %v4086
        %v4220 = vunpack.c.l.b16 %v4087
        %v4221 = vunpack.c.l.b16 %v4088
        %v4222 = vunpack.c.l.b16 %v4089
        %v4223 = vunpack.c.l.b16 %v4090
        %v4224 = vunpack.c.l.b16 %v4091
        %v4225 = vunpack.c.l.b16 %v4092
        %v4226 = vunpack.c.l.b16 %v4093
        %v4227 = vunpack.c.l.b16 %v4094
        %v4228 = vunpack.c.l.b16 %v4095
        %v4229 = vunpack.c.l.b16 %v4096
        %v4230 = vunpack.c.l.b16 %v4097
        %v4231 = vunpack.c.l.b16 %v4098
        %v4232 = vunpack.c.l.b16 %v4099
        %v4233 = vunpack.c.l.b16 %v4100
        %v4234 = vunpack.c.l.b16 %v4101
        %v4235 = vunpack.c.l.b16 %v4102
        %v4236 = vunpack.c.l.b16 %v4103
        %v4237 = vunpack.c.l.b16 %v4104
        %v4238 = vunpack.c.l.b16 %v4105
        %v4239 = vunpack.c.l.b16 %v4106
        %v4240 = vunpack.c.l.b16 %v4107
        %v4241 = vunpack.c.l.b16 %v4108
        %v4242 = vunpack.c.l.b16 %v4109
        %v4243 = vunpack.c.l.b16 %v4110
        %v4244 = vunpack.c.l.b16 %v4111
        %v4245 = vunpack.c.l.b16 %v4112
        %v4246 = vunpack.c.l.b16 %v4113
        %v4247 = vpack.c.b16 %v4184, %v4183
        %v4248 = vpack.c.b16 %v4186, %v4185
        %v4249 = vpack.c.b16 %v4188, %v4187
        %v4250 = vpack.c.b16 %v4190, %v4189
        %v4251 = vpack.c.b16 %v4192, %v4191
        %v4252 = vpack.c.b16 %v4194, %v4193
        %v4253 = vpack.c.b16 %v4196, %v4195
        %v4254 = vpack.c.b16 %v4198, %v4197
        %v4255 = vpack.c.b16 %v4200, %v4199
        %v4256 = vpack.c.b16 %v4202, %v4201
        %v4257 = vpack.c.b16 %v4204, %v4203
        %v4258 = vpack.c.b16 %v4206, %v4205
        %v4259 = vpack.c.b16 %v4208, %v4207
        %v4260 = vpack.c.b16 %v4210, %v4209
        %v4261 = vpack.c.b16 %v4212, %v4211
        %v4262 = vpack.c.b16 %v4214, %v4213
        %v4263 = vpack.c.b16 %v4216, %v4215
        %v4264 = vpack.c.b16 %v4218, %v4217
        %v4265 = vpack.c.b16 %v4220, %v4219
        %v4266 = vpack.c.b16 %v4222, %v4221
        %v4267 = vpack.c.b16 %v4224, %v4223
        %v4268 = vpack.c.b16 %v4226, %v4225
        %v4269 = vpack.c.b16 %v4228, %v4227
        %v4270 = vpack.c.b16 %v4230, %v4229
        %v4271 = vpack.c.b16 %v4232, %v4231
        %v4272 = vpack.c.b16 %v4234, %v4233
        %v4273 = vpack.c.b16 %v4236, %v4235
        %v4274 = vpack.c.b16 %v4238, %v4237
        %v4275 = vpack.c.b16 %v4240, %v4239
        %v4276 = vpack.c.b16 %v4242, %v4241
        %v4277 = vpack.c.b16 %v4244, %v4243
        %v4278 = vpack.c.b16 %v4246, %v4245
        %4311 = vmatprep.subr.bf16.mxu0 0
        %4312 = vmatpush1.bf16.msra.mxu0 %v4247
        %4313 = vmatprep.subr.bf16.mxu0 0
        %4314 = vmatpush1.bf16.msra.mxu0 %v4248
        %4315 = vmatprep.subr.bf16.mxu0 0
        %4316 = vmatpush1.bf16.msra.mxu0 %v4249
        %4317 = vmatprep.subr.bf16.mxu0 0
        %4318 = vmatpush1.bf16.msra.mxu0 %v4250
        %4319 = vmatprep.subr.bf16.mxu0 0
        %4320 = vmatpush1.bf16.msra.mxu0 %v4251
        %4321 = vmatprep.subr.bf16.mxu0 0
        %4322 = vmatpush1.bf16.msra.mxu0 %v4252
        %4323 = vmatprep.subr.bf16.mxu0 0
        %4324 = vmatpush1.bf16.msra.mxu0 %v4253
        %4325 = vmatprep.subr.bf16.mxu0 0
        %4326 = vmatpush1.bf16.msra.mxu0 %v4254
        %4327 = vmatprep.subr.bf16.mxu0 0
        %4328 = vmatpush1.bf16.msra.mxu0 %v4255
        %4329 = vmatprep.subr.bf16.mxu0 0
        %4330 = vmatpush1.bf16.msra.mxu0 %v4256
        %4331 = vmatprep.subr.bf16.mxu0 0
        %4332 = vmatpush1.bf16.msra.mxu0 %v4257
        %4333 = vmatprep.subr.bf16.mxu0 0
        %4334 = vmatpush1.bf16.msra.mxu0 %v4258
        %4335 = vmatprep.subr.bf16.mxu0 0
        %4336 = vmatpush1.bf16.msra.mxu0 %v4259
        %4337 = vmatprep.subr.bf16.mxu0 0
        %4338 = vmatpush1.bf16.msra.mxu0 %v4260
        %4339 = vmatprep.subr.bf16.mxu0 0
        %4340 = vmatpush1.bf16.msra.mxu0 %v4261
        %4341 = vmatprep.subr.bf16.mxu0 0
        %4342 = vmatpush1.bf16.msra.mxu0 %v4262
        %4343 = vmatprep.mubr.bf16.mxu0 %v4046
        %4344 = vmatmul.mubr.bf16.gmra.mrb[0].mxu0 %v4045
        %v4345 = vpop.f32.mrb[0].mxu0
        %v4346 = vadd.f32 %v4118, %v4345
        %v4347 = vpop.f32.mrb[0].mxu0
        %v4348 = vpop.f32.mrb[0].mxu0
        %v4349 = vpop.f32.mrb[0].mxu0
        %4350 = vdwg.mxu0
        %4351 = vmatprep.subr.bf16.mxu0 0
        %4352 = vmatpush1.bf16.msra.mxu0 %v4263
        %4353 = vmatprep.subr.bf16.mxu0 0
        %4354 = vmatpush1.bf16.msra.mxu0 %v4264
        %4355 = vmatprep.subr.bf16.mxu0 0
        %4356 = vmatpush1.bf16.msra.mxu0 %v4265
        %4357 = vmatprep.subr.bf16.mxu0 0
        %4358 = vmatpush1.bf16.msra.mxu0 %v4266
        %4359 = vmatprep.subr.bf16.mxu0 0
        %4360 = vmatpush1.bf16.msra.mxu0 %v4267
        %4361 = vmatprep.subr.bf16.mxu0 0
        %4362 = vmatpush1.bf16.msra.mxu0 %v4268
        %4363 = vmatprep.subr.bf16.mxu0 0
        %4364 = vmatpush1.bf16.msra.mxu0 %v4269
        %4365 = vmatprep.subr.bf16.mxu0 0
        %4366 = vmatpush1.bf16.msra.mxu0 %v4270
        %4367 = vmatprep.subr.bf16.mxu0 0
        %4368 = vmatpush1.bf16.msra.mxu0 %v4271
        %4369 = vmatprep.subr.bf16.mxu0 0
        %4370 = vmatpush1.bf16.msra.mxu0 %v4272
        %4371 = vmatprep.subr.bf16.mxu0 0
        %4372 = vmatpush1.bf16.msra.mxu0 %v4273
        %4373 = vmatprep.subr.bf16.mxu0 0
        %4374 = vmatpush1.bf16.msra.mxu0 %v4274
        %4375 = vmatprep.subr.bf16.mxu0 0
        %4376 = vmatpush1.bf16.msra.mxu0 %v4275
        %4377 = vmatprep.subr.bf16.mxu0 0
        %4378 = vmatpush1.bf16.msra.mxu0 %v4276
        %4379 = vmatprep.subr.bf16.mxu0 0
        %4380 = vmatpush1.bf16.msra.mxu0 %v4277
        %4381 = vmatprep.subr.bf16.mxu0 0
        %4382 = vmatpush1.bf16.msra.mxu0 %v4278
        %4383 = vmatprep.mubr.bf16.mxu0 %v4048
        %4384 = vmatmul.mubr.bf16.gmra.mrb[0].mxu0 %v4047
        %v4385 = vpop.f32.mrb[0].mxu0
        %v4386 = vadd.f32 %v4346, %v4385
        %v4387 = vpop.f32.mrb[0].mxu0
        %v4388 = vpop.f32.mrb[0].mxu0
        %v4389 = vpop.f32.mrb[0].mxu0
        %4390 = vdwg.mxu0
        %v4391 = vadd.f32 %v4386, %v3741
        %v4392 = vld [vmem:[%s5 + $0xd] sm:$0x1]
        %v4393 = vld [vmem:[%s5 + $0xe] sm:$0x1]
        %4394 = vadd.xlane.f32.xlu0 %v4391
        %v4395 = vpop.xlane.xlu0 %4394
        %v4396 = vmul.f32 %v4395, %v961
        %v4397 = vmul.f32 %v4391, %v4391
        %4398 = vadd.xlane.f32.xlu0 %v4397
        %v4399 = vpop.xlane.xlu0 %4398
        %v4400 = vmul.f32 %v4399, %v961
        %v4401 = vmul.f32 %v4396, %v4396
        %v4402 = vsub.f32 %v4400, %v4401
        %v4403 = vsub.f32 %v4391, %v4396
        %v4404 = vadd.f32 %v4402, 1e-06
        %v4405 = vrsqrt.pop %v4404
        %v4406 = vmul.f32 %v4403, %v4405
        %v4407 = vlaneseq
        %v4408 = vshrl.u32 %v4407, 7
        %v4409 = vsub.s32 0, %v4408
        %v4410 = vrot.slane %v4392, %v4409
        %v4411 = vmul.f32 %v4406, %v4410
        %v4412 = vlaneseq
        %v4413 = vshrl.u32 %v4412, 7
        %v4414 = vsub.s32 0, %v4413
        %v4415 = vrot.slane %v4393, %v4414
        %v4416 = vadd.f32 %v4411, %v4415
        %v4417 = vld [vmem:[%s5 + $0xf] sm:$0x1]
        %v4418 = vld [vmem:[%s5 + $0x10] sm:$0x1]
        %4419 = vadd.xlane.f32.xlu0 %v4416
        %v4420 = vpop.xlane.xlu0 %4419
        %v4421 = vmul.f32 %v4420, %v961
        %v4422 = vmul.f32 %v4416, %v4416
        %4423 = vadd.xlane.f32.xlu0 %v4422
        %v4424 = vpop.xlane.xlu0 %4423
        %v4425 = vmul.f32 %v4424, %v961
        %v4426 = vmul.f32 %v4421, %v4421
        %v4427 = vsub.f32 %v4425, %v4426
        %v4428 = vsub.f32 %v4416, %v4421
        %v4429 = vadd.f32 %v4427, 1e-06
        %v4430 = vrsqrt.pop %v4429
        %v4431 = vmul.f32 %v4428, %v4430
        %v4432 = vlaneseq
        %v4433 = vshrl.u32 %v4432, 7
        %v4434 = vsub.s32 0, %v4433
        %v4435 = vrot.slane %v4417, %v4434
        %v4436 = vmul.f32 %v4431, %v4435
        %v4437 = vlaneseq
        %v4438 = vshrl.u32 %v4437, 7
        %v4439 = vsub.s32 0, %v4438
        %v4440 = vrot.slane %v4418, %v4439
        %v4441 = vadd.f32 %v4436, %v4440
        %4442 = vst [vmem:[%s269] sm:$0xff] %v4441
        %s4443 = sand.u32 %s181, 1
        %s4444 = scalar_lea.sflag [#allocation3], %s4443
        %s4445 = sand.u32 %s181, 1
        %s4446 = smul.addr %s4445, 8
        %s4447 = scalar_lea.vmem [#allocation2], %s4446
        // Predicated region
        $region49: #{encoder_forward.1} parent=47 // pred_check
          %p4448 = pneg %p191
        $region50: #{encoder_forward.1} parent=47 // pred_check_branch
          %4450 = sbr.rel (%p4448) target = $region52
        $region51: #{encoder_forward.1} parent=47 // pred_region
          %s4452 = ssub.s32 128, 128
          %4453 = vsyncadd %s4444, %s4452
          %s4454 = smul.addr %s21, 128
          %s4455 = scalar_lea.hbm %s7, %s4454
          %s4457 = sshll.u32 %s4447, 4
          %s4458 = int_to_ptr.vmem [resolvable:$true] %s4457
          %4460 = dma.vmem_to_hbm [thread:$0]  %s4458, 128, %s4455, %s4444
        $region52: #{encoder_forward.1} parent=47 // pred_fallthru
          _
      $region48: #{encoder_forward.1} parent=5 // pred_fallthru
        _
      %p4461 = scmp.le.s32.totalorder 2, %s16
      // Predicated region
      $region53: #{encoder_forward.1} parent=5 // pred_check
        %p4462 = pneg %p4461
      $region54: #{encoder_forward.1} parent=5 // pred_check_branch
        %4464 = sbr.rel (%p4462) target = $region56
      $region55: #{encoder_forward.1} parent=5 // pred_region
        %s4465 = ssub.s32 %s16, 2
        // Predicated region
        $region57: #{encoder_forward.1} parent=55 // pred_check
          %p4466 = pneg %p197
        $region58: #{encoder_forward.1} parent=55 // pred_check_branch
          %4468 = sbr.rel (%p4466) target = $region60
        $region59: #{encoder_forward.1} parent=55 // pred_region
          %s4469 = sand.u32 %s182, 1
          %s4470 = scalar_lea.sflag [#allocation3], %s4469
          %s4471 = sand.u32 %s182, 1
          %s4472 = smul.addr %s4471, 8
          %s4473 = scalar_lea.vmem [#allocation2], %s4472
          %4474 = dma.done %s4470, 128
        $region60: #{encoder_forward.1} parent=55 // pred_fallthru
          _
      $region56: #{encoder_forward.1} parent=5 // pred_fallthru
        _
    $region6: #{encoder_forward.1} parent=1 // loop_footer
      %s20 = sadd.s32 1, %s16
    $region7: #{encoder_forward.1} parent=1 // loop_footer_branch
      %15 = sbr.rel target = $region3
    $region8: #{encoder_forward.1} parent=1 // loop_exit
      _
    %4475 = vsyncpa [#allocation3], 1
    %s4476 = scalar_lea.sflag [#allocation3], 1
    %4477 = vsyncpa %s4476, 1

</llo_original>
